<compile_context>
chip_gen: v7x
topology: tpu7x:2x2x1
jax: 0.10.0
libtpu: 0.0.40
codegen_flags: <defaults>
</compile_context>

<pallas_src>
import functools

import jax
import jax.numpy as jnp
from jax.experimental import pallas as pl
from jax.experimental.pallas import tpu as pltpu


# ------------------------------ fused kernel -------------------------------- #

def _encoder_kernel(x_ref,
                    wpro_ref, abpro_ref,
                    dw_ref, pw_ref, absub_ref,
                    wskip_ref, abskip_ref,
                    wse1_ref, bse1_ref, wse2_ref, bse2_ref,
                    wepi_ref, abepi_ref,
                    o_ref,
                    *, T, Kp, Km, Ke, n_mega, n_sub):
    """One batch element: full encoder forward with VMEM-resident intermediates.

    x_ref : (1, M, T_pad)          o_ref : (1, DE, T_pad)
    wpro  : (H, Kp*M)   abpro : (H, 2)   [scale | offset]
    dw    : (n_mega, n_sub, H, Km)   pw : (n_mega, n_sub, H, H)
    absub : (n_mega, n_sub, H, 2)
    wskip : (n_mega, H, H)           abskip : (n_mega, H, 2)
    wse1  : (n_mega, Cr, H)  bse1 : (n_mega, Cr, 1)
    wse2  : (n_mega, H, Cr)  bse2 : (n_mega, H, 1)
    wepi  : (DE, Ke*H)  abepi : (DE, 2)
    """
    T_pad = x_ref.shape[-1]
    # Validity mask over time columns; keeps the zero-pad invariant each layer.
    tmask = jax.lax.broadcasted_iota(jnp.int32, (1, T_pad), 1) < T

    def mask(y):
        return jnp.where(tmask, y, 0.0)

    def shifted_stack(x, K):
        """Stack K time-shifted copies (circular roll; pad region is zero)."""
        if K == 1:
            return x
        pad = K // 2
        rows = []
        for k in range(K):
            sh = (pad - k) % T_pad
            rows.append(x if sh == 0 else pltpu.roll(x, shift=sh, axis=1))
        return jnp.concatenate(rows, axis=0)          # (K*Ci, T_pad)

    def conv_bn(x, w, ab, K, relu):
        """Full conv ('same'), taps folded into one deep matmul, + fused FMA."""
        xs = shifted_stack(x, K)
        y = jnp.dot(w, xs, preferred_element_type=jnp.float32)
        y = y * ab[:, 0:1] + ab[:, 1:2]
        if relu:
            y = jnp.maximum(y, 0.0)
        return mask(y)

    def sub_block(x, dwk, pww, ab):
        """Depthwise taps (VPU + roll) + pointwise matmul + fused bias/BN/ReLU."""
        pad = Km // 2
        acc = None
        for k in range(Km):
            sh = (pad - k) % T_pad
            xr = x if sh == 0 else pltpu.roll(x, shift=sh, axis=1)
            term = dwk[:, k:k + 1] * xr
            acc = term if acc is None else acc + term
        z = jnp.dot(pww, acc, preferred_element_type=jnp.float32)
        z = jnp.maximum(z * ab[:, 0:1] + ab[:, 1:2], 0.0)
        return mask(z)

    def mega_tail(z, skip, w1, b1, w2, b2):
        """SE gating (pool over valid T) + residual add + ReLU."""
        s = jnp.sum(z, axis=1, keepdims=True) * (1.0 / T)           # (H, 1)
        h1 = jnp.maximum(
            jnp.dot(w1, s, preferred_element_type=jnp.float32) + b1, 0.0)
        g = jax.nn.sigmoid(
            jnp.dot(w2, h1, preferred_element_type=jnp.float32) + b2)
        return mask(jnp.maximum(skip + z * g, 0.0))

    # prolog
    h = conv_bn(x_ref[0], wpro_ref[...], abpro_ref[...], Kp, relu=True)
    # mega blocks (static unrolled; weights stay in VMEM)
    for i in range(n_mega):
        skip = conv_bn(h, wskip_ref[i], abskip_ref[i], 1, relu=False)
        z = h
        for j in range(n_sub):
            z = sub_block(z, dw_ref[i, j], pw_ref[i, j], absub_ref[i, j])
        h = mega_tail(z, skip, wse1_ref[i], bse1_ref[i], wse2_ref[i], bse2_ref[i])
    # epilog: single lane-dense store of the whole (DE, T_pad) tile
    o_ref[0] = conv_bn(h, wepi_ref[...], abepi_ref[...], Ke, relu=True)


# --------------------------- host-side param prep --------------------------- #

def _pack_conv(w, cb, sc, bi):
    """w: (K, Co, Ci) -> (Co, K*Ci); conv bias + BN folded to (Co, 2) [scale|offset]."""
    K, Co, Ci = w.shape
    wp = jnp.transpose(w, (1, 0, 2)).reshape(Co, K * Ci)
    ab = jnp.concatenate([sc, cb * sc + bi], axis=1)
    return wp, ab


def _pack_params(P):
    wpro, abpro = _pack_conv(P['prolog']['w'], P['prolog']['cb'],
                             P['prolog']['sc'], P['prolog']['bi'])
    wepi, abepi = _pack_conv(P['epilog']['w'], P['epilog']['cb'],
                             P['epilog']['sc'], P['epilog']['bi'])

    dw, pw, absub, wskip, abskip = [], [], [], [], []
    wse1, bse1, wse2, bse2 = [], [], [], []
    for mb in P['mega_blocks']:
        ws, abk = _pack_conv(mb['skip']['w'], mb['skip']['cb'],
                             mb['skip']['sc'], mb['skip']['bi'])
        wskip.append(ws)
        abskip.append(abk)
        dwi, pwi, abi = [], [], []
        for sb in mb['subs']:
            dwi.append(sb['dw'])
            pwi.append(sb['pw'])
            # depthwise bias folded through pointwise, then BN folded in
            off = (sb['pw'] @ sb['dwb'] + sb['pwb']) * sb['sc'] + sb['bi']
            abi.append(jnp.concatenate([sb['sc'], off], axis=1))
        dw.append(jnp.stack(dwi))
        pw.append(jnp.stack(pwi))
        absub.append(jnp.stack(abi))
        wse1.append(mb['se']['w1'])
        bse1.append(mb['se']['b1'])
        wse2.append(mb['se']['w2'])
        bse2.append(mb['se']['b2'])

    return dict(
        wpro=wpro, abpro=abpro, wepi=wepi, abepi=abepi,
        dw=jnp.stack(dw), pw=jnp.stack(pw), absub=jnp.stack(absub),
        wskip=jnp.stack(wskip), abskip=jnp.stack(abskip),
        wse1=jnp.stack(wse1), bse1=jnp.stack(bse1),
        wse2=jnp.stack(wse2), bse2=jnp.stack(bse2),
    )


# ------------------------------ pallas wrapper ------------------------------- #

def pallas_encoder(x, P):
    B, M, T = x.shape
    Q = _pack_params(P)
    Kp = P['prolog']['w'].shape[0]
    Ke = P['epilog']['w'].shape[0]
    n_mega, n_sub, _, Km = Q['dw'].shape
    DE = Q['wepi'].shape[0]

    # Lane-dense time axis: pad ONCE (network input only), slice once at the end.
    T_pad = max(128, ((T + 127) // 128) * 128)
    xp = jnp.pad(x, ((0, 0), (0, 0), (0, T_pad - T)))

    def full_spec(a):
        nd = a.ndim
        return pl.BlockSpec(a.shape, lambda b, _nd=nd: (0,) * _nd)

    order = ('wpro', 'abpro', 'dw', 'pw', 'absub', 'wskip', 'abskip',
             'wse1', 'bse1', 'wse2', 'bse2', 'wepi', 'abepi')
    params = [Q[k] for k in order]

    kernel = functools.partial(_encoder_kernel, T=T, Kp=Kp, Km=Km, Ke=Ke,
                               n_mega=n_mega, n_sub=n_sub)
    out = pl.pallas_call(
        kernel,
        out_shape=jax.ShapeDtypeStruct((B, DE, T_pad), jnp.float32),
        grid=(B,),
        in_specs=[pl.BlockSpec((1, M, T_pad), lambda b: (b, 0, 0))]
                 + [full_spec(a) for a in params],
        out_specs=pl.BlockSpec((1, DE, T_pad), lambda b: (b, 0, 0)),
        compiler_params=pltpu.CompilerParams(dimension_semantics=("parallel",)),
    )(xp, *params)
    return out[:, :, :T]


# --------------------------- pure-JAX reference ----------------------------- #

def ref_encoder(x, P):
    HI = jax.lax.Precision.HIGHEST

    def conv(x, w, cb):                       # w: [K, Co, Ci] -> torch weight [Co, Ci, K]
        W = jnp.transpose(w, (1, 2, 0))
        pad = W.shape[-1] // 2
        y = jax.lax.conv_general_dilated(x, W, (1,), [(pad, pad)],
                                         dimension_numbers=('NCH', 'OIH', 'NCH'),
                                         precision=HI)
        return y + cb[None]

    def dwconv(x, dw, dwb):                   # dw: [C, K]
        W = dw[:, None, :]
        pad = W.shape[-1] // 2
        y = jax.lax.conv_general_dilated(x, W, (1,), [(pad, pad)],
                                         dimension_numbers=('NCH', 'OIH', 'NCH'),
                                         feature_group_count=x.shape[1],
                                         precision=HI)
        return y + dwb[None]

    def bn(x, sc, bi):
        return x * sc[None] + bi[None]

    h = jax.nn.relu(bn(conv(x, P['prolog']['w'], P['prolog']['cb']),
                       P['prolog']['sc'], P['prolog']['bi']))
    for mb in P['mega_blocks']:
        skip = bn(conv(h, mb['skip']['w'], mb['skip']['cb']),
                  mb['skip']['sc'], mb['skip']['bi'])
        z = h
        for sb in mb['subs']:
            z = dwconv(z, sb['dw'], sb['dwb'])
            z = bn(jnp.einsum('oc,bct->bot', sb['pw'], z, precision=HI) + sb['pwb'][None],
                   sb['sc'], sb['bi'])
            z = jax.nn.relu(z)
        s = jnp.mean(z, axis=2)                                       # [B, C]
        e = jax.nn.relu(s @ mb['se']['w1'].T + mb['se']['b1'][:, 0][None])
        g = jax.nn.sigmoid(e @ mb['se']['w2'].T + mb['se']['b2'][:, 0][None])
        h = jax.nn.relu(skip + z * g[:, :, None])
    return jax.nn.relu(bn(conv(h, P['epilog']['w'], P['epilog']['cb']),
                          P['epilog']['sc'], P['epilog']['bi']))


# --------------------------- deterministic params --------------------------- #

def init_params(key, *, n_mels, hidden, out_size, n_mega, n_sub, mk, pk, ek, se_red):
    keys = list(jax.random.split(key, 1024))
    it = iter(keys)

    def nrm(shape, scale=0.2):
        return (scale * jax.random.normal(next(it), shape)).astype(jnp.float32)

    def bn_affine(c):  # eval-mode BN folded into per-channel scale/bias
        return {'sc': 1.0 + nrm((c, 1), 0.1), 'bi': nrm((c, 1), 0.1)}

    def convblock(ci, co, k):
        return {'w': nrm((k, co, ci)), 'cb': nrm((co, 1), 0.1), **bn_affine(co)}

    cr = hidden // se_red
    P = {'prolog': convblock(n_mels, hidden, pk),
         'epilog': convblock(hidden, out_size, ek),
         'mega_blocks': []}
    for _ in range(n_mega):
        subs = [{'dw': nrm((hidden, mk)), 'dwb': nrm((hidden, 1), 0.1),
                 'pw': nrm((hidden, hidden)), 'pwb': nrm((hidden, 1), 0.1),
                 **bn_affine(hidden)} for _ in range(n_sub)]
        P['mega_blocks'].append({
            'subs': subs,
            'skip': convblock(hidden, hidden, 1),
            'se': {'w1': nrm((cr, hidden)), 'b1': nrm((cr, 1), 0.1),
                   'w2': nrm((hidden, cr)), 'b2': nrm((hidden, 1), 0.1)},
        })
    return P


# ---------------------------------- main ------------------------------------ #

if __name__ == "__main__":
    B, M, T = 2, 8, 16          # batch, n_mels, time steps
    hidden, out_size = 32, 32   # hidden size H, encoder output size DE
    n_mega, n_sub = 2, 2

    key = jax.random.PRNGKey(0)
    kx, kp = jax.random.split(key)
    spectrograms = jax.random.normal(kx, (B, M, T), jnp.float32)   # [B, M, T]
    P = init_params(kp, n_mels=M, hidden=hidden, out_size=out_size,
                    n_mega=n_mega, n_sub=n_sub, mk=3, pk=3, ek=1, se_red=4)

    out = jax.block_until_ready(pallas_encoder(spectrograms, P))
    ref = jax.block_until_ready(ref_encoder(spectrograms, P))

    assert out.shape == (B, out_size, T), out.shape
    max_err = float(jnp.max(jnp.abs(out - ref)))
    assert jnp.allclose(out, ref, rtol=1e-2, atol=1e-2), f"max abs err {max_err}"

    print("KERNEL_OK")
</pallas_src>

<mosaic_0001>
module attributes {stable_mosaic.version = 11 : i64} {
  func.func @_encoder_kernel(%arg0: i32, %arg1: memref<1x8x128xf32, #tpu.memory_space<vmem>>, %arg2: memref<32x24xf32, #tpu.memory_space<vmem>>, %arg3: memref<32x2xf32, #tpu.memory_space<vmem>>, %arg4: memref<2x2x32x3xf32, #tpu.memory_space<vmem>>, %arg5: memref<2x2x32x32xf32, #tpu.memory_space<vmem>>, %arg6: memref<2x2x32x2xf32, #tpu.memory_space<vmem>>, %arg7: memref<2x32x32xf32, #tpu.memory_space<vmem>>, %arg8: memref<2x32x2xf32, #tpu.memory_space<vmem>>, %arg9: memref<2x8x32xf32, #tpu.memory_space<vmem>>, %arg10: memref<2x8x1xf32, #tpu.memory_space<vmem>>, %arg11: memref<2x32x8xf32, #tpu.memory_space<vmem>>, %arg12: memref<2x32x1xf32, #tpu.memory_space<vmem>>, %arg13: memref<32x32xf32, #tpu.memory_space<vmem>>, %arg14: memref<32x2xf32, #tpu.memory_space<vmem>>, %arg15: memref<1x32x128xf32, #tpu.memory_space<vmem>>) attributes {dimension_semantics = [#tpu.dimension_semantics<parallel>], iteration_bounds = array<i64: 2>, scalar_prefetch = 0 : i64, scratch_operands = 0 : i64, tpu.core_type = #tpu.core_type<tc>, window_params = [{transform_indices = @transform_0, window_bounds = array<i64: 1, 8, 128>}, {pipeline_mode = #tpu.pipeline_mode<synchronous>, transform_indices = @transform_1, window_bounds = array<i64: 32, 24>}, {pipeline_mode = #tpu.pipeline_mode<synchronous>, transform_indices = @transform_2, window_bounds = array<i64: 32, 2>}, {pipeline_mode = #tpu.pipeline_mode<synchronous>, transform_indices = @transform_3, window_bounds = array<i64: 2, 2, 32, 3>}, {pipeline_mode = #tpu.pipeline_mode<synchronous>, transform_indices = @transform_4, window_bounds = array<i64: 2, 2, 32, 32>}, {pipeline_mode = #tpu.pipeline_mode<synchronous>, transform_indices = @transform_5, window_bounds = array<i64: 2, 2, 32, 2>}, {pipeline_mode = #tpu.pipeline_mode<synchronous>, transform_indices = @transform_6, window_bounds = array<i64: 2, 32, 32>}, {pipeline_mode = #tpu.pipeline_mode<synchronous>, transform_indices = @transform_7, window_bounds = array<i64: 2, 32, 2>}, {pipeline_mode = #tpu.pipeline_mode<synchronous>, transform_indices = @transform_8, window_bounds = array<i64: 2, 8, 32>}, {pipeline_mode = #tpu.pipeline_mode<synchronous>, transform_indices = @transform_9, window_bounds = array<i64: 2, 8, 1>}, {pipeline_mode = #tpu.pipeline_mode<synchronous>, transform_indices = @transform_10, window_bounds = array<i64: 2, 32, 8>}, {pipeline_mode = #tpu.pipeline_mode<synchronous>, transform_indices = @transform_11, window_bounds = array<i64: 2, 32, 1>}, {pipeline_mode = #tpu.pipeline_mode<synchronous>, transform_indices = @transform_12, window_bounds = array<i64: 32, 32>}, {pipeline_mode = #tpu.pipeline_mode<synchronous>, transform_indices = @transform_13, window_bounds = array<i64: 32, 2>}, {transform_indices = @transform_14, window_bounds = array<i64: 1, 32, 128>}]} {
    %0 = tpu.iota {dimensions = array<i32: 1>} : vector<1x128xi32>
    %c16_i32 = arith.constant 16 : i32
    %1 = vector.broadcast %c16_i32 : i32 to vector<1x128xi32>
    %2 = arith.cmpi slt, %0, %1 : vector<1x128xi32>
    %c0 = arith.constant 0 : index
    %c0_0 = arith.constant 0 : index
    %c0_1 = arith.constant 0 : index
    %3 = vector.load %arg1[%c0, %c0_0, %c0_1] : memref<1x8x128xf32, #tpu.memory_space<vmem>>, vector<1x8x128xf32>
    %4 = vector.shape_cast %3 : vector<1x8x128xf32> to vector<8x128xf32>
    %c0_2 = arith.constant 0 : index
    %c0_3 = arith.constant 0 : index
    %5 = vector.load %arg2[%c0_2, %c0_3] : memref<32x24xf32, #tpu.memory_space<vmem>>, vector<32x24xf32>
    %c0_4 = arith.constant 0 : index
    %c0_5 = arith.constant 0 : index
    %6 = vector.load %arg3[%c0_4, %c0_5] : memref<32x2xf32, #tpu.memory_space<vmem>>, vector<32x2xf32>
    %c1_i32 = arith.constant 1 : i32
    %7 = tpu.dynamic_rotate %4 by %c1_i32 dim 1 : vector<8x128xf32>, i32 -> vector<8x128xf32>
    %c127_i32 = arith.constant 127 : i32
    %8 = tpu.dynamic_rotate %4 by %c127_i32 dim 1 : vector<8x128xf32>, i32 -> vector<8x128xf32>
    %9 = tpu.concatenate %7, %4, %8 in 0 : vector<8x128xf32>, vector<8x128xf32>, vector<8x128xf32> -> vector<24x128xf32>
    %cst = arith.constant dense<0.000000e+00> : vector<32x128xf32>
    %10 = tpu.matmul %5, %9, %cst {dimension_numbers = #tpu.dot_dimension_numbers<[1], [0], [0], [1], [0, 0, 1, 1], [], []>} : vector<32x24xf32>, vector<24x128xf32>, vector<32x128xf32> -> vector<32x128xf32>
    %11 = vector.extract_strided_slice %6 {offsets = [0, 0], sizes = [32, 1], strides = [1, 1]} : vector<32x2xf32> to vector<32x1xf32>
    %12 = vector.broadcast %11 : vector<32x1xf32> to vector<32x128xf32>
    %13 = arith.mulf %10, %12 : vector<32x128xf32>
    %14 = vector.extract_strided_slice %6 {offsets = [0, 1], sizes = [32, 1], strides = [1, 1]} : vector<32x2xf32> to vector<32x1xf32>
    %15 = vector.broadcast %14 : vector<32x1xf32> to vector<32x128xf32>
    %16 = arith.addf %13, %15 : vector<32x128xf32>
    %cst_6 = arith.constant 0.000000e+00 : f32
    %17 = vector.broadcast %cst_6 : f32 to vector<32x128xf32>
    %18 = arith.maximumf %16, %17 : vector<32x128xf32>
    %cst_7 = arith.constant 0.000000e+00 : f32
    %19 = vector.shape_cast %2 : vector<1x128xi1> to vector<1x128xi1>
    %20 = vector.broadcast %19 : vector<1x128xi1> to vector<32x128xi1>
    %21 = vector.broadcast %cst_7 : f32 to vector<32x128xf32>
    %22 = arith.select %20, %18, %21 : vector<32x128xi1>, vector<32x128xf32>
    %c0_8 = arith.constant 0 : index
    %c0_9 = arith.constant 0 : index
    %c0_10 = arith.constant 0 : index
    %23 = vector.load %arg7[%c0_8, %c0_9, %c0_10] : memref<2x32x32xf32, #tpu.memory_space<vmem>>, vector<1x32x32xf32>
    %24 = vector.shape_cast %23 : vector<1x32x32xf32> to vector<32x32xf32>
    %c0_11 = arith.constant 0 : index
    %c0_12 = arith.constant 0 : index
    %c0_13 = arith.constant 0 : index
    %25 = vector.load %arg8[%c0_11, %c0_12, %c0_13] : memref<2x32x2xf32, #tpu.memory_space<vmem>>, vector<1x32x2xf32>
    %26 = vector.shape_cast %25 : vector<1x32x2xf32> to vector<32x2xf32>
    %cst_14 = arith.constant dense<0.000000e+00> : vector<32x128xf32>
    %27 = tpu.matmul %24, %22, %cst_14 {dimension_numbers = #tpu.dot_dimension_numbers<[1], [0], [0], [1], [0, 0, 1, 1], [], []>} : vector<32x32xf32>, vector<32x128xf32>, vector<32x128xf32> -> vector<32x128xf32>
    %28 = vector.extract_strided_slice %26 {offsets = [0, 0], sizes = [32, 1], strides = [1, 1]} : vector<32x2xf32> to vector<32x1xf32>
    %29 = vector.broadcast %28 : vector<32x1xf32> to vector<32x128xf32>
    %30 = arith.mulf %27, %29 : vector<32x128xf32>
    %31 = vector.extract_strided_slice %26 {offsets = [0, 1], sizes = [32, 1], strides = [1, 1]} : vector<32x2xf32> to vector<32x1xf32>
    %32 = vector.broadcast %31 : vector<32x1xf32> to vector<32x128xf32>
    %33 = arith.addf %30, %32 : vector<32x128xf32>
    %cst_15 = arith.constant 0.000000e+00 : f32
    %34 = vector.shape_cast %2 : vector<1x128xi1> to vector<1x128xi1>
    %35 = vector.broadcast %34 : vector<1x128xi1> to vector<32x128xi1>
    %36 = vector.broadcast %cst_15 : f32 to vector<32x128xf32>
    %37 = arith.select %35, %33, %36 : vector<32x128xi1>, vector<32x128xf32>
    %c0_16 = arith.constant 0 : index
    %c0_17 = arith.constant 0 : index
    %c0_18 = arith.constant 0 : index
    %c0_19 = arith.constant 0 : index
    %38 = vector.load %arg4[%c0_16, %c0_17, %c0_18, %c0_19] : memref<2x2x32x3xf32, #tpu.memory_space<vmem>>, vector<1x1x32x3xf32>
    %39 = vector.shape_cast %38 : vector<1x1x32x3xf32> to vector<32x3xf32>
    %c0_20 = arith.constant 0 : index
    %c0_21 = arith.constant 0 : index
    %c0_22 = arith.constant 0 : index
    %c0_23 = arith.constant 0 : index
    %40 = vector.load %arg5[%c0_20, %c0_21, %c0_22, %c0_23] : memref<2x2x32x32xf32, #tpu.memory_space<vmem>>, vector<1x1x32x32xf32>
    %41 = vector.shape_cast %40 : vector<1x1x32x32xf32> to vector<32x32xf32>
    %c0_24 = arith.constant 0 : index
    %c0_25 = arith.constant 0 : index
    %c0_26 = arith.constant 0 : index
    %c0_27 = arith.constant 0 : index
    %42 = vector.load %arg6[%c0_24, %c0_25, %c0_26, %c0_27] : memref<2x2x32x2xf32, #tpu.memory_space<vmem>>, vector<1x1x32x2xf32>
    %43 = vector.shape_cast %42 : vector<1x1x32x2xf32> to vector<32x2xf32>
    %c1_i32_28 = arith.constant 1 : i32
    %44 = tpu.dynamic_rotate %22 by %c1_i32_28 dim 1 : vector<32x128xf32>, i32 -> vector<32x128xf32>
    %45 = vector.extract_strided_slice %39 {offsets = [0, 0], sizes = [32, 1], strides = [1, 1]} : vector<32x3xf32> to vector<32x1xf32>
    %46 = vector.broadcast %45 : vector<32x1xf32> to vector<32x128xf32>
    %47 = arith.mulf %46, %44 : vector<32x128xf32>
    %48 = vector.extract_strided_slice %39 {offsets = [0, 1], sizes = [32, 1], strides = [1, 1]} : vector<32x3xf32> to vector<32x1xf32>
    %49 = vector.broadcast %48 : vector<32x1xf32> to vector<32x128xf32>
    %50 = arith.mulf %49, %22 : vector<32x128xf32>
    %51 = arith.addf %47, %50 : vector<32x128xf32>
    %c127_i32_29 = arith.constant 127 : i32
    %52 = tpu.dynamic_rotate %22 by %c127_i32_29 dim 1 : vector<32x128xf32>, i32 -> vector<32x128xf32>
    %53 = vector.extract_strided_slice %39 {offsets = [0, 2], sizes = [32, 1], strides = [1, 1]} : vector<32x3xf32> to vector<32x1xf32>
    %54 = vector.broadcast %53 : vector<32x1xf32> to vector<32x128xf32>
    %55 = arith.mulf %54, %52 : vector<32x128xf32>
    %56 = arith.addf %51, %55 : vector<32x128xf32>
    %cst_30 = arith.constant dense<0.000000e+00> : vector<32x128xf32>
    %57 = tpu.matmul %41, %56, %cst_30 {dimension_numbers = #tpu.dot_dimension_numbers<[1], [0], [0], [1], [0, 0, 1, 1], [], []>} : vector<32x32xf32>, vector<32x128xf32>, vector<32x128xf32> -> vector<32x128xf32>
    %58 = vector.extract_strided_slice %43 {offsets = [0, 0], sizes = [32, 1], strides = [1, 1]} : vector<32x2xf32> to vector<32x1xf32>
    %59 = vector.broadcast %58 : vector<32x1xf32> to vector<32x128xf32>
    %60 = arith.mulf %57, %59 : vector<32x128xf32>
    %61 = vector.extract_strided_slice %43 {offsets = [0, 1], sizes = [32, 1], strides = [1, 1]} : vector<32x2xf32> to vector<32x1xf32>
    %62 = vector.broadcast %61 : vector<32x1xf32> to vector<32x128xf32>
    %63 = arith.addf %60, %62 : vector<32x128xf32>
    %cst_31 = arith.constant 0.000000e+00 : f32
    %64 = vector.broadcast %cst_31 : f32 to vector<32x128xf32>
    %65 = arith.maximumf %63, %64 : vector<32x128xf32>
    %cst_32 = arith.constant 0.000000e+00 : f32
    %66 = vector.shape_cast %2 : vector<1x128xi1> to vector<1x128xi1>
    %67 = vector.broadcast %66 : vector<1x128xi1> to vector<32x128xi1>
    %68 = vector.broadcast %cst_32 : f32 to vector<32x128xf32>
    %69 = arith.select %67, %65, %68 : vector<32x128xi1>, vector<32x128xf32>
    %c0_33 = arith.constant 0 : index
    %c1 = arith.constant 1 : index
    %c0_34 = arith.constant 0 : index
    %c0_35 = arith.constant 0 : index
    %70 = vector.load %arg4[%c0_33, %c1, %c0_34, %c0_35] : memref<2x2x32x3xf32, #tpu.memory_space<vmem>>, vector<1x1x32x3xf32>
    %71 = vector.shape_cast %70 : vector<1x1x32x3xf32> to vector<32x3xf32>
    %c0_36 = arith.constant 0 : index
    %c1_37 = arith.constant 1 : index
    %c0_38 = arith.constant 0 : index
    %c0_39 = arith.constant 0 : index
    %72 = vector.load %arg5[%c0_36, %c1_37, %c0_38, %c0_39] : memref<2x2x32x32xf32, #tpu.memory_space<vmem>>, vector<1x1x32x32xf32>
    %73 = vector.shape_cast %72 : vector<1x1x32x32xf32> to vector<32x32xf32>
    %c0_40 = arith.constant 0 : index
    %c1_41 = arith.constant 1 : index
    %c0_42 = arith.constant 0 : index
    %c0_43 = arith.constant 0 : index
    %74 = vector.load %arg6[%c0_40, %c1_41, %c0_42, %c0_43] : memref<2x2x32x2xf32, #tpu.memory_space<vmem>>, vector<1x1x32x2xf32>
    %75 = vector.shape_cast %74 : vector<1x1x32x2xf32> to vector<32x2xf32>
    %c1_i32_44 = arith.constant 1 : i32
    %76 = tpu.dynamic_rotate %69 by %c1_i32_44 dim 1 : vector<32x128xf32>, i32 -> vector<32x128xf32>
    %77 = vector.extract_strided_slice %71 {offsets = [0, 0], sizes = [32, 1], strides = [1, 1]} : vector<32x3xf32> to vector<32x1xf32>
    %78 = vector.broadcast %77 : vector<32x1xf32> to vector<32x128xf32>
    %79 = arith.mulf %78, %76 : vector<32x128xf32>
    %80 = vector.extract_strided_slice %71 {offsets = [0, 1], sizes = [32, 1], strides = [1, 1]} : vector<32x3xf32> to vector<32x1xf32>
    %81 = vector.broadcast %80 : vector<32x1xf32> to vector<32x128xf32>
    %82 = arith.mulf %81, %69 : vector<32x128xf32>
    %83 = arith.addf %79, %82 : vector<32x128xf32>
    %c127_i32_45 = arith.constant 127 : i32
    %84 = tpu.dynamic_rotate %69 by %c127_i32_45 dim 1 : vector<32x128xf32>, i32 -> vector<32x128xf32>
    %85 = vector.extract_strided_slice %71 {offsets = [0, 2], sizes = [32, 1], strides = [1, 1]} : vector<32x3xf32> to vector<32x1xf32>
    %86 = vector.broadcast %85 : vector<32x1xf32> to vector<32x128xf32>
    %87 = arith.mulf %86, %84 : vector<32x128xf32>
    %88 = arith.addf %83, %87 : vector<32x128xf32>
    %cst_46 = arith.constant dense<0.000000e+00> : vector<32x128xf32>
    %89 = tpu.matmul %73, %88, %cst_46 {dimension_numbers = #tpu.dot_dimension_numbers<[1], [0], [0], [1], [0, 0, 1, 1], [], []>} : vector<32x32xf32>, vector<32x128xf32>, vector<32x128xf32> -> vector<32x128xf32>
    %90 = vector.extract_strided_slice %75 {offsets = [0, 0], sizes = [32, 1], strides = [1, 1]} : vector<32x2xf32> to vector<32x1xf32>
    %91 = vector.broadcast %90 : vector<32x1xf32> to vector<32x128xf32>
    %92 = arith.mulf %89, %91 : vector<32x128xf32>
    %93 = vector.extract_strided_slice %75 {offsets = [0, 1], sizes = [32, 1], strides = [1, 1]} : vector<32x2xf32> to vector<32x1xf32>
    %94 = vector.broadcast %93 : vector<32x1xf32> to vector<32x128xf32>
    %95 = arith.addf %92, %94 : vector<32x128xf32>
    %cst_47 = arith.constant 0.000000e+00 : f32
    %96 = vector.broadcast %cst_47 : f32 to vector<32x128xf32>
    %97 = arith.maximumf %95, %96 : vector<32x128xf32>
    %cst_48 = arith.constant 0.000000e+00 : f32
    %98 = vector.shape_cast %2 : vector<1x128xi1> to vector<1x128xi1>
    %99 = vector.broadcast %98 : vector<1x128xi1> to vector<32x128xi1>
    %100 = vector.broadcast %cst_48 : f32 to vector<32x128xf32>
    %101 = arith.select %99, %97, %100 : vector<32x128xi1>, vector<32x128xf32>
    %c0_49 = arith.constant 0 : index
    %c0_50 = arith.constant 0 : index
    %c0_51 = arith.constant 0 : index
    %102 = vector.load %arg9[%c0_49, %c0_50, %c0_51] : memref<2x8x32xf32, #tpu.memory_space<vmem>>, vector<1x8x32xf32>
    %103 = vector.shape_cast %102 : vector<1x8x32xf32> to vector<8x32xf32>
    %c0_52 = arith.constant 0 : index
    %c0_53 = arith.constant 0 : index
    %c0_54 = arith.constant 0 : index
    %104 = vector.load %arg10[%c0_52, %c0_53, %c0_54] : memref<2x8x1xf32, #tpu.memory_space<vmem>>, vector<1x8x1xf32>
    %105 = vector.shape_cast %104 : vector<1x8x1xf32> to vector<8x1xf32>
    %c0_55 = arith.constant 0 : index
    %c0_56 = arith.constant 0 : index
    %c0_57 = arith.constant 0 : index
    %106 = vector.load %arg11[%c0_55, %c0_56, %c0_57] : memref<2x32x8xf32, #tpu.memory_space<vmem>>, vector<1x32x8xf32>
    %107 = vector.shape_cast %106 : vector<1x32x8xf32> to vector<32x8xf32>
    %c0_58 = arith.constant 0 : index
    %c0_59 = arith.constant 0 : index
    %c0_60 = arith.constant 0 : index
    %108 = vector.load %arg12[%c0_58, %c0_59, %c0_60] : memref<2x32x1xf32, #tpu.memory_space<vmem>>, vector<1x32x1xf32>
    %109 = vector.shape_cast %108 : vector<1x32x1xf32> to vector<32x1xf32>
    %cst_61 = arith.constant dense<0.000000e+00> : vector<32xf32>
    %110 = vector.multi_reduction <add>, %101, %cst_61 [1] : vector<32x128xf32> to vector<32xf32>
    %111 = vector.shape_cast %110 : vector<32xf32> to vector<32x1xf32>
    %cst_62 = arith.constant 6.250000e-02 : f32
    %112 = vector.broadcast %cst_62 : f32 to vector<32x1xf32>
    %113 = arith.mulf %111, %112 : vector<32x1xf32>
    %cst_63 = arith.constant dense<0.000000e+00> : vector<8x1xf32>
    %114 = tpu.matmul %103, %113, %cst_63 {dimension_numbers = #tpu.dot_dimension_numbers<[1], [0], [0], [1], [0, 0, 1, 1], [], []>} : vector<8x32xf32>, vector<32x1xf32>, vector<8x1xf32> -> vector<8x1xf32>
    %115 = arith.addf %114, %105 : vector<8x1xf32>
    %cst_64 = arith.constant 0.000000e+00 : f32
    %116 = vector.broadcast %cst_64 : f32 to vector<8x1xf32>
    %117 = arith.maximumf %115, %116 : vector<8x1xf32>
    %cst_65 = arith.constant dense<0.000000e+00> : vector<32x1xf32>
    %118 = tpu.matmul %107, %117, %cst_65 {dimension_numbers = #tpu.dot_dimension_numbers<[1], [0], [0], [1], [0, 0, 1, 1], [], []>} : vector<32x8xf32>, vector<8x1xf32>, vector<32x1xf32> -> vector<32x1xf32>
    %119 = arith.addf %118, %109 : vector<32x1xf32>
    %120 = arith.negf %119 : vector<32x1xf32>
    %121 = math.exp %120 : vector<32x1xf32>
    %cst_66 = arith.constant 1.000000e+00 : f32
    %122 = vector.broadcast %cst_66 : f32 to vector<32x1xf32>
    %123 = arith.addf %122, %121 : vector<32x1xf32>
    %124 = arith.divf %122, %123 : vector<32x1xf32>
    %125 = vector.broadcast %124 : vector<32x1xf32> to vector<32x128xf32>
    %126 = arith.mulf %101, %125 : vector<32x128xf32>
    %127 = arith.addf %37, %126 : vector<32x128xf32>
    %cst_67 = arith.constant 0.000000e+00 : f32
    %128 = vector.broadcast %cst_67 : f32 to vector<32x128xf32>
    %129 = arith.maximumf %127, %128 : vector<32x128xf32>
    %cst_68 = arith.constant 0.000000e+00 : f32
    %130 = vector.shape_cast %2 : vector<1x128xi1> to vector<1x128xi1>
    %131 = vector.broadcast %130 : vector<1x128xi1> to vector<32x128xi1>
    %132 = vector.broadcast %cst_68 : f32 to vector<32x128xf32>
    %133 = arith.select %131, %129, %132 : vector<32x128xi1>, vector<32x128xf32>
    %c1_69 = arith.constant 1 : index
    %c0_70 = arith.constant 0 : index
    %c0_71 = arith.constant 0 : index
    %134 = vector.load %arg7[%c1_69, %c0_70, %c0_71] : memref<2x32x32xf32, #tpu.memory_space<vmem>>, vector<1x32x32xf32>
    %135 = vector.shape_cast %134 : vector<1x32x32xf32> to vector<32x32xf32>
    %c1_72 = arith.constant 1 : index
    %c0_73 = arith.constant 0 : index
    %c0_74 = arith.constant 0 : index
    %136 = vector.load %arg8[%c1_72, %c0_73, %c0_74] : memref<2x32x2xf32, #tpu.memory_space<vmem>>, vector<1x32x2xf32>
    %137 = vector.shape_cast %136 : vector<1x32x2xf32> to vector<32x2xf32>
    %cst_75 = arith.constant dense<0.000000e+00> : vector<32x128xf32>
    %138 = tpu.matmul %135, %133, %cst_75 {dimension_numbers = #tpu.dot_dimension_numbers<[1], [0], [0], [1], [0, 0, 1, 1], [], []>} : vector<32x32xf32>, vector<32x128xf32>, vector<32x128xf32> -> vector<32x128xf32>
    %139 = vector.extract_strided_slice %137 {offsets = [0, 0], sizes = [32, 1], strides = [1, 1]} : vector<32x2xf32> to vector<32x1xf32>
    %140 = vector.broadcast %139 : vector<32x1xf32> to vector<32x128xf32>
    %141 = arith.mulf %138, %140 : vector<32x128xf32>
    %142 = vector.extract_strided_slice %137 {offsets = [0, 1], sizes = [32, 1], strides = [1, 1]} : vector<32x2xf32> to vector<32x1xf32>
    %143 = vector.broadcast %142 : vector<32x1xf32> to vector<32x128xf32>
    %144 = arith.addf %141, %143 : vector<32x128xf32>
    %cst_76 = arith.constant 0.000000e+00 : f32
    %145 = vector.shape_cast %2 : vector<1x128xi1> to vector<1x128xi1>
    %146 = vector.broadcast %145 : vector<1x128xi1> to vector<32x128xi1>
    %147 = vector.broadcast %cst_76 : f32 to vector<32x128xf32>
    %148 = arith.select %146, %144, %147 : vector<32x128xi1>, vector<32x128xf32>
    %c1_77 = arith.constant 1 : index
    %c0_78 = arith.constant 0 : index
    %c0_79 = arith.constant 0 : index
    %c0_80 = arith.constant 0 : index
    %149 = vector.load %arg4[%c1_77, %c0_78, %c0_79, %c0_80] : memref<2x2x32x3xf32, #tpu.memory_space<vmem>>, vector<1x1x32x3xf32>
    %150 = vector.shape_cast %149 : vector<1x1x32x3xf32> to vector<32x3xf32>
    %c1_81 = arith.constant 1 : index
    %c0_82 = arith.constant 0 : index
    %c0_83 = arith.constant 0 : index
    %c0_84 = arith.constant 0 : index
    %151 = vector.load %arg5[%c1_81, %c0_82, %c0_83, %c0_84] : memref<2x2x32x32xf32, #tpu.memory_space<vmem>>, vector<1x1x32x32xf32>
    %152 = vector.shape_cast %151 : vector<1x1x32x32xf32> to vector<32x32xf32>
    %c1_85 = arith.constant 1 : index
    %c0_86 = arith.constant 0 : index
    %c0_87 = arith.constant 0 : index
    %c0_88 = arith.constant 0 : index
    %153 = vector.load %arg6[%c1_85, %c0_86, %c0_87, %c0_88] : memref<2x2x32x2xf32, #tpu.memory_space<vmem>>, vector<1x1x32x2xf32>
    %154 = vector.shape_cast %153 : vector<1x1x32x2xf32> to vector<32x2xf32>
    %c1_i32_89 = arith.constant 1 : i32
    %155 = tpu.dynamic_rotate %133 by %c1_i32_89 dim 1 : vector<32x128xf32>, i32 -> vector<32x128xf32>
    %156 = vector.extract_strided_slice %150 {offsets = [0, 0], sizes = [32, 1], strides = [1, 1]} : vector<32x3xf32> to vector<32x1xf32>
    %157 = vector.broadcast %156 : vector<32x1xf32> to vector<32x128xf32>
    %158 = arith.mulf %157, %155 : vector<32x128xf32>
    %159 = vector.extract_strided_slice %150 {offsets = [0, 1], sizes = [32, 1], strides = [1, 1]} : vector<32x3xf32> to vector<32x1xf32>
    %160 = vector.broadcast %159 : vector<32x1xf32> to vector<32x128xf32>
    %161 = arith.mulf %160, %133 : vector<32x128xf32>
    %162 = arith.addf %158, %161 : vector<32x128xf32>
    %c127_i32_90 = arith.constant 127 : i32
    %163 = tpu.dynamic_rotate %133 by %c127_i32_90 dim 1 : vector<32x128xf32>, i32 -> vector<32x128xf32>
    %164 = vector.extract_strided_slice %150 {offsets = [0, 2], sizes = [32, 1], strides = [1, 1]} : vector<32x3xf32> to vector<32x1xf32>
    %165 = vector.broadcast %164 : vector<32x1xf32> to vector<32x128xf32>
    %166 = arith.mulf %165, %163 : vector<32x128xf32>
    %167 = arith.addf %162, %166 : vector<32x128xf32>
    %cst_91 = arith.constant dense<0.000000e+00> : vector<32x128xf32>
    %168 = tpu.matmul %152, %167, %cst_91 {dimension_numbers = #tpu.dot_dimension_numbers<[1], [0], [0], [1], [0, 0, 1, 1], [], []>} : vector<32x32xf32>, vector<32x128xf32>, vector<32x128xf32> -> vector<32x128xf32>
    %169 = vector.extract_strided_slice %154 {offsets = [0, 0], sizes = [32, 1], strides = [1, 1]} : vector<32x2xf32> to vector<32x1xf32>
    %170 = vector.broadcast %169 : vector<32x1xf32> to vector<32x128xf32>
    %171 = arith.mulf %168, %170 : vector<32x128xf32>
    %172 = vector.extract_strided_slice %154 {offsets = [0, 1], sizes = [32, 1], strides = [1, 1]} : vector<32x2xf32> to vector<32x1xf32>
    %173 = vector.broadcast %172 : vector<32x1xf32> to vector<32x128xf32>
    %174 = arith.addf %171, %173 : vector<32x128xf32>
    %cst_92 = arith.constant 0.000000e+00 : f32
    %175 = vector.broadcast %cst_92 : f32 to vector<32x128xf32>
    %176 = arith.maximumf %174, %175 : vector<32x128xf32>
    %cst_93 = arith.constant 0.000000e+00 : f32
    %177 = vector.shape_cast %2 : vector<1x128xi1> to vector<1x128xi1>
    %178 = vector.broadcast %177 : vector<1x128xi1> to vector<32x128xi1>
    %179 = vector.broadcast %cst_93 : f32 to vector<32x128xf32>
    %180 = arith.select %178, %176, %179 : vector<32x128xi1>, vector<32x128xf32>
    %c1_94 = arith.constant 1 : index
    %c1_95 = arith.constant 1 : index
    %c0_96 = arith.constant 0 : index
    %c0_97 = arith.constant 0 : index
    %181 = vector.load %arg4[%c1_94, %c1_95, %c0_96, %c0_97] : memref<2x2x32x3xf32, #tpu.memory_space<vmem>>, vector<1x1x32x3xf32>
    %182 = vector.shape_cast %181 : vector<1x1x32x3xf32> to vector<32x3xf32>
    %c1_98 = arith.constant 1 : index
    %c1_99 = arith.constant 1 : index
    %c0_100 = arith.constant 0 : index
    %c0_101 = arith.constant 0 : index
    %183 = vector.load %arg5[%c1_98, %c1_99, %c0_100, %c0_101] : memref<2x2x32x32xf32, #tpu.memory_space<vmem>>, vector<1x1x32x32xf32>
    %184 = vector.shape_cast %183 : vector<1x1x32x32xf32> to vector<32x32xf32>
    %c1_102 = arith.constant 1 : index
    %c1_103 = arith.constant 1 : index
    %c0_104 = arith.constant 0 : index
    %c0_105 = arith.constant 0 : index
    %185 = vector.load %arg6[%c1_102, %c1_103, %c0_104, %c0_105] : memref<2x2x32x2xf32, #tpu.memory_space<vmem>>, vector<1x1x32x2xf32>
    %186 = vector.shape_cast %185 : vector<1x1x32x2xf32> to vector<32x2xf32>
    %c1_i32_106 = arith.constant 1 : i32
    %187 = tpu.dynamic_rotate %180 by %c1_i32_106 dim 1 : vector<32x128xf32>, i32 -> vector<32x128xf32>
    %188 = vector.extract_strided_slice %182 {offsets = [0, 0], sizes = [32, 1], strides = [1, 1]} : vector<32x3xf32> to vector<32x1xf32>
    %189 = vector.broadcast %188 : vector<32x1xf32> to vector<32x128xf32>
    %190 = arith.mulf %189, %187 : vector<32x128xf32>
    %191 = vector.extract_strided_slice %182 {offsets = [0, 1], sizes = [32, 1], strides = [1, 1]} : vector<32x3xf32> to vector<32x1xf32>
    %192 = vector.broadcast %191 : vector<32x1xf32> to vector<32x128xf32>
    %193 = arith.mulf %192, %180 : vector<32x128xf32>
    %194 = arith.addf %190, %193 : vector<32x128xf32>
    %c127_i32_107 = arith.constant 127 : i32
    %195 = tpu.dynamic_rotate %180 by %c127_i32_107 dim 1 : vector<32x128xf32>, i32 -> vector<32x128xf32>
    %196 = vector.extract_strided_slice %182 {offsets = [0, 2], sizes = [32, 1], strides = [1, 1]} : vector<32x3xf32> to vector<32x1xf32>
    %197 = vector.broadcast %196 : vector<32x1xf32> to vector<32x128xf32>
    %198 = arith.mulf %197, %195 : vector<32x128xf32>
    %199 = arith.addf %194, %198 : vector<32x128xf32>
    %cst_108 = arith.constant dense<0.000000e+00> : vector<32x128xf32>
    %200 = tpu.matmul %184, %199, %cst_108 {dimension_numbers = #tpu.dot_dimension_numbers<[1], [0], [0], [1], [0, 0, 1, 1], [], []>} : vector<32x32xf32>, vector<32x128xf32>, vector<32x128xf32> -> vector<32x128xf32>
    %201 = vector.extract_strided_slice %186 {offsets = [0, 0], sizes = [32, 1], strides = [1, 1]} : vector<32x2xf32> to vector<32x1xf32>
    %202 = vector.broadcast %201 : vector<32x1xf32> to vector<32x128xf32>
    %203 = arith.mulf %200, %202 : vector<32x128xf32>
    %204 = vector.extract_strided_slice %186 {offsets = [0, 1], sizes = [32, 1], strides = [1, 1]} : vector<32x2xf32> to vector<32x1xf32>
    %205 = vector.broadcast %204 : vector<32x1xf32> to vector<32x128xf32>
    %206 = arith.addf %203, %205 : vector<32x128xf32>
    %cst_109 = arith.constant 0.000000e+00 : f32
    %207 = vector.broadcast %cst_109 : f32 to vector<32x128xf32>
    %208 = arith.maximumf %206, %207 : vector<32x128xf32>
    %cst_110 = arith.constant 0.000000e+00 : f32
    %209 = vector.shape_cast %2 : vector<1x128xi1> to vector<1x128xi1>
    %210 = vector.broadcast %209 : vector<1x128xi1> to vector<32x128xi1>
    %211 = vector.broadcast %cst_110 : f32 to vector<32x128xf32>
    %212 = arith.select %210, %208, %211 : vector<32x128xi1>, vector<32x128xf32>
    %c1_111 = arith.constant 1 : index
    %c0_112 = arith.constant 0 : index
    %c0_113 = arith.constant 0 : index
    %213 = vector.load %arg9[%c1_111, %c0_112, %c0_113] : memref<2x8x32xf32, #tpu.memory_space<vmem>>, vector<1x8x32xf32>
    %214 = vector.shape_cast %213 : vector<1x8x32xf32> to vector<8x32xf32>
    %c1_114 = arith.constant 1 : index
    %c0_115 = arith.constant 0 : index
    %c0_116 = arith.constant 0 : index
    %215 = vector.load %arg10[%c1_114, %c0_115, %c0_116] : memref<2x8x1xf32, #tpu.memory_space<vmem>>, vector<1x8x1xf32>
    %216 = vector.shape_cast %215 : vector<1x8x1xf32> to vector<8x1xf32>
    %c1_117 = arith.constant 1 : index
    %c0_118 = arith.constant 0 : index
    %c0_119 = arith.constant 0 : index
    %217 = vector.load %arg11[%c1_117, %c0_118, %c0_119] : memref<2x32x8xf32, #tpu.memory_space<vmem>>, vector<1x32x8xf32>
    %218 = vector.shape_cast %217 : vector<1x32x8xf32> to vector<32x8xf32>
    %c1_120 = arith.constant 1 : index
    %c0_121 = arith.constant 0 : index
    %c0_122 = arith.constant 0 : index
    %219 = vector.load %arg12[%c1_120, %c0_121, %c0_122] : memref<2x32x1xf32, #tpu.memory_space<vmem>>, vector<1x32x1xf32>
    %220 = vector.shape_cast %219 : vector<1x32x1xf32> to vector<32x1xf32>
    %cst_123 = arith.constant dense<0.000000e+00> : vector<32xf32>
    %221 = vector.multi_reduction <add>, %212, %cst_123 [1] : vector<32x128xf32> to vector<32xf32>
    %222 = vector.shape_cast %221 : vector<32xf32> to vector<32x1xf32>
    %cst_124 = arith.constant 6.250000e-02 : f32
    %223 = vector.broadcast %cst_124 : f32 to vector<32x1xf32>
    %224 = arith.mulf %222, %223 : vector<32x1xf32>
    %cst_125 = arith.constant dense<0.000000e+00> : vector<8x1xf32>
    %225 = tpu.matmul %214, %224, %cst_125 {dimension_numbers = #tpu.dot_dimension_numbers<[1], [0], [0], [1], [0, 0, 1, 1], [], []>} : vector<8x32xf32>, vector<32x1xf32>, vector<8x1xf32> -> vector<8x1xf32>
    %226 = arith.addf %225, %216 : vector<8x1xf32>
    %cst_126 = arith.constant 0.000000e+00 : f32
    %227 = vector.broadcast %cst_126 : f32 to vector<8x1xf32>
    %228 = arith.maximumf %226, %227 : vector<8x1xf32>
    %cst_127 = arith.constant dense<0.000000e+00> : vector<32x1xf32>
    %229 = tpu.matmul %218, %228, %cst_127 {dimension_numbers = #tpu.dot_dimension_numbers<[1], [0], [0], [1], [0, 0, 1, 1], [], []>} : vector<32x8xf32>, vector<8x1xf32>, vector<32x1xf32> -> vector<32x1xf32>
    %230 = arith.addf %229, %220 : vector<32x1xf32>
    %231 = arith.negf %230 : vector<32x1xf32>
    %232 = math.exp %231 : vector<32x1xf32>
    %cst_128 = arith.constant 1.000000e+00 : f32
    %233 = vector.broadcast %cst_128 : f32 to vector<32x1xf32>
    %234 = arith.addf %233, %232 : vector<32x1xf32>
    %235 = arith.divf %233, %234 : vector<32x1xf32>
    %236 = vector.broadcast %235 : vector<32x1xf32> to vector<32x128xf32>
    %237 = arith.mulf %212, %236 : vector<32x128xf32>
    %238 = arith.addf %148, %237 : vector<32x128xf32>
    %cst_129 = arith.constant 0.000000e+00 : f32
    %239 = vector.broadcast %cst_129 : f32 to vector<32x128xf32>
    %240 = arith.maximumf %238, %239 : vector<32x128xf32>
    %cst_130 = arith.constant 0.000000e+00 : f32
    %241 = vector.shape_cast %2 : vector<1x128xi1> to vector<1x128xi1>
    %242 = vector.broadcast %241 : vector<1x128xi1> to vector<32x128xi1>
    %243 = vector.broadcast %cst_130 : f32 to vector<32x128xf32>
    %244 = arith.select %242, %240, %243 : vector<32x128xi1>, vector<32x128xf32>
    %c0_131 = arith.constant 0 : index
    %c0_132 = arith.constant 0 : index
    %245 = vector.load %arg13[%c0_131, %c0_132] : memref<32x32xf32, #tpu.memory_space<vmem>>, vector<32x32xf32>
    %c0_133 = arith.constant 0 : index
    %c0_134 = arith.constant 0 : index
    %246 = vector.load %arg14[%c0_133, %c0_134] : memref<32x2xf32, #tpu.memory_space<vmem>>, vector<32x2xf32>
    %cst_135 = arith.constant dense<0.000000e+00> : vector<32x128xf32>
    %247 = tpu.matmul %245, %244, %cst_135 {dimension_numbers = #tpu.dot_dimension_numbers<[1], [0], [0], [1], [0, 0, 1, 1], [], []>} : vector<32x32xf32>, vector<32x128xf32>, vector<32x128xf32> -> vector<32x128xf32>
    %248 = vector.extract_strided_slice %246 {offsets = [0, 0], sizes = [32, 1], strides = [1, 1]} : vector<32x2xf32> to vector<32x1xf32>
    %249 = vector.broadcast %248 : vector<32x1xf32> to vector<32x128xf32>
    %250 = arith.mulf %247, %249 : vector<32x128xf32>
    %251 = vector.extract_strided_slice %246 {offsets = [0, 1], sizes = [32, 1], strides = [1, 1]} : vector<32x2xf32> to vector<32x1xf32>
    %252 = vector.broadcast %251 : vector<32x1xf32> to vector<32x128xf32>
    %253 = arith.addf %250, %252 : vector<32x128xf32>
    %cst_136 = arith.constant 0.000000e+00 : f32
    %254 = vector.broadcast %cst_136 : f32 to vector<32x128xf32>
    %255 = arith.maximumf %253, %254 : vector<32x128xf32>
    %cst_137 = arith.constant 0.000000e+00 : f32
    %256 = vector.shape_cast %2 : vector<1x128xi1> to vector<1x128xi1>
    %257 = vector.broadcast %256 : vector<1x128xi1> to vector<32x128xi1>
    %258 = vector.broadcast %cst_137 : f32 to vector<32x128xf32>
    %259 = arith.select %257, %255, %258 : vector<32x128xi1>, vector<32x128xf32>
    %c0_138 = arith.constant 0 : index
    %c0_139 = arith.constant 0 : index
    %c0_140 = arith.constant 0 : index
    %260 = vector.load %arg15[%c0_138, %c0_139, %c0_140] : memref<1x32x128xf32, #tpu.memory_space<vmem>>, vector<1x32x128xf32>
    %261 = vector.shape_cast %260 : vector<1x32x128xf32> to vector<32x128xf32>
    %262 = vector.shape_cast %259 : vector<32x128xf32> to vector<1x32x128xf32>
    tpu.vector_store %arg15[%c0_138, %c0_139, %c0_140], %262 {strides = array<i32>} : memref<1x32x128xf32, #tpu.memory_space<vmem>>, vector<1x32x128xf32>,
    return
  }
  func.func @transform_0(%arg0: i32) -> (i32, i32, i32) {
    %c0_i32 = arith.constant 0 : i32
    %c0_i32_0 = arith.constant 0 : i32
    %c0_i32_1 = arith.constant 0 : i32
    return %arg0, %c0_i32, %c0_i32_0 : i32, i32, i32
  }
  func.func @transform_1(%arg0: i32) -> (i32, i32) {
    %c0_i32 = arith.constant 0 : i32
    %c0_i32_0 = arith.constant 0 : i32
    %c0_i32_1 = arith.constant 0 : i32
    return %c0_i32, %c0_i32_0 : i32, i32
  }
  func.func @transform_2(%arg0: i32) -> (i32, i32) {
    %c0_i32 = arith.constant 0 : i32
    %c0_i32_0 = arith.constant 0 : i32
    %c0_i32_1 = arith.constant 0 : i32
    return %c0_i32, %c0_i32_0 : i32, i32
  }
  func.func @transform_3(%arg0: i32) -> (i32, i32, i32, i32) {
    %c0_i32 = arith.constant 0 : i32
    %c0_i32_0 = arith.constant 0 : i32
    %c0_i32_1 = arith.constant 0 : i32
    %c0_i32_2 = arith.constant 0 : i32
    %c0_i32_3 = arith.constant 0 : i32
    return %c0_i32, %c0_i32_0, %c0_i32_1, %c0_i32_2 : i32, i32, i32, i32
  }
  func.func @transform_4(%arg0: i32) -> (i32, i32, i32, i32) {
    %c0_i32 = arith.constant 0 : i32
    %c0_i32_0 = arith.constant 0 : i32
    %c0_i32_1 = arith.constant 0 : i32
    %c0_i32_2 = arith.constant 0 : i32
    %c0_i32_3 = arith.constant 0 : i32
    return %c0_i32, %c0_i32_0, %c0_i32_1, %c0_i32_2 : i32, i32, i32, i32
  }
  func.func @transform_5(%arg0: i32) -> (i32, i32, i32, i32) {
    %c0_i32 = arith.constant 0 : i32
    %c0_i32_0 = arith.constant 0 : i32
    %c0_i32_1 = arith.constant 0 : i32
    %c0_i32_2 = arith.constant 0 : i32
    %c0_i32_3 = arith.constant 0 : i32
    return %c0_i32, %c0_i32_0, %c0_i32_1, %c0_i32_2 : i32, i32, i32, i32
  }
  func.func @transform_6(%arg0: i32) -> (i32, i32, i32) {
    %c0_i32 = arith.constant 0 : i32
    %c0_i32_0 = arith.constant 0 : i32
    %c0_i32_1 = arith.constant 0 : i32
    %c0_i32_2 = arith.constant 0 : i32
    return %c0_i32, %c0_i32_0, %c0_i32_1 : i32, i32, i32
  }
  func.func @transform_7(%arg0: i32) -> (i32, i32, i32) {
    %c0_i32 = arith.constant 0 : i32
    %c0_i32_0 = arith.constant 0 : i32
    %c0_i32_1 = arith.constant 0 : i32
    %c0_i32_2 = arith.constant 0 : i32
    return %c0_i32, %c0_i32_0, %c0_i32_1 : i32, i32, i32
  }
  func.func @transform_8(%arg0: i32) -> (i32, i32, i32) {
    %c0_i32 = arith.constant 0 : i32
    %c0_i32_0 = arith.constant 0 : i32
    %c0_i32_1 = arith.constant 0 : i32
    %c0_i32_2 = arith.constant 0 : i32
    return %c0_i32, %c0_i32_0, %c0_i32_1 : i32, i32, i32
  }
  func.func @transform_9(%arg0: i32) -> (i32, i32, i32) {
    %c0_i32 = arith.constant 0 : i32
    %c0_i32_0 = arith.constant 0 : i32
    %c0_i32_1 = arith.constant 0 : i32
    %c0_i32_2 = arith.constant 0 : i32
    return %c0_i32, %c0_i32_0, %c0_i32_1 : i32, i32, i32
  }
  func.func @transform_10(%arg0: i32) -> (i32, i32, i32) {
    %c0_i32 = arith.constant 0 : i32
    %c0_i32_0 = arith.constant 0 : i32
    %c0_i32_1 = arith.constant 0 : i32
    %c0_i32_2 = arith.constant 0 : i32
    return %c0_i32, %c0_i32_0, %c0_i32_1 : i32, i32, i32
  }
  func.func @transform_11(%arg0: i32) -> (i32, i32, i32) {
    %c0_i32 = arith.constant 0 : i32
    %c0_i32_0 = arith.constant 0 : i32
    %c0_i32_1 = arith.constant 0 : i32
    %c0_i32_2 = arith.constant 0 : i32
    return %c0_i32, %c0_i32_0, %c0_i32_1 : i32, i32, i32
  }
  func.func @transform_12(%arg0: i32) -> (i32, i32) {
    %c0_i32 = arith.constant 0 : i32
    %c0_i32_0 = arith.constant 0 : i32
    %c0_i32_1 = arith.constant 0 : i32
    return %c0_i32, %c0_i32_0 : i32, i32
  }
  func.func @transform_13(%arg0: i32) -> (i32, i32) {
    %c0_i32 = arith.constant 0 : i32
    %c0_i32_0 = arith.constant 0 : i32
    %c0_i32_1 = arith.constant 0 : i32
    return %c0_i32, %c0_i32_0 : i32, i32
  }
  func.func @transform_14(%arg0: i32) -> (i32, i32, i32) {
    %c0_i32 = arith.constant 0 : i32
    %c0_i32_0 = arith.constant 0 : i32
    %c0_i32_1 = arith.constant 0 : i32
    return %arg0, %c0_i32, %c0_i32_0 : i32, i32, i32
  }
}

</mosaic_0001>

<llo_original>
// kernel: tpu_custom_call.1
$region0: #{tpu_custom_call.1}
  #allocation0 [shape = 'u32[]', space=smem, size = 0x4, offset = 0x4, fixed_abs, tag = 'smem constant byte address 0x4 - core index']
  #allocation1 [shape = 'u32[144,128]{1,0:T(1,128)}', space=vmem, size = 0x12000, scoped, tag = 'internal scratch']
  %s0 = inlined_call_operand.vmem [shape: f32[2,8,128], index: 0, kind: input, shape index: {}]
  %s1 = inlined_call_operand.vmem [shape: f32[32,24], index: 1, kind: input, shape index: {}]
  %s2 = inlined_call_operand.vmem [shape: f32[32,2], index: 2, kind: input, shape index: {}]
  %s3 = inlined_call_operand.vmem [shape: f32[2,2,32,3], index: 3, kind: input, shape index: {}]
  %s4 = inlined_call_operand.vmem [shape: f32[2,2,32,32], index: 4, kind: input, shape index: {}]
  %s5 = inlined_call_operand.vmem [shape: f32[2,2,32,2], index: 5, kind: input, shape index: {}]
  %s6 = inlined_call_operand.vmem [shape: f32[2,32,32], index: 6, kind: input, shape index: {}]
  %s7 = inlined_call_operand.vmem [shape: f32[2,32,2], index: 7, kind: input, shape index: {}]
  %s8 = inlined_call_operand.vmem [shape: f32[2,8,32], index: 8, kind: input, shape index: {}]
  %s9 = inlined_call_operand.vmem [shape: f32[2,8,1], index: 9, kind: input, shape index: {}]
  %s10 = inlined_call_operand.vmem [shape: f32[2,32,8], index: 10, kind: input, shape index: {}]
  %s11 = inlined_call_operand.vmem [shape: f32[2,32,1], index: 11, kind: input, shape index: {}]
  %s12 = inlined_call_operand.vmem [shape: f32[32,32], index: 12, kind: input, shape index: {}]
  %s13 = inlined_call_operand.vmem [shape: f32[32,2], index: 13, kind: input, shape index: {}]
  %s14 = inlined_call_operand.hbm [shape: f32[2,32,128], index: 14, kind: output, shape index: {}]
  %s15 = sld [smem:[#allocation0]]
  $region89: #{tpu_custom_call.1} parent=0
    _
  %s17 = ssub.s32 1, %s15
  %s18 = scalar_select 0, %s17, %s15
  $region1: #{tpu_custom_call.1} parent=0
    #allocation2 [shape = 'u8[32768]{0}', space=vmem, size = 0x8000, scoped, tag = 'output window, operand 0']
    #allocation3 [shape = 's32[2]{0}', space=sflag, size = 0x8, scoped, tag = 'scoped memory for tpu_custom_call.1']
    %19 = vsyncpa [#allocation3], 0
    %s20 = scalar_lea.sflag [#allocation3], 1
    %21 = vsyncpa %s20, 0
    loop: start=0, step=1, limit=4
    $region2: #{tpu_custom_call.1} parent=1 // loop_pre_header
      _
    $region3: #{tpu_custom_call.1} parent=1 // loop_header
      %s23 = sphi 0, %s27
      %p24 = scmp.ge.s32.totalorder %s23, 4
      %s33 = sphi 0, %s35
      %s36 = sphi 0, %s33
      %s37 = sphi 0, %s36
      %s53 = sphi 0, %s37
      %s57 = sphi 0, %s57
      %s59 = sphi 0, %s57
      %s60 = sphi 0, %s59
      %s74 = sphi 0, %s60
      %s78 = sphi 0, %s78
      %s80 = sphi 0, %s78
      %s81 = sphi 0, %s80
      %s95 = sphi 0, %s81
      %s99 = sphi 0, %s99
      %s101 = sphi 0, %s99
      %s102 = sphi 0, %s101
      %s116 = sphi 0, %s102
      %s120 = sphi 0, %s120
      %s122 = sphi 0, %s120
      %s123 = sphi 0, %s122
      %s137 = sphi 0, %s123
      %s141 = sphi 0, %s141
      %s143 = sphi 0, %s141
      %s144 = sphi 0, %s143
      %s158 = sphi 0, %s144
      %s162 = sphi 0, %s162
      %s164 = sphi 0, %s162
      %s165 = sphi 0, %s164
      %s179 = sphi 0, %s165
      %s183 = sphi 0, %s183
      %s185 = sphi 0, %s183
      %s186 = sphi 0, %s185
      %s200 = sphi 0, %s186
      %s204 = sphi 0, %s204
      %s206 = sphi 0, %s204
      %s207 = sphi 0, %s206
      %s221 = sphi 0, %s207
      %s225 = sphi 0, %s225
      %s227 = sphi 0, %s225
      %s228 = sphi 0, %s227
      %s242 = sphi 0, %s228
      %s246 = sphi 0, %s246
      %s248 = sphi 0, %s246
      %s249 = sphi 0, %s248
      %s263 = sphi 0, %s249
      %s267 = sphi 0, %s267
      %s269 = sphi 0, %s267
      %s270 = sphi 0, %s269
      %s284 = sphi 0, %s270
      %s288 = sphi 0, %s288
      %s290 = sphi 0, %s288
      %s291 = sphi 0, %s290
      %s305 = sphi 0, %s291
      %s309 = sphi 0, %s309
      %s311 = sphi 0, %s309
      %s312 = sphi 0, %s311
      %s326 = sphi 0, %s312
      %s332 = sphi 0, %s334
      %s335 = sphi 0, %s332
      %s336 = sphi 0, %s335
      %s352 = sphi 0, %s336
    $region4: #{tpu_custom_call.1} parent=1 // loop_header_branch
      %26 = sbr.rel (%p24) target = $region8
    $region5: #{tpu_custom_call.1} parent=1 // loop_body
      %s28 = ssub.s32 %s23, 1
      %s29 = ssub.s32 %s23, 2
      %s30 = sadd.s32 %s23, 1
      %s31 = ssub.s32 %s23, %s30
      %p32 = scmp.eq.s32.totalorder %s31, 0
      %s34 = sadd.s32 %s33, 1
      %s35 = scalar_select %p32, %s33, %s34
      %p38 = pneg %p32
      %p39 = scmp.eq.s32.totalorder %s23, 1
      %p40 = por %p38, %p39
      %p41 = scmp.ne.s32.totalorder %s33, %s36
      %p42 = scmp.eq.s32.totalorder %s23, 0
      %p43 = por %p41, %p42
      %p44 = scmp.ne.s32.totalorder %s33, %s36
      %p45 = scmp.eq.s32.totalorder %s28, 1
      %p46 = por %p44, %p45
      %p47 = scmp.ne.s32.totalorder %s36, %s37
      %p48 = scmp.eq.s32.totalorder %s28, 0
      %p49 = por %p47, %p48
      %p50 = scmp.ne.s32.totalorder %s36, %s37
      %p51 = scmp.eq.s32.totalorder %s29, 1
      %p52 = por %p50, %p51
      %p54 = scmp.ne.s32.totalorder %s37, %s53
      %p55 = scmp.eq.s32.totalorder %s29, 0
      %p56 = por %p54, %p55
      %s58 = sadd.s32 %s57, 1
      %p61 = scmp.eq.s32.totalorder %s23, 1
      %p62 = scmp.ne.s32.totalorder %s57, %s59
      %p63 = scmp.eq.s32.totalorder %s23, 0
      %p64 = por %p62, %p63
      %p65 = scmp.ne.s32.totalorder %s57, %s59
      %p66 = scmp.eq.s32.totalorder %s28, 1
      %p67 = por %p65, %p66
      %p68 = scmp.ne.s32.totalorder %s59, %s60
      %p69 = scmp.eq.s32.totalorder %s28, 0
      %p70 = por %p68, %p69
      %p71 = scmp.ne.s32.totalorder %s59, %s60
      %p72 = scmp.eq.s32.totalorder %s29, 1
      %p73 = por %p71, %p72
      %p75 = scmp.ne.s32.totalorder %s60, %s74
      %p76 = scmp.eq.s32.totalorder %s29, 0
      %p77 = por %p75, %p76
      %s79 = sadd.s32 %s78, 1
      %p82 = scmp.eq.s32.totalorder %s23, 1
      %p83 = scmp.ne.s32.totalorder %s78, %s80
      %p84 = scmp.eq.s32.totalorder %s23, 0
      %p85 = por %p83, %p84
      %p86 = scmp.ne.s32.totalorder %s78, %s80
      %p87 = scmp.eq.s32.totalorder %s28, 1
      %p88 = por %p86, %p87
      %p89 = scmp.ne.s32.totalorder %s80, %s81
      %p90 = scmp.eq.s32.totalorder %s28, 0
      %p91 = por %p89, %p90
      %p92 = scmp.ne.s32.totalorder %s80, %s81
      %p93 = scmp.eq.s32.totalorder %s29, 1
      %p94 = por %p92, %p93
      %p96 = scmp.ne.s32.totalorder %s81, %s95
      %p97 = scmp.eq.s32.totalorder %s29, 0
      %p98 = por %p96, %p97
      %s100 = sadd.s32 %s99, 1
      %p103 = scmp.eq.s32.totalorder %s23, 1
      %p104 = scmp.ne.s32.totalorder %s99, %s101
      %p105 = scmp.eq.s32.totalorder %s23, 0
      %p106 = por %p104, %p105
      %p107 = scmp.ne.s32.totalorder %s99, %s101
      %p108 = scmp.eq.s32.totalorder %s28, 1
      %p109 = por %p107, %p108
      %p110 = scmp.ne.s32.totalorder %s101, %s102
      %p111 = scmp.eq.s32.totalorder %s28, 0
      %p112 = por %p110, %p111
      %p113 = scmp.ne.s32.totalorder %s101, %s102
      %p114 = scmp.eq.s32.totalorder %s29, 1
      %p115 = por %p113, %p114
      %p117 = scmp.ne.s32.totalorder %s102, %s116
      %p118 = scmp.eq.s32.totalorder %s29, 0
      %p119 = por %p117, %p118
      %s121 = sadd.s32 %s120, 1
      %p124 = scmp.eq.s32.totalorder %s23, 1
      %p125 = scmp.ne.s32.totalorder %s120, %s122
      %p126 = scmp.eq.s32.totalorder %s23, 0
      %p127 = por %p125, %p126
      %p128 = scmp.ne.s32.totalorder %s120, %s122
      %p129 = scmp.eq.s32.totalorder %s28, 1
      %p130 = por %p128, %p129
      %p131 = scmp.ne.s32.totalorder %s122, %s123
      %p132 = scmp.eq.s32.totalorder %s28, 0
      %p133 = por %p131, %p132
      %p134 = scmp.ne.s32.totalorder %s122, %s123
      %p135 = scmp.eq.s32.totalorder %s29, 1
      %p136 = por %p134, %p135
      %p138 = scmp.ne.s32.totalorder %s123, %s137
      %p139 = scmp.eq.s32.totalorder %s29, 0
      %p140 = por %p138, %p139
      %s142 = sadd.s32 %s141, 1
      %p145 = scmp.eq.s32.totalorder %s23, 1
      %p146 = scmp.ne.s32.totalorder %s141, %s143
      %p147 = scmp.eq.s32.totalorder %s23, 0
      %p148 = por %p146, %p147
      %p149 = scmp.ne.s32.totalorder %s141, %s143
      %p150 = scmp.eq.s32.totalorder %s28, 1
      %p151 = por %p149, %p150
      %p152 = scmp.ne.s32.totalorder %s143, %s144
      %p153 = scmp.eq.s32.totalorder %s28, 0
      %p154 = por %p152, %p153
      %p155 = scmp.ne.s32.totalorder %s143, %s144
      %p156 = scmp.eq.s32.totalorder %s29, 1
      %p157 = por %p155, %p156
      %p159 = scmp.ne.s32.totalorder %s144, %s158
      %p160 = scmp.eq.s32.totalorder %s29, 0
      %p161 = por %p159, %p160
      %s163 = sadd.s32 %s162, 1
      %p166 = scmp.eq.s32.totalorder %s23, 1
      %p167 = scmp.ne.s32.totalorder %s162, %s164
      %p168 = scmp.eq.s32.totalorder %s23, 0
      %p169 = por %p167, %p168
      %p170 = scmp.ne.s32.totalorder %s162, %s164
      %p171 = scmp.eq.s32.totalorder %s28, 1
      %p172 = por %p170, %p171
      %p173 = scmp.ne.s32.totalorder %s164, %s165
      %p174 = scmp.eq.s32.totalorder %s28, 0
      %p175 = por %p173, %p174
      %p176 = scmp.ne.s32.totalorder %s164, %s165
      %p177 = scmp.eq.s32.totalorder %s29, 1
      %p178 = por %p176, %p177
      %p180 = scmp.ne.s32.totalorder %s165, %s179
      %p181 = scmp.eq.s32.totalorder %s29, 0
      %p182 = por %p180, %p181
      %s184 = sadd.s32 %s183, 1
      %p187 = scmp.eq.s32.totalorder %s23, 1
      %p188 = scmp.ne.s32.totalorder %s183, %s185
      %p189 = scmp.eq.s32.totalorder %s23, 0
      %p190 = por %p188, %p189
      %p191 = scmp.ne.s32.totalorder %s183, %s185
      %p192 = scmp.eq.s32.totalorder %s28, 1
      %p193 = por %p191, %p192
      %p194 = scmp.ne.s32.totalorder %s185, %s186
      %p195 = scmp.eq.s32.totalorder %s28, 0
      %p196 = por %p194, %p195
      %p197 = scmp.ne.s32.totalorder %s185, %s186
      %p198 = scmp.eq.s32.totalorder %s29, 1
      %p199 = por %p197, %p198
      %p201 = scmp.ne.s32.totalorder %s186, %s200
      %p202 = scmp.eq.s32.totalorder %s29, 0
      %p203 = por %p201, %p202
      %s205 = sadd.s32 %s204, 1
      %p208 = scmp.eq.s32.totalorder %s23, 1
      %p209 = scmp.ne.s32.totalorder %s204, %s206
      %p210 = scmp.eq.s32.totalorder %s23, 0
      %p211 = por %p209, %p210
      %p212 = scmp.ne.s32.totalorder %s204, %s206
      %p213 = scmp.eq.s32.totalorder %s28, 1
      %p214 = por %p212, %p213
      %p215 = scmp.ne.s32.totalorder %s206, %s207
      %p216 = scmp.eq.s32.totalorder %s28, 0
      %p217 = por %p215, %p216
      %p218 = scmp.ne.s32.totalorder %s206, %s207
      %p219 = scmp.eq.s32.totalorder %s29, 1
      %p220 = por %p218, %p219
      %p222 = scmp.ne.s32.totalorder %s207, %s221
      %p223 = scmp.eq.s32.totalorder %s29, 0
      %p224 = por %p222, %p223
      %s226 = sadd.s32 %s225, 1
      %p229 = scmp.eq.s32.totalorder %s23, 1
      %p230 = scmp.ne.s32.totalorder %s225, %s227
      %p231 = scmp.eq.s32.totalorder %s23, 0
      %p232 = por %p230, %p231
      %p233 = scmp.ne.s32.totalorder %s225, %s227
      %p234 = scmp.eq.s32.totalorder %s28, 1
      %p235 = por %p233, %p234
      %p236 = scmp.ne.s32.totalorder %s227, %s228
      %p237 = scmp.eq.s32.totalorder %s28, 0
      %p238 = por %p236, %p237
      %p239 = scmp.ne.s32.totalorder %s227, %s228
      %p240 = scmp.eq.s32.totalorder %s29, 1
      %p241 = por %p239, %p240
      %p243 = scmp.ne.s32.totalorder %s228, %s242
      %p244 = scmp.eq.s32.totalorder %s29, 0
      %p245 = por %p243, %p244
      %s247 = sadd.s32 %s246, 1
      %p250 = scmp.eq.s32.totalorder %s23, 1
      %p251 = scmp.ne.s32.totalorder %s246, %s248
      %p252 = scmp.eq.s32.totalorder %s23, 0
      %p253 = por %p251, %p252
      %p254 = scmp.ne.s32.totalorder %s246, %s248
      %p255 = scmp.eq.s32.totalorder %s28, 1
      %p256 = por %p254, %p255
      %p257 = scmp.ne.s32.totalorder %s248, %s249
      %p258 = scmp.eq.s32.totalorder %s28, 0
      %p259 = por %p257, %p258
      %p260 = scmp.ne.s32.totalorder %s248, %s249
      %p261 = scmp.eq.s32.totalorder %s29, 1
      %p262 = por %p260, %p261
      %p264 = scmp.ne.s32.totalorder %s249, %s263
      %p265 = scmp.eq.s32.totalorder %s29, 0
      %p266 = por %p264, %p265
      %s268 = sadd.s32 %s267, 1
      %p271 = scmp.eq.s32.totalorder %s23, 1
      %p272 = scmp.ne.s32.totalorder %s267, %s269
      %p273 = scmp.eq.s32.totalorder %s23, 0
      %p274 = por %p272, %p273
      %p275 = scmp.ne.s32.totalorder %s267, %s269
      %p276 = scmp.eq.s32.totalorder %s28, 1
      %p277 = por %p275, %p276
      %p278 = scmp.ne.s32.totalorder %s269, %s270
      %p279 = scmp.eq.s32.totalorder %s28, 0
      %p280 = por %p278, %p279
      %p281 = scmp.ne.s32.totalorder %s269, %s270
      %p282 = scmp.eq.s32.totalorder %s29, 1
      %p283 = por %p281, %p282
      %p285 = scmp.ne.s32.totalorder %s270, %s284
      %p286 = scmp.eq.s32.totalorder %s29, 0
      %p287 = por %p285, %p286
      %s289 = sadd.s32 %s288, 1
      %p292 = scmp.eq.s32.totalorder %s23, 1
      %p293 = scmp.ne.s32.totalorder %s288, %s290
      %p294 = scmp.eq.s32.totalorder %s23, 0
      %p295 = por %p293, %p294
      %p296 = scmp.ne.s32.totalorder %s288, %s290
      %p297 = scmp.eq.s32.totalorder %s28, 1
      %p298 = por %p296, %p297
      %p299 = scmp.ne.s32.totalorder %s290, %s291
      %p300 = scmp.eq.s32.totalorder %s28, 0
      %p301 = por %p299, %p300
      %p302 = scmp.ne.s32.totalorder %s290, %s291
      %p303 = scmp.eq.s32.totalorder %s29, 1
      %p304 = por %p302, %p303
      %p306 = scmp.ne.s32.totalorder %s291, %s305
      %p307 = scmp.eq.s32.totalorder %s29, 0
      %p308 = por %p306, %p307
      %s310 = sadd.s32 %s309, 1
      %p313 = scmp.eq.s32.totalorder %s23, 1
      %p314 = scmp.ne.s32.totalorder %s309, %s311
      %p315 = scmp.eq.s32.totalorder %s23, 0
      %p316 = por %p314, %p315
      %p317 = scmp.ne.s32.totalorder %s309, %s311
      %p318 = scmp.eq.s32.totalorder %s28, 1
      %p319 = por %p317, %p318
      %p320 = scmp.ne.s32.totalorder %s311, %s312
      %p321 = scmp.eq.s32.totalorder %s28, 0
      %p322 = por %p320, %p321
      %p323 = scmp.ne.s32.totalorder %s311, %s312
      %p324 = scmp.eq.s32.totalorder %s29, 1
      %p325 = por %p323, %p324
      %p327 = scmp.ne.s32.totalorder %s312, %s326
      %p328 = scmp.eq.s32.totalorder %s29, 0
      %p329 = por %p327, %p328
      %s330 = ssub.s32 %s23, %s30
      %p331 = scmp.eq.s32.totalorder %s330, 0
      %s333 = sadd.s32 %s332, 1
      %s334 = scalar_select %p331, %s332, %s333
      %p337 = pneg %p331
      %p338 = scmp.eq.s32.totalorder %s23, 1
      %p339 = por %p337, %p338
      %p340 = scmp.ne.s32.totalorder %s332, %s335
      %p341 = scmp.eq.s32.totalorder %s23, 0
      %p342 = por %p340, %p341
      %p343 = scmp.ne.s32.totalorder %s332, %s335
      %p344 = scmp.eq.s32.totalorder %s28, 1
      %p345 = por %p343, %p344
      %p346 = scmp.ne.s32.totalorder %s335, %s336
      %p347 = scmp.eq.s32.totalorder %s28, 0
      %p348 = por %p346, %p347
      %p349 = scmp.ne.s32.totalorder %s335, %s336
      %p350 = scmp.eq.s32.totalorder %s29, 1
      %p351 = por %p349, %p350
      %p353 = scmp.ne.s32.totalorder %s336, %s352
      %p354 = scmp.eq.s32.totalorder %s29, 0
      %p355 = por %p353, %p354
      %p356 = scmp.le.s32.totalorder 1, %s23
      %p357 = scmp.lt.s32.totalorder %s23, 3
      %p358 = pnand %p356, %p357
      %p359 = pneg %p358
      // Predicated region
      $region9: #{tpu_custom_call.1} parent=5 // pred_check
        _
      $region10: #{tpu_custom_call.1} parent=5 // pred_check_branch
        %361 = sbr.rel (%p358) target = $region12
      $region11: #{tpu_custom_call.1} parent=5 // pred_region
        %s362 = ssub.s32 %s23, 1
        // Predicated region
        $region13: #{tpu_custom_call.1} parent=11 // pred_check
          %p363 = pneg %p70
        $region14: #{tpu_custom_call.1} parent=11 // pred_check_branch
          %365 = sbr.rel (%p363) target = $region16
        $region15: #{tpu_custom_call.1} parent=11 // pred_region
          _
        $region16: #{tpu_custom_call.1} parent=11 // pred_fallthru
          _
        // Predicated region
        $region17: #{tpu_custom_call.1} parent=11 // pred_check
          %p366 = pneg %p91
        $region18: #{tpu_custom_call.1} parent=11 // pred_check_branch
          %368 = sbr.rel (%p366) target = $region20
        $region19: #{tpu_custom_call.1} parent=11 // pred_region
          _
        $region20: #{tpu_custom_call.1} parent=11 // pred_fallthru
          _
        // Predicated region
        $region21: #{tpu_custom_call.1} parent=11 // pred_check
          %p369 = pneg %p112
        $region22: #{tpu_custom_call.1} parent=11 // pred_check_branch
          %371 = sbr.rel (%p369) target = $region24
        $region23: #{tpu_custom_call.1} parent=11 // pred_region
          _
        $region24: #{tpu_custom_call.1} parent=11 // pred_fallthru
          _
        // Predicated region
        $region25: #{tpu_custom_call.1} parent=11 // pred_check
          %p372 = pneg %p133
        $region26: #{tpu_custom_call.1} parent=11 // pred_check_branch
          %374 = sbr.rel (%p372) target = $region28
        $region27: #{tpu_custom_call.1} parent=11 // pred_region
          _
        $region28: #{tpu_custom_call.1} parent=11 // pred_fallthru
          _
        // Predicated region
        $region29: #{tpu_custom_call.1} parent=11 // pred_check
          %p375 = pneg %p154
        $region30: #{tpu_custom_call.1} parent=11 // pred_check_branch
          %377 = sbr.rel (%p375) target = $region32
        $region31: #{tpu_custom_call.1} parent=11 // pred_region
          _
        $region32: #{tpu_custom_call.1} parent=11 // pred_fallthru
          _
        // Predicated region
        $region33: #{tpu_custom_call.1} parent=11 // pred_check
          %p378 = pneg %p175
        $region34: #{tpu_custom_call.1} parent=11 // pred_check_branch
          %380 = sbr.rel (%p378) target = $region36
        $region35: #{tpu_custom_call.1} parent=11 // pred_region
          _
        $region36: #{tpu_custom_call.1} parent=11 // pred_fallthru
          _
        // Predicated region
        $region37: #{tpu_custom_call.1} parent=11 // pred_check
          %p381 = pneg %p196
        $region38: #{tpu_custom_call.1} parent=11 // pred_check_branch
          %383 = sbr.rel (%p381) target = $region40
        $region39: #{tpu_custom_call.1} parent=11 // pred_region
          _
        $region40: #{tpu_custom_call.1} parent=11 // pred_fallthru
          _
        // Predicated region
        $region41: #{tpu_custom_call.1} parent=11 // pred_check
          %p384 = pneg %p217
        $region42: #{tpu_custom_call.1} parent=11 // pred_check_branch
          %386 = sbr.rel (%p384) target = $region44
        $region43: #{tpu_custom_call.1} parent=11 // pred_region
          _
        $region44: #{tpu_custom_call.1} parent=11 // pred_fallthru
          _
        // Predicated region
        $region45: #{tpu_custom_call.1} parent=11 // pred_check
          %p387 = pneg %p238
        $region46: #{tpu_custom_call.1} parent=11 // pred_check_branch
          %389 = sbr.rel (%p387) target = $region48
        $region47: #{tpu_custom_call.1} parent=11 // pred_region
          _
        $region48: #{tpu_custom_call.1} parent=11 // pred_fallthru
          _
        // Predicated region
        $region49: #{tpu_custom_call.1} parent=11 // pred_check
          %p390 = pneg %p259
        $region50: #{tpu_custom_call.1} parent=11 // pred_check_branch
          %392 = sbr.rel (%p390) target = $region52
        $region51: #{tpu_custom_call.1} parent=11 // pred_region
          _
        $region52: #{tpu_custom_call.1} parent=11 // pred_fallthru
          _
        // Predicated region
        $region53: #{tpu_custom_call.1} parent=11 // pred_check
          %p393 = pneg %p280
        $region54: #{tpu_custom_call.1} parent=11 // pred_check_branch
          %395 = sbr.rel (%p393) target = $region56
        $region55: #{tpu_custom_call.1} parent=11 // pred_region
          _
        $region56: #{tpu_custom_call.1} parent=11 // pred_fallthru
          _
        // Predicated region
        $region57: #{tpu_custom_call.1} parent=11 // pred_check
          %p396 = pneg %p301
        $region58: #{tpu_custom_call.1} parent=11 // pred_check_branch
          %398 = sbr.rel (%p396) target = $region60
        $region59: #{tpu_custom_call.1} parent=11 // pred_region
          _
        $region60: #{tpu_custom_call.1} parent=11 // pred_fallthru
          _
        // Predicated region
        $region61: #{tpu_custom_call.1} parent=11 // pred_check
          %p399 = pneg %p322
        $region62: #{tpu_custom_call.1} parent=11 // pred_check_branch
          %401 = sbr.rel (%p399) target = $region64
        $region63: #{tpu_custom_call.1} parent=11 // pred_region
          _
        $region64: #{tpu_custom_call.1} parent=11 // pred_fallthru
          _
      $region12: #{tpu_custom_call.1} parent=5 // pred_fallthru
        _
      %p402 = scmp.lt.s32.totalorder %s23, 2
      // Predicated region
      $region65: #{tpu_custom_call.1} parent=5 // pred_check
        %p403 = pneg %p402
      $region66: #{tpu_custom_call.1} parent=5 // pred_check_branch
        %405 = sbr.rel (%p403) target = $region68
      $region67: #{tpu_custom_call.1} parent=5 // pred_region
        // Predicated region
        $region69: #{tpu_custom_call.1} parent=67 // pred_check
          %p406 = pneg %p43
        $region70: #{tpu_custom_call.1} parent=67 // pred_check_branch
          %408 = sbr.rel (%p406) target = $region72
        $region71: #{tpu_custom_call.1} parent=67 // pred_region
          %p409 = scmp.lt.s32.totalorder %s23, 1
          %s410 = scalar_select %p409, %s23, 1
          %s411 = smul.addr %s410, 8
          %s412 = scalar_lea.vmem %s0, %s411
        $region72: #{tpu_custom_call.1} parent=67 // pred_fallthru
          _
      $region68: #{tpu_custom_call.1} parent=5 // pred_fallthru
        _
      %p413 = scmp.le.s32.totalorder 1, %s23
      %p414 = scmp.lt.s32.totalorder %s23, 3
      %p415 = pnand %p413, %p414
      %p416 = pneg %p415
      // Predicated region
      $region73: #{tpu_custom_call.1} parent=5 // pred_check
        _
      $region74: #{tpu_custom_call.1} parent=5 // pred_check_branch
        %418 = sbr.rel (%p415) target = $region76
      $region75: #{tpu_custom_call.1} parent=5 // pred_region
        %s419 = ssub.s32 %s23, 1
        %p420 = scmp.lt.s32.totalorder %s28, 1
        %s421 = scalar_select %p420, %s28, 1
        %s422 = smul.addr %s421, 8
        %s423 = scalar_lea.vmem %s0, %s422
        %p424 = pneg %p49
        %p425 = pneg %p46
        %p426 = pneg %p70
        %p427 = pneg %p67
        %p428 = pneg %p91
        %p429 = pneg %p88
        %p430 = pneg %p112
        %p431 = pneg %p109
        %p432 = pneg %p133
        %p433 = pneg %p130
        %p434 = pneg %p154
        %p435 = pneg %p151
        %p436 = pneg %p175
        %p437 = pneg %p172
        %p438 = pneg %p196
        %p439 = pneg %p193
        %p440 = pneg %p217
        %p441 = pneg %p214
        %p442 = pneg %p238
        %p443 = pneg %p235
        %p444 = pneg %p259
        %p445 = pneg %p256
        %p446 = pneg %p280
        %p447 = pneg %p277
        %p448 = pneg %p301
        %p449 = pneg %p298
        %p450 = pneg %p322
        %p451 = pneg %p319
        %p452 = pneg %p348
        %p453 = pneg %p345
        %s454 = sand.u32 %s335, 1
        %s455 = scalar_lea.sflag [#allocation3], %s454
        %s456 = sand.u32 %s335, 1
        %s457 = smul.addr %s456, 32
        %s458 = scalar_lea.vmem [#allocation2], %s457
        %p459 = scmp.lt.s32.totalorder %s28, 1
        %s460 = scalar_select %p459, %s28, 1
        %s461 = smul.addr %s460, 8
        %s462 = scalar_lea.vmem %s0, %s461
        %v463 = vlaneseq
        %v464 = vand.u32 %v463, 127
        %vm465 = vcmp.lt.s32.totalorder %v464, 16
        %v466 = vld [vmem:[%s462] sm:$0xff]
        %v467 = vld [vmem:[%s1] sm:$0xff]
        %v468 = vld [vmem:[%s1 + $0x8] sm:$0xff]
        %v469 = vld [vmem:[%s1 + $0x10] sm:$0xff]
        %v470 = vld [vmem:[%s1 + $0x18] sm:$0xff]
        %v471 = vld [vmem:[%s2] sm:$0xff]
        %v472 = vld [vmem:[%s2 + $0x8] sm:$0xff]
        %v473 = vld [vmem:[%s2 + $0x10] sm:$0xff]
        %v474 = vld [vmem:[%s2 + $0x18] sm:$0xff]
        %475 = vrot.lane.b32.xlu0 %v466, 1
        %v476 = vpop.permute.xlu0 %475
        %477 = vrot.lane.b32.xlu0 %v466, 127
        %v478 = vpop.permute.xlu0 %477
        %vm479 = vcmask 195584
        %v481 = vsel %vm479, %v467, 0
        %v484 = vsel %vm479, %v468, 0
        %v487 = vsel %vm479, %v469, 0
        %v490 = vsel %vm479, %v470, 0
        %492 = vmatprep.subr.mxu0 0.0
        %493 = vmatpush1.msra.mxu0 %v476
        %494 = vmatprep.subr.mxu0 0.0
        %495 = vmatpush1.msra.mxu0 %v466
        %496 = vmatprep.subr.mxu0 0.0
        %497 = vmatpush1.msra.mxu0 %v478
        %498 = vmatprep.subr.mxu0 0.0
        %499 = vmatpush1.msra.mxu0 0.0
        %500 = vmatprep.subr.mxu0 0.0
        %501 = vmatpush1.msra.mxu0 0.0
        %502 = vmatprep.subr.mxu0 0.0
        %503 = vmatpush1.msra.mxu0 0.0
        %504 = vmatprep.subr.mxu0 0.0
        %505 = vmatpush1.msra.mxu0 0.0
        %506 = vmatprep.subr.mxu0 0.0
        %507 = vmatpush1.msra.mxu0 0.0
        %508 = vmatprep.subr.mxu0 0.0
        %509 = vmatpush1.msra.mxu0 0.0
        %510 = vmatprep.subr.mxu0 0.0
        %511 = vmatpush1.msra.mxu0 0.0
        %512 = vmatprep.subr.mxu0 0.0
        %513 = vmatpush1.msra.mxu0 0.0
        %514 = vmatprep.subr.mxu0 0.0
        %515 = vmatpush1.msra.mxu0 0.0
        %516 = vmatprep.subr.mxu0 0.0
        %517 = vmatpush1.msra.mxu0 0.0
        %518 = vmatprep.subr.mxu0 0.0
        %519 = vmatpush1.msra.mxu0 0.0
        %520 = vmatprep.subr.mxu0 0.0
        %521 = vmatpush1.msra.mxu0 0.0
        %522 = vmatprep.subr.mxu0 0.0
        %523 = vmatpush1.msra.mxu0 0.0
        %524 = vmatprep.subr.mxu0 0.0
        %525 = vmatpush1.msra.mxu0 0.0
        %526 = vmatprep.subr.mxu0 0.0
        %527 = vmatpush1.msra.mxu0 0.0
        %528 = vmatprep.subr.mxu0 0.0
        %529 = vmatpush1.msra.mxu0 0.0
        %530 = vmatprep.subr.mxu0 0.0
        %531 = vmatpush1.msra.mxu0 0.0
        %532 = vmatprep.subr.mxu0 0.0
        %533 = vmatpush1.msra.mxu0 0.0
        %534 = vmatprep.subr.mxu0 0.0
        %535 = vmatpush1.msra.mxu0 0.0
        %536 = vmatprep.subr.mxu0 0.0
        %537 = vmatpush1.msra.mxu0 0.0
        %538 = vmatprep.subr.mxu0 0.0
        %539 = vmatpush1.msra.mxu0 0.0
        %540 = vmatprep.subr.mxu0 0.0
        %541 = vmatpush1.msra.mxu0 0.0
        %542 = vmatprep.subr.mxu0 0.0
        %543 = vmatpush1.msra.mxu0 0.0
        %544 = vmatprep.subr.mxu0 0.0
        %545 = vmatpush1.msra.mxu0 0.0
        %546 = vmatprep.subr.mxu0 0.0
        %547 = vmatpush1.msra.mxu0 0.0
        %548 = vmatprep.subr.mxu0 0.0
        %549 = vmatpush1.msra.mxu0 0.0
        %550 = vmatprep.subr.mxu0 0.0
        %551 = vmatpush1.msra.mxu0 0.0
        %552 = vmatprep.subr.mxu0 0.0
        %553 = vmatpush1.msra.mxu0 0.0
        %554 = vmatprep.subr.mxu0 0.0
        %555 = vmatpush1.msra.mxu0 0.0
        %556 = vmatprep.mubr.f32.mxu0 0.0
        %557 = vmatmul.mubr.f32.gmra.mrb[0].mxu0 %v481
        %v558 = vpop.f32.mrb[0].mxu0
        %v559 = vadd.f32 0.0, %v558
        %v560 = vpop.f32.mrb[0].mxu0
        %561 = vmatprep.mubr.f32.mxu0 0.0
        %562 = vmatmul.mubr.f32.gmra.mrb[0].mxu0 %v484
        %v563 = vpop.f32.mrb[0].mxu0
        %v564 = vadd.f32 0.0, %v563
        %v565 = vpop.f32.mrb[0].mxu0
        %566 = vmatprep.mubr.f32.mxu0 0.0
        %567 = vmatmul.mubr.f32.gmra.mrb[0].mxu0 %v487
        %v568 = vpop.f32.mrb[0].mxu0
        %v569 = vadd.f32 0.0, %v568
        %v570 = vpop.f32.mrb[0].mxu0
        %571 = vmatprep.mubr.f32.mxu0 0.0
        %572 = vmatmul.mubr.f32.gmra.mrb[0].mxu0 %v490
        %v573 = vpop.f32.mrb[0].mxu0
        %v574 = vadd.f32 0.0, %v573
        %v575 = vpop.f32.mrb[0].mxu0
        %576 = vdwg.mxu0
        %578 = vset.pattern.permute.xlu0 0
        %579 = vperm.xlu0 %578, %v471
        %v580 = vpop.permute.xlu0 %579
        %583 = vset.pattern.permute.xlu0 0
        %584 = vperm.xlu0 %583, %v472
        %v585 = vpop.permute.xlu0 %584
        %588 = vset.pattern.permute.xlu0 0
        %589 = vperm.xlu0 %588, %v473
        %v590 = vpop.permute.xlu0 %589
        %593 = vset.pattern.permute.xlu0 0
        %594 = vperm.xlu0 %593, %v474
        %v595 = vpop.permute.xlu0 %594
        %v597 = vmul.f32 %v559, %v580
        %v598 = vmul.f32 %v564, %v585
        %v599 = vmul.f32 %v569, %v590
        %v600 = vmul.f32 %v574, %v595
        %601 = vset.pattern.permute.xlu0 1
        %602 = vperm.xlu0 %601, %v471
        %v603 = vpop.permute.xlu0 %602
        %605 = vset.pattern.permute.xlu0 1
        %606 = vperm.xlu0 %605, %v472
        %v607 = vpop.permute.xlu0 %606
        %609 = vset.pattern.permute.xlu0 1
        %610 = vperm.xlu0 %609, %v473
        %v611 = vpop.permute.xlu0 %610
        %613 = vset.pattern.permute.xlu0 1
        %614 = vperm.xlu0 %613, %v474
        %v615 = vpop.permute.xlu0 %614
        %v617 = vadd.f32 %v597, %v603
        %v618 = vadd.f32 %v598, %v607
        %v619 = vadd.f32 %v599, %v611
        %v620 = vadd.f32 %v600, %v615
        %v621 = vmax.f32 %v617, 0.0
        %v622 = vmax.f32 %v618, 0.0
        %v623 = vmax.f32 %v619, 0.0
        %v624 = vmax.f32 %v620, 0.0
        %v625 = vsel %vm465, 1, 0
        %vm626 = vcmp.eq.s32.totalorder %v625, 1
        %v627 = vsel %vm626, %v621, 0.0
        %v628 = vsel %vm626, %v622, 0.0
        %v629 = vsel %vm626, %v623, 0.0
        %v630 = vsel %vm626, %v624, 0.0
        %v631 = vld [vmem:[%s6] sm:$0xff]
        %v632 = vld [vmem:[%s6 + $0x8] sm:$0xff]
        %v633 = vld [vmem:[%s6 + $0x10] sm:$0xff]
        %v634 = vld [vmem:[%s6 + $0x18] sm:$0xff]
        %v635 = vld [vmem:[%s7] sm:$0xff]
        %v636 = vld [vmem:[%s7 + $0x8] sm:$0xff]
        %v637 = vld [vmem:[%s7 + $0x10] sm:$0xff]
        %v638 = vld [vmem:[%s7 + $0x18] sm:$0xff]
        %vm639 = vcmask 261120
        %v641 = vsel %vm639, %v631, 0
        %v644 = vsel %vm639, %v632, 0
        %v647 = vsel %vm639, %v633, 0
        %v650 = vsel %vm639, %v634, 0
        %652 = vmatprep.subr.mxu0 0.0
        %653 = vmatpush1.msra.mxu0 %v627
        %654 = vmatprep.subr.mxu0 0.0
        %655 = vmatpush1.msra.mxu0 %v628
        %656 = vmatprep.subr.mxu0 0.0
        %657 = vmatpush1.msra.mxu0 %v629
        %658 = vmatprep.subr.mxu0 0.0
        %659 = vmatpush1.msra.mxu0 %v630
        %660 = vmatprep.subr.mxu0 0.0
        %661 = vmatpush1.msra.mxu0 0.0
        %662 = vmatprep.subr.mxu0 0.0
        %663 = vmatpush1.msra.mxu0 0.0
        %664 = vmatprep.subr.mxu0 0.0
        %665 = vmatpush1.msra.mxu0 0.0
        %666 = vmatprep.subr.mxu0 0.0
        %667 = vmatpush1.msra.mxu0 0.0
        %668 = vmatprep.subr.mxu0 0.0
        %669 = vmatpush1.msra.mxu0 0.0
        %670 = vmatprep.subr.mxu0 0.0
        %671 = vmatpush1.msra.mxu0 0.0
        %672 = vmatprep.subr.mxu0 0.0
        %673 = vmatpush1.msra.mxu0 0.0
        %674 = vmatprep.subr.mxu0 0.0
        %675 = vmatpush1.msra.mxu0 0.0
        %676 = vmatprep.subr.mxu0 0.0
        %677 = vmatpush1.msra.mxu0 0.0
        %678 = vmatprep.subr.mxu0 0.0
        %679 = vmatpush1.msra.mxu0 0.0
        %680 = vmatprep.subr.mxu0 0.0
        %681 = vmatpush1.msra.mxu0 0.0
        %682 = vmatprep.subr.mxu0 0.0
        %683 = vmatpush1.msra.mxu0 0.0
        %684 = vmatprep.subr.mxu0 0.0
        %685 = vmatpush1.msra.mxu0 0.0
        %686 = vmatprep.subr.mxu0 0.0
        %687 = vmatpush1.msra.mxu0 0.0
        %688 = vmatprep.subr.mxu0 0.0
        %689 = vmatpush1.msra.mxu0 0.0
        %690 = vmatprep.subr.mxu0 0.0
        %691 = vmatpush1.msra.mxu0 0.0
        %692 = vmatprep.subr.mxu0 0.0
        %693 = vmatpush1.msra.mxu0 0.0
        %694 = vmatprep.subr.mxu0 0.0
        %695 = vmatpush1.msra.mxu0 0.0
        %696 = vmatprep.subr.mxu0 0.0
        %697 = vmatpush1.msra.mxu0 0.0
        %698 = vmatprep.subr.mxu0 0.0
        %699 = vmatpush1.msra.mxu0 0.0
        %700 = vmatprep.subr.mxu0 0.0
        %701 = vmatpush1.msra.mxu0 0.0
        %702 = vmatprep.subr.mxu0 0.0
        %703 = vmatpush1.msra.mxu0 0.0
        %704 = vmatprep.subr.mxu0 0.0
        %705 = vmatpush1.msra.mxu0 0.0
        %706 = vmatprep.subr.mxu0 0.0
        %707 = vmatpush1.msra.mxu0 0.0
        %708 = vmatprep.subr.mxu0 0.0
        %709 = vmatpush1.msra.mxu0 0.0
        %710 = vmatprep.subr.mxu0 0.0
        %711 = vmatpush1.msra.mxu0 0.0
        %712 = vmatprep.subr.mxu0 0.0
        %713 = vmatpush1.msra.mxu0 0.0
        %714 = vmatprep.subr.mxu0 0.0
        %715 = vmatpush1.msra.mxu0 0.0
        %716 = vmatprep.mubr.f32.mxu0 0.0
        %717 = vmatmul.mubr.f32.gmra.mrb[0].mxu0 %v641
        %v718 = vpop.f32.mrb[0].mxu0
        %v719 = vadd.f32 0.0, %v718
        %v720 = vpop.f32.mrb[0].mxu0
        %721 = vmatprep.mubr.f32.mxu0 0.0
        %722 = vmatmul.mubr.f32.gmra.mrb[0].mxu0 %v644
        %v723 = vpop.f32.mrb[0].mxu0
        %v724 = vadd.f32 0.0, %v723
        %v725 = vpop.f32.mrb[0].mxu0
        %726 = vmatprep.mubr.f32.mxu0 0.0
        %727 = vmatmul.mubr.f32.gmra.mrb[0].mxu0 %v647
        %v728 = vpop.f32.mrb[0].mxu0
        %v729 = vadd.f32 0.0, %v728
        %v730 = vpop.f32.mrb[0].mxu0
        %731 = vmatprep.mubr.f32.mxu0 0.0
        %732 = vmatmul.mubr.f32.gmra.mrb[0].mxu0 %v650
        %v733 = vpop.f32.mrb[0].mxu0
        %v734 = vadd.f32 0.0, %v733
        %v735 = vpop.f32.mrb[0].mxu0
        %736 = vdwg.mxu0
        %738 = vset.pattern.permute.xlu0 0
        %739 = vperm.xlu0 %738, %v635
        %v740 = vpop.permute.xlu0 %739
        %743 = vset.pattern.permute.xlu0 0
        %744 = vperm.xlu0 %743, %v636
        %v745 = vpop.permute.xlu0 %744
        %748 = vset.pattern.permute.xlu0 0
        %749 = vperm.xlu0 %748, %v637
        %v750 = vpop.permute.xlu0 %749
        %753 = vset.pattern.permute.xlu0 0
        %754 = vperm.xlu0 %753, %v638
        %v755 = vpop.permute.xlu0 %754
        %v757 = vmul.f32 %v719, %v740
        %v758 = vmul.f32 %v724, %v745
        %v759 = vmul.f32 %v729, %v750
        %v760 = vmul.f32 %v734, %v755
        %761 = vset.pattern.permute.xlu0 1
        %762 = vperm.xlu0 %761, %v635
        %v763 = vpop.permute.xlu0 %762
        %765 = vset.pattern.permute.xlu0 1
        %766 = vperm.xlu0 %765, %v636
        %v767 = vpop.permute.xlu0 %766
        %769 = vset.pattern.permute.xlu0 1
        %770 = vperm.xlu0 %769, %v637
        %v771 = vpop.permute.xlu0 %770
        %773 = vset.pattern.permute.xlu0 1
        %774 = vperm.xlu0 %773, %v638
        %v775 = vpop.permute.xlu0 %774
        %v777 = vadd.f32 %v757, %v763
        %v778 = vadd.f32 %v758, %v767
        %v779 = vadd.f32 %v759, %v771
        %v780 = vadd.f32 %v760, %v775
        %v781 = vsel %vm626, %v777, 0.0
        %v782 = vsel %vm626, %v778, 0.0
        %v783 = vsel %vm626, %v779, 0.0
        %v784 = vsel %vm626, %v780, 0.0
        %v785 = vld [vmem:[%s3] sm:$0xff]
        %v786 = vld [vmem:[%s3 + $0x8] sm:$0xff]
        %v787 = vld [vmem:[%s3 + $0x10] sm:$0xff]
        %v788 = vld [vmem:[%s3 + $0x18] sm:$0xff]
        %v789 = vld [vmem:[%s4] sm:$0xff]
        %v790 = vld [vmem:[%s4 + $0x8] sm:$0xff]
        %v791 = vld [vmem:[%s4 + $0x10] sm:$0xff]
        %v792 = vld [vmem:[%s4 + $0x18] sm:$0xff]
        %v793 = vld [vmem:[%s5] sm:$0xff]
        %v794 = vld [vmem:[%s5 + $0x8] sm:$0xff]
        %v795 = vld [vmem:[%s5 + $0x10] sm:$0xff]
        %v796 = vld [vmem:[%s5 + $0x18] sm:$0xff]
        %797 = vrot.lane.b32.xlu0 %v627, 1
        %v798 = vpop.permute.xlu0 %797
        %799 = vrot.lane.b32.xlu0 %v628, 1
        %v800 = vpop.permute.xlu0 %799
        %801 = vrot.lane.b32.xlu0 %v629, 1
        %v802 = vpop.permute.xlu0 %801
        %803 = vrot.lane.b32.xlu0 %v630, 1
        %v804 = vpop.permute.xlu0 %803
        %806 = vset.pattern.permute.xlu0 0
        %807 = vperm.xlu0 %806, %v785
        %v808 = vpop.permute.xlu0 %807
        %811 = vset.pattern.permute.xlu0 0
        %812 = vperm.xlu0 %811, %v786
        %v813 = vpop.permute.xlu0 %812
        %816 = vset.pattern.permute.xlu0 0
        %817 = vperm.xlu0 %816, %v787
        %v818 = vpop.permute.xlu0 %817
        %821 = vset.pattern.permute.xlu0 0
        %822 = vperm.xlu0 %821, %v788
        %v823 = vpop.permute.xlu0 %822
        %v825 = vmul.f32 %v808, %v798
        %v826 = vmul.f32 %v813, %v800
        %v827 = vmul.f32 %v818, %v802
        %v828 = vmul.f32 %v823, %v804
        %829 = vset.pattern.permute.xlu0 1
        %830 = vperm.xlu0 %829, %v785
        %v831 = vpop.permute.xlu0 %830
        %833 = vset.pattern.permute.xlu0 1
        %834 = vperm.xlu0 %833, %v786
        %v835 = vpop.permute.xlu0 %834
        %837 = vset.pattern.permute.xlu0 1
        %838 = vperm.xlu0 %837, %v787
        %v839 = vpop.permute.xlu0 %838
        %841 = vset.pattern.permute.xlu0 1
        %842 = vperm.xlu0 %841, %v788
        %v843 = vpop.permute.xlu0 %842
        %v845 = vmul.f32 %v831, %v627
        %v846 = vmul.f32 %v835, %v628
        %v847 = vmul.f32 %v839, %v629
        %v848 = vmul.f32 %v843, %v630
        %v849 = vadd.f32 %v825, %v845
        %v850 = vadd.f32 %v826, %v846
        %v851 = vadd.f32 %v827, %v847
        %v852 = vadd.f32 %v828, %v848
        %853 = vrot.lane.b32.xlu0 %v627, 127
        %v854 = vpop.permute.xlu0 %853
        %855 = vrot.lane.b32.xlu0 %v628, 127
        %v856 = vpop.permute.xlu0 %855
        %857 = vrot.lane.b32.xlu0 %v629, 127
        %v858 = vpop.permute.xlu0 %857
        %859 = vrot.lane.b32.xlu0 %v630, 127
        %v860 = vpop.permute.xlu0 %859
        %861 = vset.pattern.permute.xlu0 2
        %862 = vperm.xlu0 %861, %v785
        %v863 = vpop.permute.xlu0 %862
        %865 = vset.pattern.permute.xlu0 2
        %866 = vperm.xlu0 %865, %v786
        %v867 = vpop.permute.xlu0 %866
        %869 = vset.pattern.permute.xlu0 2
        %870 = vperm.xlu0 %869, %v787
        %v871 = vpop.permute.xlu0 %870
        %873 = vset.pattern.permute.xlu0 2
        %874 = vperm.xlu0 %873, %v788
        %v875 = vpop.permute.xlu0 %874
        %v877 = vmul.f32 %v863, %v854
        %v878 = vmul.f32 %v867, %v856
        %v879 = vmul.f32 %v871, %v858
        %v880 = vmul.f32 %v875, %v860
        %v881 = vadd.f32 %v849, %v877
        %v882 = vadd.f32 %v850, %v878
        %v883 = vadd.f32 %v851, %v879
        %v884 = vadd.f32 %v852, %v880
        %v886 = vsel %vm639, %v789, 0
        %v889 = vsel %vm639, %v790, 0
        %v892 = vsel %vm639, %v791, 0
        %v895 = vsel %vm639, %v792, 0
        %897 = vmatprep.subr.mxu0 0.0
        %898 = vmatpush1.msra.mxu0 %v881
        %899 = vmatprep.subr.mxu0 0.0
        %900 = vmatpush1.msra.mxu0 %v882
        %901 = vmatprep.subr.mxu0 0.0
        %902 = vmatpush1.msra.mxu0 %v883
        %903 = vmatprep.subr.mxu0 0.0
        %904 = vmatpush1.msra.mxu0 %v884
        %905 = vmatprep.subr.mxu0 0.0
        %906 = vmatpush1.msra.mxu0 0.0
        %907 = vmatprep.subr.mxu0 0.0
        %908 = vmatpush1.msra.mxu0 0.0
        %909 = vmatprep.subr.mxu0 0.0
        %910 = vmatpush1.msra.mxu0 0.0
        %911 = vmatprep.subr.mxu0 0.0
        %912 = vmatpush1.msra.mxu0 0.0
        %913 = vmatprep.subr.mxu0 0.0
        %914 = vmatpush1.msra.mxu0 0.0
        %915 = vmatprep.subr.mxu0 0.0
        %916 = vmatpush1.msra.mxu0 0.0
        %917 = vmatprep.subr.mxu0 0.0
        %918 = vmatpush1.msra.mxu0 0.0
        %919 = vmatprep.subr.mxu0 0.0
        %920 = vmatpush1.msra.mxu0 0.0
        %921 = vmatprep.subr.mxu0 0.0
        %922 = vmatpush1.msra.mxu0 0.0
        %923 = vmatprep.subr.mxu0 0.0
        %924 = vmatpush1.msra.mxu0 0.0
        %925 = vmatprep.subr.mxu0 0.0
        %926 = vmatpush1.msra.mxu0 0.0
        %927 = vmatprep.subr.mxu0 0.0
        %928 = vmatpush1.msra.mxu0 0.0
        %929 = vmatprep.subr.mxu0 0.0
        %930 = vmatpush1.msra.mxu0 0.0
        %931 = vmatprep.subr.mxu0 0.0
        %932 = vmatpush1.msra.mxu0 0.0
        %933 = vmatprep.subr.mxu0 0.0
        %934 = vmatpush1.msra.mxu0 0.0
        %935 = vmatprep.subr.mxu0 0.0
        %936 = vmatpush1.msra.mxu0 0.0
        %937 = vmatprep.subr.mxu0 0.0
        %938 = vmatpush1.msra.mxu0 0.0
        %939 = vmatprep.subr.mxu0 0.0
        %940 = vmatpush1.msra.mxu0 0.0
        %941 = vmatprep.subr.mxu0 0.0
        %942 = vmatpush1.msra.mxu0 0.0
        %943 = vmatprep.subr.mxu0 0.0
        %944 = vmatpush1.msra.mxu0 0.0
        %945 = vmatprep.subr.mxu0 0.0
        %946 = vmatpush1.msra.mxu0 0.0
        %947 = vmatprep.subr.mxu0 0.0
        %948 = vmatpush1.msra.mxu0 0.0
        %949 = vmatprep.subr.mxu0 0.0
        %950 = vmatpush1.msra.mxu0 0.0
        %951 = vmatprep.subr.mxu0 0.0
        %952 = vmatpush1.msra.mxu0 0.0
        %953 = vmatprep.subr.mxu0 0.0
        %954 = vmatpush1.msra.mxu0 0.0
        %955 = vmatprep.subr.mxu0 0.0
        %956 = vmatpush1.msra.mxu0 0.0
        %957 = vmatprep.subr.mxu0 0.0
        %958 = vmatpush1.msra.mxu0 0.0
        %959 = vmatprep.subr.mxu0 0.0
        %960 = vmatpush1.msra.mxu0 0.0
        %961 = vmatprep.mubr.f32.mxu0 0.0
        %962 = vmatmul.mubr.f32.gmra.mrb[0].mxu0 %v886
        %v963 = vpop.f32.mrb[0].mxu0
        %v964 = vadd.f32 0.0, %v963
        %v965 = vpop.f32.mrb[0].mxu0
        %966 = vmatprep.mubr.f32.mxu0 0.0
        %967 = vmatmul.mubr.f32.gmra.mrb[0].mxu0 %v889
        %v968 = vpop.f32.mrb[0].mxu0
        %v969 = vadd.f32 0.0, %v968
        %v970 = vpop.f32.mrb[0].mxu0
        %971 = vmatprep.mubr.f32.mxu0 0.0
        %972 = vmatmul.mubr.f32.gmra.mrb[0].mxu0 %v892
        %v973 = vpop.f32.mrb[0].mxu0
        %v974 = vadd.f32 0.0, %v973
        %v975 = vpop.f32.mrb[0].mxu0
        %976 = vmatprep.mubr.f32.mxu0 0.0
        %977 = vmatmul.mubr.f32.gmra.mrb[0].mxu0 %v895
        %v978 = vpop.f32.mrb[0].mxu0
        %v979 = vadd.f32 0.0, %v978
        %v980 = vpop.f32.mrb[0].mxu0
        %981 = vdwg.mxu0
        %983 = vset.pattern.permute.xlu0 0
        %984 = vperm.xlu0 %983, %v793
        %v985 = vpop.permute.xlu0 %984
        %988 = vset.pattern.permute.xlu0 0
        %989 = vperm.xlu0 %988, %v794
        %v990 = vpop.permute.xlu0 %989
        %993 = vset.pattern.permute.xlu0 0
        %994 = vperm.xlu0 %993, %v795
        %v995 = vpop.permute.xlu0 %994
        %998 = vset.pattern.permute.xlu0 0
        %999 = vperm.xlu0 %998, %v796
        %v1000 = vpop.permute.xlu0 %999
        %v1002 = vmul.f32 %v964, %v985
        %v1003 = vmul.f32 %v969, %v990
        %v1004 = vmul.f32 %v974, %v995
        %v1005 = vmul.f32 %v979, %v1000
        %1006 = vset.pattern.permute.xlu0 1
        %1007 = vperm.xlu0 %1006, %v793
        %v1008 = vpop.permute.xlu0 %1007
        %1010 = vset.pattern.permute.xlu0 1
        %1011 = vperm.xlu0 %1010, %v794
        %v1012 = vpop.permute.xlu0 %1011
        %1014 = vset.pattern.permute.xlu0 1
        %1015 = vperm.xlu0 %1014, %v795
        %v1016 = vpop.permute.xlu0 %1015
        %1018 = vset.pattern.permute.xlu0 1
        %1019 = vperm.xlu0 %1018, %v796
        %v1020 = vpop.permute.xlu0 %1019
        %v1022 = vadd.f32 %v1002, %v1008
        %v1023 = vadd.f32 %v1003, %v1012
        %v1024 = vadd.f32 %v1004, %v1016
        %v1025 = vadd.f32 %v1005, %v1020
        %v1026 = vmax.f32 %v1022, 0.0
        %v1027 = vmax.f32 %v1023, 0.0
        %v1028 = vmax.f32 %v1024, 0.0
        %v1029 = vmax.f32 %v1025, 0.0
        %v1030 = vsel %vm626, %v1026, 0.0
        %v1031 = vsel %vm626, %v1027, 0.0
        %v1032 = vsel %vm626, %v1028, 0.0
        %v1033 = vsel %vm626, %v1029, 0.0
        %s1034 = scalar_lea.vmem %s3, 32
        %v1035 = vld [vmem:[%s1034] sm:$0xff]
        %v1036 = vld [vmem:[%s1034 + $0x8] sm:$0xff]
        %v1037 = vld [vmem:[%s1034 + $0x10] sm:$0xff]
        %v1038 = vld [vmem:[%s1034 + $0x18] sm:$0xff]
        %s1039 = scalar_lea.vmem %s4, 32
        %v1040 = vld [vmem:[%s1039] sm:$0xff]
        %v1041 = vld [vmem:[%s1039 + $0x8] sm:$0xff]
        %v1042 = vld [vmem:[%s1039 + $0x10] sm:$0xff]
        %v1043 = vld [vmem:[%s1039 + $0x18] sm:$0xff]
        %s1044 = scalar_lea.vmem %s5, 32
        %v1045 = vld [vmem:[%s1044] sm:$0xff]
        %v1046 = vld [vmem:[%s1044 + $0x8] sm:$0xff]
        %v1047 = vld [vmem:[%s1044 + $0x10] sm:$0xff]
        %v1048 = vld [vmem:[%s1044 + $0x18] sm:$0xff]
        %1049 = vrot.lane.b32.xlu0 %v1030, 1
        %v1050 = vpop.permute.xlu0 %1049
        %1051 = vrot.lane.b32.xlu0 %v1031, 1
        %v1052 = vpop.permute.xlu0 %1051
        %1053 = vrot.lane.b32.xlu0 %v1032, 1
        %v1054 = vpop.permute.xlu0 %1053
        %1055 = vrot.lane.b32.xlu0 %v1033, 1
        %v1056 = vpop.permute.xlu0 %1055
        %1058 = vset.pattern.permute.xlu0 0
        %1059 = vperm.xlu0 %1058, %v1035
        %v1060 = vpop.permute.xlu0 %1059
        %1063 = vset.pattern.permute.xlu0 0
        %1064 = vperm.xlu0 %1063, %v1036
        %v1065 = vpop.permute.xlu0 %1064
        %1068 = vset.pattern.permute.xlu0 0
        %1069 = vperm.xlu0 %1068, %v1037
        %v1070 = vpop.permute.xlu0 %1069
        %1073 = vset.pattern.permute.xlu0 0
        %1074 = vperm.xlu0 %1073, %v1038
        %v1075 = vpop.permute.xlu0 %1074
        %v1077 = vmul.f32 %v1060, %v1050
        %v1078 = vmul.f32 %v1065, %v1052
        %v1079 = vmul.f32 %v1070, %v1054
        %v1080 = vmul.f32 %v1075, %v1056
        %1081 = vset.pattern.permute.xlu0 1
        %1082 = vperm.xlu0 %1081, %v1035
        %v1083 = vpop.permute.xlu0 %1082
        %1085 = vset.pattern.permute.xlu0 1
        %1086 = vperm.xlu0 %1085, %v1036
        %v1087 = vpop.permute.xlu0 %1086
        %1089 = vset.pattern.permute.xlu0 1
        %1090 = vperm.xlu0 %1089, %v1037
        %v1091 = vpop.permute.xlu0 %1090
        %1093 = vset.pattern.permute.xlu0 1
        %1094 = vperm.xlu0 %1093, %v1038
        %v1095 = vpop.permute.xlu0 %1094
        %v1097 = vmul.f32 %v1083, %v1030
        %v1098 = vmul.f32 %v1087, %v1031
        %v1099 = vmul.f32 %v1091, %v1032
        %v1100 = vmul.f32 %v1095, %v1033
        %v1101 = vadd.f32 %v1077, %v1097
        %v1102 = vadd.f32 %v1078, %v1098
        %v1103 = vadd.f32 %v1079, %v1099
        %v1104 = vadd.f32 %v1080, %v1100
        %1105 = vrot.lane.b32.xlu0 %v1030, 127
        %v1106 = vpop.permute.xlu0 %1105
        %1107 = vrot.lane.b32.xlu0 %v1031, 127
        %v1108 = vpop.permute.xlu0 %1107
        %1109 = vrot.lane.b32.xlu0 %v1032, 127
        %v1110 = vpop.permute.xlu0 %1109
        %1111 = vrot.lane.b32.xlu0 %v1033, 127
        %v1112 = vpop.permute.xlu0 %1111
        %1113 = vset.pattern.permute.xlu0 2
        %1114 = vperm.xlu0 %1113, %v1035
        %v1115 = vpop.permute.xlu0 %1114
        %1117 = vset.pattern.permute.xlu0 2
        %1118 = vperm.xlu0 %1117, %v1036
        %v1119 = vpop.permute.xlu0 %1118
        %1121 = vset.pattern.permute.xlu0 2
        %1122 = vperm.xlu0 %1121, %v1037
        %v1123 = vpop.permute.xlu0 %1122
        %1125 = vset.pattern.permute.xlu0 2
        %1126 = vperm.xlu0 %1125, %v1038
        %v1127 = vpop.permute.xlu0 %1126
        %v1129 = vmul.f32 %v1115, %v1106
        %v1130 = vmul.f32 %v1119, %v1108
        %v1131 = vmul.f32 %v1123, %v1110
        %v1132 = vmul.f32 %v1127, %v1112
        %v1133 = vadd.f32 %v1101, %v1129
        %v1134 = vadd.f32 %v1102, %v1130
        %v1135 = vadd.f32 %v1103, %v1131
        %v1136 = vadd.f32 %v1104, %v1132
        %v1138 = vsel %vm639, %v1040, 0
        %v1141 = vsel %vm639, %v1041, 0
        %v1144 = vsel %vm639, %v1042, 0
        %v1147 = vsel %vm639, %v1043, 0
        %1149 = vmatprep.subr.mxu0 0.0
        %1150 = vmatpush1.msra.mxu0 %v1133
        %1151 = vmatprep.subr.mxu0 0.0
        %1152 = vmatpush1.msra.mxu0 %v1134
        %1153 = vmatprep.subr.mxu0 0.0
        %1154 = vmatpush1.msra.mxu0 %v1135
        %1155 = vmatprep.subr.mxu0 0.0
        %1156 = vmatpush1.msra.mxu0 %v1136
        %1157 = vmatprep.subr.mxu0 0.0
        %1158 = vmatpush1.msra.mxu0 0.0
        %1159 = vmatprep.subr.mxu0 0.0
        %1160 = vmatpush1.msra.mxu0 0.0
        %1161 = vmatprep.subr.mxu0 0.0
        %1162 = vmatpush1.msra.mxu0 0.0
        %1163 = vmatprep.subr.mxu0 0.0
        %1164 = vmatpush1.msra.mxu0 0.0
        %1165 = vmatprep.subr.mxu0 0.0
        %1166 = vmatpush1.msra.mxu0 0.0
        %1167 = vmatprep.subr.mxu0 0.0
        %1168 = vmatpush1.msra.mxu0 0.0
        %1169 = vmatprep.subr.mxu0 0.0
        %1170 = vmatpush1.msra.mxu0 0.0
        %1171 = vmatprep.subr.mxu0 0.0
        %1172 = vmatpush1.msra.mxu0 0.0
        %1173 = vmatprep.subr.mxu0 0.0
        %1174 = vmatpush1.msra.mxu0 0.0
        %1175 = vmatprep.subr.mxu0 0.0
        %1176 = vmatpush1.msra.mxu0 0.0
        %1177 = vmatprep.subr.mxu0 0.0
        %1178 = vmatpush1.msra.mxu0 0.0
        %1179 = vmatprep.subr.mxu0 0.0
        %1180 = vmatpush1.msra.mxu0 0.0
        %1181 = vmatprep.subr.mxu0 0.0
        %1182 = vmatpush1.msra.mxu0 0.0
        %1183 = vmatprep.subr.mxu0 0.0
        %1184 = vmatpush1.msra.mxu0 0.0
        %1185 = vmatprep.subr.mxu0 0.0
        %1186 = vmatpush1.msra.mxu0 0.0
        %1187 = vmatprep.subr.mxu0 0.0
        %1188 = vmatpush1.msra.mxu0 0.0
        %1189 = vmatprep.subr.mxu0 0.0
        %1190 = vmatpush1.msra.mxu0 0.0
        %1191 = vmatprep.subr.mxu0 0.0
        %1192 = vmatpush1.msra.mxu0 0.0
        %1193 = vmatprep.subr.mxu0 0.0
        %1194 = vmatpush1.msra.mxu0 0.0
        %1195 = vmatprep.subr.mxu0 0.0
        %1196 = vmatpush1.msra.mxu0 0.0
        %1197 = vmatprep.subr.mxu0 0.0
        %1198 = vmatpush1.msra.mxu0 0.0
        %1199 = vmatprep.subr.mxu0 0.0
        %1200 = vmatpush1.msra.mxu0 0.0
        %1201 = vmatprep.subr.mxu0 0.0
        %1202 = vmatpush1.msra.mxu0 0.0
        %1203 = vmatprep.subr.mxu0 0.0
        %1204 = vmatpush1.msra.mxu0 0.0
        %1205 = vmatprep.subr.mxu0 0.0
        %1206 = vmatpush1.msra.mxu0 0.0
        %1207 = vmatprep.subr.mxu0 0.0
        %1208 = vmatpush1.msra.mxu0 0.0
        %1209 = vmatprep.subr.mxu0 0.0
        %1210 = vmatpush1.msra.mxu0 0.0
        %1211 = vmatprep.subr.mxu0 0.0
        %1212 = vmatpush1.msra.mxu0 0.0
        %1213 = vmatprep.mubr.f32.mxu0 0.0
        %1214 = vmatmul.mubr.f32.gmra.mrb[0].mxu0 %v1138
        %v1215 = vpop.f32.mrb[0].mxu0
        %v1216 = vadd.f32 0.0, %v1215
        %v1217 = vpop.f32.mrb[0].mxu0
        %1218 = vmatprep.mubr.f32.mxu0 0.0
        %1219 = vmatmul.mubr.f32.gmra.mrb[0].mxu0 %v1141
        %v1220 = vpop.f32.mrb[0].mxu0
        %v1221 = vadd.f32 0.0, %v1220
        %v1222 = vpop.f32.mrb[0].mxu0
        %1223 = vmatprep.mubr.f32.mxu0 0.0
        %1224 = vmatmul.mubr.f32.gmra.mrb[0].mxu0 %v1144
        %v1225 = vpop.f32.mrb[0].mxu0
        %v1226 = vadd.f32 0.0, %v1225
        %v1227 = vpop.f32.mrb[0].mxu0
        %1228 = vmatprep.mubr.f32.mxu0 0.0
        %1229 = vmatmul.mubr.f32.gmra.mrb[0].mxu0 %v1147
        %v1230 = vpop.f32.mrb[0].mxu0
        %v1231 = vadd.f32 0.0, %v1230
        %v1232 = vpop.f32.mrb[0].mxu0
        %1233 = vdwg.mxu0
        %1235 = vset.pattern.permute.xlu0 0
        %1236 = vperm.xlu0 %1235, %v1045
        %v1237 = vpop.permute.xlu0 %1236
        %1240 = vset.pattern.permute.xlu0 0
        %1241 = vperm.xlu0 %1240, %v1046
        %v1242 = vpop.permute.xlu0 %1241
        %1245 = vset.pattern.permute.xlu0 0
        %1246 = vperm.xlu0 %1245, %v1047
        %v1247 = vpop.permute.xlu0 %1246
        %1250 = vset.pattern.permute.xlu0 0
        %1251 = vperm.xlu0 %1250, %v1048
        %v1252 = vpop.permute.xlu0 %1251
        %v1254 = vmul.f32 %v1216, %v1237
        %v1255 = vmul.f32 %v1221, %v1242
        %v1256 = vmul.f32 %v1226, %v1247
        %v1257 = vmul.f32 %v1231, %v1252
        %1258 = vset.pattern.permute.xlu0 1
        %1259 = vperm.xlu0 %1258, %v1045
        %v1260 = vpop.permute.xlu0 %1259
        %1262 = vset.pattern.permute.xlu0 1
        %1263 = vperm.xlu0 %1262, %v1046
        %v1264 = vpop.permute.xlu0 %1263
        %1266 = vset.pattern.permute.xlu0 1
        %1267 = vperm.xlu0 %1266, %v1047
        %v1268 = vpop.permute.xlu0 %1267
        %1270 = vset.pattern.permute.xlu0 1
        %1271 = vperm.xlu0 %1270, %v1048
        %v1272 = vpop.permute.xlu0 %1271
        %v1274 = vadd.f32 %v1254, %v1260
        %v1275 = vadd.f32 %v1255, %v1264
        %v1276 = vadd.f32 %v1256, %v1268
        %v1277 = vadd.f32 %v1257, %v1272
        %v1278 = vmax.f32 %v1274, 0.0
        %v1279 = vmax.f32 %v1275, 0.0
        %v1280 = vmax.f32 %v1276, 0.0
        %v1281 = vmax.f32 %v1277, 0.0
        %v1282 = vsel %vm626, %v1278, 0.0
        %v1283 = vsel %vm626, %v1279, 0.0
        %v1284 = vsel %vm626, %v1280, 0.0
        %v1285 = vsel %vm626, %v1281, 0.0
        %v1286 = vld [vmem:[%s8] sm:$0xff]
        %v1287 = vld [vmem:[%s9] sm:$0xff]
        %v1288 = vld [vmem:[%s10] sm:$0xff]
        %v1289 = vld [vmem:[%s10 + $0x8] sm:$0xff]
        %v1290 = vld [vmem:[%s10 + $0x10] sm:$0xff]
        %v1291 = vld [vmem:[%s10 + $0x18] sm:$0xff]
        %v1292 = vld [vmem:[%s11] sm:$0xff]
        %v1293 = vld [vmem:[%s11 + $0x8] sm:$0xff]
        %v1294 = vld [vmem:[%s11 + $0x10] sm:$0xff]
        %v1295 = vld [vmem:[%s11 + $0x18] sm:$0xff]
        %1296 = vadd.xlane.f32.xlu0 %v1282
        %v1297 = vpop.xlane.xlu0 %1296
        %1298 = vadd.xlane.f32.xlu0 %v1283
        %v1299 = vpop.xlane.xlu0 %1298
        %1300 = vadd.xlane.f32.xlu0 %v1284
        %v1301 = vpop.xlane.xlu0 %1300
        %1302 = vadd.xlane.f32.xlu0 %v1285
        %v1303 = vpop.xlane.xlu0 %1302
        %v1304 = vmul.f32 %v1297, 0.0625
        %v1305 = vmul.f32 %v1299, 0.0625
        %v1306 = vmul.f32 %v1301, 0.0625
        %v1307 = vmul.f32 %v1303, 0.0625
        %v1309 = vsel %vm639, %v1286, 0
        %1311 = vmatprep.subr.mxu0 0.0
        %1312 = vmatpush1.msra.mxu0 %v1304
        %1313 = vmatprep.subr.mxu0 0.0
        %1314 = vmatpush1.msra.mxu0 %v1305
        %1315 = vmatprep.subr.mxu0 0.0
        %1316 = vmatpush1.msra.mxu0 %v1306
        %1317 = vmatprep.subr.mxu0 0.0
        %1318 = vmatpush1.msra.mxu0 %v1307
        %1319 = vmatprep.subr.mxu0 0.0
        %1320 = vmatpush1.msra.mxu0 0.0
        %1321 = vmatprep.subr.mxu0 0.0
        %1322 = vmatpush1.msra.mxu0 0.0
        %1323 = vmatprep.subr.mxu0 0.0
        %1324 = vmatpush1.msra.mxu0 0.0
        %1325 = vmatprep.subr.mxu0 0.0
        %1326 = vmatpush1.msra.mxu0 0.0
        %1327 = vmatprep.subr.mxu0 0.0
        %1328 = vmatpush1.msra.mxu0 0.0
        %1329 = vmatprep.subr.mxu0 0.0
        %1330 = vmatpush1.msra.mxu0 0.0
        %1331 = vmatprep.subr.mxu0 0.0
        %1332 = vmatpush1.msra.mxu0 0.0
        %1333 = vmatprep.subr.mxu0 0.0
        %1334 = vmatpush1.msra.mxu0 0.0
        %1335 = vmatprep.subr.mxu0 0.0
        %1336 = vmatpush1.msra.mxu0 0.0
        %1337 = vmatprep.subr.mxu0 0.0
        %1338 = vmatpush1.msra.mxu0 0.0
        %1339 = vmatprep.subr.mxu0 0.0
        %1340 = vmatpush1.msra.mxu0 0.0
        %1341 = vmatprep.subr.mxu0 0.0
        %1342 = vmatpush1.msra.mxu0 0.0
        %1343 = vmatprep.subr.mxu0 0.0
        %1344 = vmatpush1.msra.mxu0 0.0
        %1345 = vmatprep.subr.mxu0 0.0
        %1346 = vmatpush1.msra.mxu0 0.0
        %1347 = vmatprep.subr.mxu0 0.0
        %1348 = vmatpush1.msra.mxu0 0.0
        %1349 = vmatprep.subr.mxu0 0.0
        %1350 = vmatpush1.msra.mxu0 0.0
        %1351 = vmatprep.subr.mxu0 0.0
        %1352 = vmatpush1.msra.mxu0 0.0
        %1353 = vmatprep.subr.mxu0 0.0
        %1354 = vmatpush1.msra.mxu0 0.0
        %1355 = vmatprep.subr.mxu0 0.0
        %1356 = vmatpush1.msra.mxu0 0.0
        %1357 = vmatprep.subr.mxu0 0.0
        %1358 = vmatpush1.msra.mxu0 0.0
        %1359 = vmatprep.subr.mxu0 0.0
        %1360 = vmatpush1.msra.mxu0 0.0
        %1361 = vmatprep.subr.mxu0 0.0
        %1362 = vmatpush1.msra.mxu0 0.0
        %1363 = vmatprep.subr.mxu0 0.0
        %1364 = vmatpush1.msra.mxu0 0.0
        %1365 = vmatprep.subr.mxu0 0.0
        %1366 = vmatpush1.msra.mxu0 0.0
        %1367 = vmatprep.subr.mxu0 0.0
        %1368 = vmatpush1.msra.mxu0 0.0
        %1369 = vmatprep.subr.mxu0 0.0
        %1370 = vmatpush1.msra.mxu0 0.0
        %1371 = vmatprep.subr.mxu0 0.0
        %1372 = vmatpush1.msra.mxu0 0.0
        %1373 = vmatprep.subr.mxu0 0.0
        %1374 = vmatpush1.msra.mxu0 0.0
        %1375 = vmatprep.mubr.f32.mxu0 0.0
        %1376 = vmatmul.mubr.f32.gmra.mrb[0].mxu0 %v1309
        %v1377 = vpop.f32.mrb[0].mxu0
        %v1378 = vadd.f32 %v1287, %v1377
        %v1379 = vpop.f32.mrb[0].mxu0
        %1380 = vdwg.mxu0
        %v1381 = vmax.f32 %v1378, 0.0
        %vm1382 = vcmask 64512
        %v1384 = vsel %vm1382, %v1288, 0
        %v1387 = vsel %vm1382, %v1289, 0
        %v1390 = vsel %vm1382, %v1290, 0
        %v1393 = vsel %vm1382, %v1291, 0
        %1395 = vmatprep.subr.mxu0 0.0
        %1396 = vmatpush1.msra.mxu0 %v1381
        %1397 = vmatprep.subr.mxu0 0.0
        %1398 = vmatpush1.msra.mxu0 0.0
        %1399 = vmatprep.subr.mxu0 0.0
        %1400 = vmatpush1.msra.mxu0 0.0
        %1401 = vmatprep.subr.mxu0 0.0
        %1402 = vmatpush1.msra.mxu0 0.0
        %1403 = vmatprep.subr.mxu0 0.0
        %1404 = vmatpush1.msra.mxu0 0.0
        %1405 = vmatprep.subr.mxu0 0.0
        %1406 = vmatpush1.msra.mxu0 0.0
        %1407 = vmatprep.subr.mxu0 0.0
        %1408 = vmatpush1.msra.mxu0 0.0
        %1409 = vmatprep.subr.mxu0 0.0
        %1410 = vmatpush1.msra.mxu0 0.0
        %1411 = vmatprep.subr.mxu0 0.0
        %1412 = vmatpush1.msra.mxu0 0.0
        %1413 = vmatprep.subr.mxu0 0.0
        %1414 = vmatpush1.msra.mxu0 0.0
        %1415 = vmatprep.subr.mxu0 0.0
        %1416 = vmatpush1.msra.mxu0 0.0
        %1417 = vmatprep.subr.mxu0 0.0
        %1418 = vmatpush1.msra.mxu0 0.0
        %1419 = vmatprep.subr.mxu0 0.0
        %1420 = vmatpush1.msra.mxu0 0.0
        %1421 = vmatprep.subr.mxu0 0.0
        %1422 = vmatpush1.msra.mxu0 0.0
        %1423 = vmatprep.subr.mxu0 0.0
        %1424 = vmatpush1.msra.mxu0 0.0
        %1425 = vmatprep.subr.mxu0 0.0
        %1426 = vmatpush1.msra.mxu0 0.0
        %1427 = vmatprep.subr.mxu0 0.0
        %1428 = vmatpush1.msra.mxu0 0.0
        %1429 = vmatprep.subr.mxu0 0.0
        %1430 = vmatpush1.msra.mxu0 0.0
        %1431 = vmatprep.subr.mxu0 0.0
        %1432 = vmatpush1.msra.mxu0 0.0
        %1433 = vmatprep.subr.mxu0 0.0
        %1434 = vmatpush1.msra.mxu0 0.0
        %1435 = vmatprep.subr.mxu0 0.0
        %1436 = vmatpush1.msra.mxu0 0.0
        %1437 = vmatprep.subr.mxu0 0.0
        %1438 = vmatpush1.msra.mxu0 0.0
        %1439 = vmatprep.subr.mxu0 0.0
        %1440 = vmatpush1.msra.mxu0 0.0
        %1441 = vmatprep.subr.mxu0 0.0
        %1442 = vmatpush1.msra.mxu0 0.0
        %1443 = vmatprep.subr.mxu0 0.0
        %1444 = vmatpush1.msra.mxu0 0.0
        %1445 = vmatprep.subr.mxu0 0.0
        %1446 = vmatpush1.msra.mxu0 0.0
        %1447 = vmatprep.subr.mxu0 0.0
        %1448 = vmatpush1.msra.mxu0 0.0
        %1449 = vmatprep.subr.mxu0 0.0
        %1450 = vmatpush1.msra.mxu0 0.0
        %1451 = vmatprep.subr.mxu0 0.0
        %1452 = vmatpush1.msra.mxu0 0.0
        %1453 = vmatprep.subr.mxu0 0.0
        %1454 = vmatpush1.msra.mxu0 0.0
        %1455 = vmatprep.subr.mxu0 0.0
        %1456 = vmatpush1.msra.mxu0 0.0
        %1457 = vmatprep.subr.mxu0 0.0
        %1458 = vmatpush1.msra.mxu0 0.0
        %1459 = vmatprep.mubr.f32.mxu0 0.0
        %1460 = vmatmul.mubr.f32.gmra.mrb[0].mxu0 %v1384
        %v1461 = vpop.f32.mrb[0].mxu0
        %v1462 = vadd.f32 %v1292, %v1461
        %v1463 = vpop.f32.mrb[0].mxu0
        %1464 = vmatprep.mubr.f32.mxu0 0.0
        %1465 = vmatmul.mubr.f32.gmra.mrb[0].mxu0 %v1387
        %v1466 = vpop.f32.mrb[0].mxu0
        %v1467 = vadd.f32 %v1293, %v1466
        %v1468 = vpop.f32.mrb[0].mxu0
        %1469 = vmatprep.mubr.f32.mxu0 0.0
        %1470 = vmatmul.mubr.f32.gmra.mrb[0].mxu0 %v1390
        %v1471 = vpop.f32.mrb[0].mxu0
        %v1472 = vadd.f32 %v1294, %v1471
        %v1473 = vpop.f32.mrb[0].mxu0
        %1474 = vmatprep.mubr.f32.mxu0 0.0
        %1475 = vmatmul.mubr.f32.gmra.mrb[0].mxu0 %v1393
        %v1476 = vpop.f32.mrb[0].mxu0
        %v1477 = vadd.f32 %v1295, %v1476
        %v1478 = vpop.f32.mrb[0].mxu0
        %1479 = vdwg.mxu0
        %v1480 = vxor.u32 %v1462, 2147483648
        %v1481 = vxor.u32 %v1467, 2147483648
        %v1482 = vxor.u32 %v1472, 2147483648
        %v1483 = vxor.u32 %v1477, 2147483648
        %v1484 = vmul.f32 %v1480, 1.442695
        %v1485 = vpow.pop %v1484
        %v1486 = vmul.f32 %v1481, 1.442695
        %v1487 = vpow.pop %v1486
        %v1488 = vmul.f32 %v1482, 1.442695
        %v1489 = vpow.pop %v1488
        %v1490 = vmul.f32 %v1483, 1.442695
        %v1491 = vpow.pop %v1490
        %v1492 = vadd.f32 %v1485, 1.0
        %v1493 = vadd.f32 %v1487, 1.0
        %v1494 = vadd.f32 %v1489, 1.0
        %v1495 = vadd.f32 %v1491, 1.0
        %v1496 = vrcp.pop %v1492
        %v1497 = vmul.f32 1.0, %v1496
        %v1498 = vrcp.pop %v1493
        %v1499 = vmul.f32 1.0, %v1498
        %v1500 = vrcp.pop %v1494
        %v1501 = vmul.f32 1.0, %v1500
        %v1502 = vrcp.pop %v1495
        %v1503 = vmul.f32 1.0, %v1502
        %1505 = vset.pattern.permute.xlu0 0
        %1506 = vperm.xlu0 %1505, %v1497
        %v1507 = vpop.permute.xlu0 %1506
        %1510 = vset.pattern.permute.xlu0 0
        %1511 = vperm.xlu0 %1510, %v1499
        %v1512 = vpop.permute.xlu0 %1511
        %1515 = vset.pattern.permute.xlu0 0
        %1516 = vperm.xlu0 %1515, %v1501
        %v1517 = vpop.permute.xlu0 %1516
        %1520 = vset.pattern.permute.xlu0 0
        %1521 = vperm.xlu0 %1520, %v1503
        %v1522 = vpop.permute.xlu0 %1521
        %v1524 = vmul.f32 %v1282, %v1507
        %v1525 = vmul.f32 %v1283, %v1512
        %v1526 = vmul.f32 %v1284, %v1517
        %v1527 = vmul.f32 %v1285, %v1522
        %v1528 = vadd.f32 %v781, %v1524
        %v1529 = vadd.f32 %v782, %v1525
        %v1530 = vadd.f32 %v783, %v1526
        %v1531 = vadd.f32 %v784, %v1527
        %v1532 = vmax.f32 %v1528, 0.0
        %v1533 = vmax.f32 %v1529, 0.0
        %v1534 = vmax.f32 %v1530, 0.0
        %v1535 = vmax.f32 %v1531, 0.0
        %v1536 = vsel %vm626, %v1532, 0.0
        %v1537 = vsel %vm626, %v1533, 0.0
        %v1538 = vsel %vm626, %v1534, 0.0
        %v1539 = vsel %vm626, %v1535, 0.0
        %s1540 = scalar_lea.vmem %s6, 32
        %v1541 = vld [vmem:[%s1540] sm:$0xff]
        %v1542 = vld [vmem:[%s1540 + $0x8] sm:$0xff]
        %v1543 = vld [vmem:[%s1540 + $0x10] sm:$0xff]
        %v1544 = vld [vmem:[%s1540 + $0x18] sm:$0xff]
        %s1545 = scalar_lea.vmem %s7, 32
        %v1546 = vld [vmem:[%s1545] sm:$0xff]
        %v1547 = vld [vmem:[%s1545 + $0x8] sm:$0xff]
        %v1548 = vld [vmem:[%s1545 + $0x10] sm:$0xff]
        %v1549 = vld [vmem:[%s1545 + $0x18] sm:$0xff]
        %v1551 = vsel %vm639, %v1541, 0
        %v1554 = vsel %vm639, %v1542, 0
        %v1557 = vsel %vm639, %v1543, 0
        %v1560 = vsel %vm639, %v1544, 0
        %1562 = vmatprep.subr.mxu0 0.0
        %1563 = vmatpush1.msra.mxu0 %v1536
        %1564 = vmatprep.subr.mxu0 0.0
        %1565 = vmatpush1.msra.mxu0 %v1537
        %1566 = vmatprep.subr.mxu0 0.0
        %1567 = vmatpush1.msra.mxu0 %v1538
        %1568 = vmatprep.subr.mxu0 0.0
        %1569 = vmatpush1.msra.mxu0 %v1539
        %1570 = vmatprep.subr.mxu0 0.0
        %1571 = vmatpush1.msra.mxu0 0.0
        %1572 = vmatprep.subr.mxu0 0.0
        %1573 = vmatpush1.msra.mxu0 0.0
        %1574 = vmatprep.subr.mxu0 0.0
        %1575 = vmatpush1.msra.mxu0 0.0
        %1576 = vmatprep.subr.mxu0 0.0
        %1577 = vmatpush1.msra.mxu0 0.0
        %1578 = vmatprep.subr.mxu0 0.0
        %1579 = vmatpush1.msra.mxu0 0.0
        %1580 = vmatprep.subr.mxu0 0.0
        %1581 = vmatpush1.msra.mxu0 0.0
        %1582 = vmatprep.subr.mxu0 0.0
        %1583 = vmatpush1.msra.mxu0 0.0
        %1584 = vmatprep.subr.mxu0 0.0
        %1585 = vmatpush1.msra.mxu0 0.0
        %1586 = vmatprep.subr.mxu0 0.0
        %1587 = vmatpush1.msra.mxu0 0.0
        %1588 = vmatprep.subr.mxu0 0.0
        %1589 = vmatpush1.msra.mxu0 0.0
        %1590 = vmatprep.subr.mxu0 0.0
        %1591 = vmatpush1.msra.mxu0 0.0
        %1592 = vmatprep.subr.mxu0 0.0
        %1593 = vmatpush1.msra.mxu0 0.0
        %1594 = vmatprep.subr.mxu0 0.0
        %1595 = vmatpush1.msra.mxu0 0.0
        %1596 = vmatprep.subr.mxu0 0.0
        %1597 = vmatpush1.msra.mxu0 0.0
        %1598 = vmatprep.subr.mxu0 0.0
        %1599 = vmatpush1.msra.mxu0 0.0
        %1600 = vmatprep.subr.mxu0 0.0
        %1601 = vmatpush1.msra.mxu0 0.0
        %1602 = vmatprep.subr.mxu0 0.0
        %1603 = vmatpush1.msra.mxu0 0.0
        %1604 = vmatprep.subr.mxu0 0.0
        %1605 = vmatpush1.msra.mxu0 0.0
        %1606 = vmatprep.subr.mxu0 0.0
        %1607 = vmatpush1.msra.mxu0 0.0
        %1608 = vmatprep.subr.mxu0 0.0
        %1609 = vmatpush1.msra.mxu0 0.0
        %1610 = vmatprep.subr.mxu0 0.0
        %1611 = vmatpush1.msra.mxu0 0.0
        %1612 = vmatprep.subr.mxu0 0.0
        %1613 = vmatpush1.msra.mxu0 0.0
        %1614 = vmatprep.subr.mxu0 0.0
        %1615 = vmatpush1.msra.mxu0 0.0
        %1616 = vmatprep.subr.mxu0 0.0
        %1617 = vmatpush1.msra.mxu0 0.0
        %1618 = vmatprep.subr.mxu0 0.0
        %1619 = vmatpush1.msra.mxu0 0.0
        %1620 = vmatprep.subr.mxu0 0.0
        %1621 = vmatpush1.msra.mxu0 0.0
        %1622 = vmatprep.subr.mxu0 0.0
        %1623 = vmatpush1.msra.mxu0 0.0
        %1624 = vmatprep.subr.mxu0 0.0
        %1625 = vmatpush1.msra.mxu0 0.0
        %1626 = vmatprep.mubr.f32.mxu0 0.0
        %1627 = vmatmul.mubr.f32.gmra.mrb[0].mxu0 %v1551
        %v1628 = vpop.f32.mrb[0].mxu0
        %v1629 = vadd.f32 0.0, %v1628
        %v1630 = vpop.f32.mrb[0].mxu0
        %1631 = vmatprep.mubr.f32.mxu0 0.0
        %1632 = vmatmul.mubr.f32.gmra.mrb[0].mxu0 %v1554
        %v1633 = vpop.f32.mrb[0].mxu0
        %v1634 = vadd.f32 0.0, %v1633
        %v1635 = vpop.f32.mrb[0].mxu0
        %1636 = vmatprep.mubr.f32.mxu0 0.0
        %1637 = vmatmul.mubr.f32.gmra.mrb[0].mxu0 %v1557
        %v1638 = vpop.f32.mrb[0].mxu0
        %v1639 = vadd.f32 0.0, %v1638
        %v1640 = vpop.f32.mrb[0].mxu0
        %1641 = vmatprep.mubr.f32.mxu0 0.0
        %1642 = vmatmul.mubr.f32.gmra.mrb[0].mxu0 %v1560
        %v1643 = vpop.f32.mrb[0].mxu0
        %v1644 = vadd.f32 0.0, %v1643
        %v1645 = vpop.f32.mrb[0].mxu0
        %1646 = vdwg.mxu0
        %1648 = vset.pattern.permute.xlu0 0
        %1649 = vperm.xlu0 %1648, %v1546
        %v1650 = vpop.permute.xlu0 %1649
        %1653 = vset.pattern.permute.xlu0 0
        %1654 = vperm.xlu0 %1653, %v1547
        %v1655 = vpop.permute.xlu0 %1654
        %1658 = vset.pattern.permute.xlu0 0
        %1659 = vperm.xlu0 %1658, %v1548
        %v1660 = vpop.permute.xlu0 %1659
        %1663 = vset.pattern.permute.xlu0 0
        %1664 = vperm.xlu0 %1663, %v1549
        %v1665 = vpop.permute.xlu0 %1664
        %v1667 = vmul.f32 %v1629, %v1650
        %v1668 = vmul.f32 %v1634, %v1655
        %v1669 = vmul.f32 %v1639, %v1660
        %v1670 = vmul.f32 %v1644, %v1665
        %1671 = vset.pattern.permute.xlu0 1
        %1672 = vperm.xlu0 %1671, %v1546
        %v1673 = vpop.permute.xlu0 %1672
        %1675 = vset.pattern.permute.xlu0 1
        %1676 = vperm.xlu0 %1675, %v1547
        %v1677 = vpop.permute.xlu0 %1676
        %1679 = vset.pattern.permute.xlu0 1
        %1680 = vperm.xlu0 %1679, %v1548
        %v1681 = vpop.permute.xlu0 %1680
        %1683 = vset.pattern.permute.xlu0 1
        %1684 = vperm.xlu0 %1683, %v1549
        %v1685 = vpop.permute.xlu0 %1684
        %v1687 = vadd.f32 %v1667, %v1673
        %v1688 = vadd.f32 %v1668, %v1677
        %v1689 = vadd.f32 %v1669, %v1681
        %v1690 = vadd.f32 %v1670, %v1685
        %v1691 = vsel %vm626, %v1687, 0.0
        %v1692 = vsel %vm626, %v1688, 0.0
        %v1693 = vsel %vm626, %v1689, 0.0
        %v1694 = vsel %vm626, %v1690, 0.0
        %s1695 = scalar_lea.vmem %s3, 64
        %v1696 = vld [vmem:[%s1695] sm:$0xff]
        %v1697 = vld [vmem:[%s1695 + $0x8] sm:$0xff]
        %v1698 = vld [vmem:[%s1695 + $0x10] sm:$0xff]
        %v1699 = vld [vmem:[%s1695 + $0x18] sm:$0xff]
        %s1700 = scalar_lea.vmem %s4, 64
        %v1701 = vld [vmem:[%s1700] sm:$0xff]
        %v1702 = vld [vmem:[%s1700 + $0x8] sm:$0xff]
        %v1703 = vld [vmem:[%s1700 + $0x10] sm:$0xff]
        %v1704 = vld [vmem:[%s1700 + $0x18] sm:$0xff]
        %s1705 = scalar_lea.vmem %s5, 64
        %v1706 = vld [vmem:[%s1705] sm:$0xff]
        %v1707 = vld [vmem:[%s1705 + $0x8] sm:$0xff]
        %v1708 = vld [vmem:[%s1705 + $0x10] sm:$0xff]
        %v1709 = vld [vmem:[%s1705 + $0x18] sm:$0xff]
        %1710 = vrot.lane.b32.xlu0 %v1536, 1
        %v1711 = vpop.permute.xlu0 %1710
        %1712 = vrot.lane.b32.xlu0 %v1537, 1
        %v1713 = vpop.permute.xlu0 %1712
        %1714 = vrot.lane.b32.xlu0 %v1538, 1
        %v1715 = vpop.permute.xlu0 %1714
        %1716 = vrot.lane.b32.xlu0 %v1539, 1
        %v1717 = vpop.permute.xlu0 %1716
        %1719 = vset.pattern.permute.xlu0 0
        %1720 = vperm.xlu0 %1719, %v1696
        %v1721 = vpop.permute.xlu0 %1720
        %1724 = vset.pattern.permute.xlu0 0
        %1725 = vperm.xlu0 %1724, %v1697
        %v1726 = vpop.permute.xlu0 %1725
        %1729 = vset.pattern.permute.xlu0 0
        %1730 = vperm.xlu0 %1729, %v1698
        %v1731 = vpop.permute.xlu0 %1730
        %1734 = vset.pattern.permute.xlu0 0
        %1735 = vperm.xlu0 %1734, %v1699
        %v1736 = vpop.permute.xlu0 %1735
        %v1738 = vmul.f32 %v1721, %v1711
        %v1739 = vmul.f32 %v1726, %v1713
        %v1740 = vmul.f32 %v1731, %v1715
        %v1741 = vmul.f32 %v1736, %v1717
        %1742 = vset.pattern.permute.xlu0 1
        %1743 = vperm.xlu0 %1742, %v1696
        %v1744 = vpop.permute.xlu0 %1743
        %1746 = vset.pattern.permute.xlu0 1
        %1747 = vperm.xlu0 %1746, %v1697
        %v1748 = vpop.permute.xlu0 %1747
        %1750 = vset.pattern.permute.xlu0 1
        %1751 = vperm.xlu0 %1750, %v1698
        %v1752 = vpop.permute.xlu0 %1751
        %1754 = vset.pattern.permute.xlu0 1
        %1755 = vperm.xlu0 %1754, %v1699
        %v1756 = vpop.permute.xlu0 %1755
        %v1758 = vmul.f32 %v1744, %v1536
        %v1759 = vmul.f32 %v1748, %v1537
        %v1760 = vmul.f32 %v1752, %v1538
        %v1761 = vmul.f32 %v1756, %v1539
        %v1762 = vadd.f32 %v1738, %v1758
        %v1763 = vadd.f32 %v1739, %v1759
        %v1764 = vadd.f32 %v1740, %v1760
        %v1765 = vadd.f32 %v1741, %v1761
        %1766 = vrot.lane.b32.xlu0 %v1536, 127
        %v1767 = vpop.permute.xlu0 %1766
        %1768 = vrot.lane.b32.xlu0 %v1537, 127
        %v1769 = vpop.permute.xlu0 %1768
        %1770 = vrot.lane.b32.xlu0 %v1538, 127
        %v1771 = vpop.permute.xlu0 %1770
        %1772 = vrot.lane.b32.xlu0 %v1539, 127
        %v1773 = vpop.permute.xlu0 %1772
        %1774 = vset.pattern.permute.xlu0 2
        %1775 = vperm.xlu0 %1774, %v1696
        %v1776 = vpop.permute.xlu0 %1775
        %1778 = vset.pattern.permute.xlu0 2
        %1779 = vperm.xlu0 %1778, %v1697
        %v1780 = vpop.permute.xlu0 %1779
        %1782 = vset.pattern.permute.xlu0 2
        %1783 = vperm.xlu0 %1782, %v1698
        %v1784 = vpop.permute.xlu0 %1783
        %1786 = vset.pattern.permute.xlu0 2
        %1787 = vperm.xlu0 %1786, %v1699
        %v1788 = vpop.permute.xlu0 %1787
        %v1790 = vmul.f32 %v1776, %v1767
        %v1791 = vmul.f32 %v1780, %v1769
        %v1792 = vmul.f32 %v1784, %v1771
        %v1793 = vmul.f32 %v1788, %v1773
        %v1794 = vadd.f32 %v1762, %v1790
        %v1795 = vadd.f32 %v1763, %v1791
        %v1796 = vadd.f32 %v1764, %v1792
        %v1797 = vadd.f32 %v1765, %v1793
        %v1799 = vsel %vm639, %v1701, 0
        %v1802 = vsel %vm639, %v1702, 0
        %v1805 = vsel %vm639, %v1703, 0
        %v1808 = vsel %vm639, %v1704, 0
        %1810 = vmatprep.subr.mxu0 0.0
        %1811 = vmatpush1.msra.mxu0 %v1794
        %1812 = vmatprep.subr.mxu0 0.0
        %1813 = vmatpush1.msra.mxu0 %v1795
        %1814 = vmatprep.subr.mxu0 0.0
        %1815 = vmatpush1.msra.mxu0 %v1796
        %1816 = vmatprep.subr.mxu0 0.0
        %1817 = vmatpush1.msra.mxu0 %v1797
        %1818 = vmatprep.subr.mxu0 0.0
        %1819 = vmatpush1.msra.mxu0 0.0
        %1820 = vmatprep.subr.mxu0 0.0
        %1821 = vmatpush1.msra.mxu0 0.0
        %1822 = vmatprep.subr.mxu0 0.0
        %1823 = vmatpush1.msra.mxu0 0.0
        %1824 = vmatprep.subr.mxu0 0.0
        %1825 = vmatpush1.msra.mxu0 0.0
        %1826 = vmatprep.subr.mxu0 0.0
        %1827 = vmatpush1.msra.mxu0 0.0
        %1828 = vmatprep.subr.mxu0 0.0
        %1829 = vmatpush1.msra.mxu0 0.0
        %1830 = vmatprep.subr.mxu0 0.0
        %1831 = vmatpush1.msra.mxu0 0.0
        %1832 = vmatprep.subr.mxu0 0.0
        %1833 = vmatpush1.msra.mxu0 0.0
        %1834 = vmatprep.subr.mxu0 0.0
        %1835 = vmatpush1.msra.mxu0 0.0
        %1836 = vmatprep.subr.mxu0 0.0
        %1837 = vmatpush1.msra.mxu0 0.0
        %1838 = vmatprep.subr.mxu0 0.0
        %1839 = vmatpush1.msra.mxu0 0.0
        %1840 = vmatprep.subr.mxu0 0.0
        %1841 = vmatpush1.msra.mxu0 0.0
        %1842 = vmatprep.subr.mxu0 0.0
        %1843 = vmatpush1.msra.mxu0 0.0
        %1844 = vmatprep.subr.mxu0 0.0
        %1845 = vmatpush1.msra.mxu0 0.0
        %1846 = vmatprep.subr.mxu0 0.0
        %1847 = vmatpush1.msra.mxu0 0.0
        %1848 = vmatprep.subr.mxu0 0.0
        %1849 = vmatpush1.msra.mxu0 0.0
        %1850 = vmatprep.subr.mxu0 0.0
        %1851 = vmatpush1.msra.mxu0 0.0
        %1852 = vmatprep.subr.mxu0 0.0
        %1853 = vmatpush1.msra.mxu0 0.0
        %1854 = vmatprep.subr.mxu0 0.0
        %1855 = vmatpush1.msra.mxu0 0.0
        %1856 = vmatprep.subr.mxu0 0.0
        %1857 = vmatpush1.msra.mxu0 0.0
        %1858 = vmatprep.subr.mxu0 0.0
        %1859 = vmatpush1.msra.mxu0 0.0
        %1860 = vmatprep.subr.mxu0 0.0
        %1861 = vmatpush1.msra.mxu0 0.0
        %1862 = vmatprep.subr.mxu0 0.0
        %1863 = vmatpush1.msra.mxu0 0.0
        %1864 = vmatprep.subr.mxu0 0.0
        %1865 = vmatpush1.msra.mxu0 0.0
        %1866 = vmatprep.subr.mxu0 0.0
        %1867 = vmatpush1.msra.mxu0 0.0
        %1868 = vmatprep.subr.mxu0 0.0
        %1869 = vmatpush1.msra.mxu0 0.0
        %1870 = vmatprep.subr.mxu0 0.0
        %1871 = vmatpush1.msra.mxu0 0.0
        %1872 = vmatprep.subr.mxu0 0.0
        %1873 = vmatpush1.msra.mxu0 0.0
        %1874 = vmatprep.mubr.f32.mxu0 0.0
        %1875 = vmatmul.mubr.f32.gmra.mrb[0].mxu0 %v1799
        %v1876 = vpop.f32.mrb[0].mxu0
        %v1877 = vadd.f32 0.0, %v1876
        %v1878 = vpop.f32.mrb[0].mxu0
        %1879 = vmatprep.mubr.f32.mxu0 0.0
        %1880 = vmatmul.mubr.f32.gmra.mrb[0].mxu0 %v1802
        %v1881 = vpop.f32.mrb[0].mxu0
        %v1882 = vadd.f32 0.0, %v1881
        %v1883 = vpop.f32.mrb[0].mxu0
        %1884 = vmatprep.mubr.f32.mxu0 0.0
        %1885 = vmatmul.mubr.f32.gmra.mrb[0].mxu0 %v1805
        %v1886 = vpop.f32.mrb[0].mxu0
        %v1887 = vadd.f32 0.0, %v1886
        %v1888 = vpop.f32.mrb[0].mxu0
        %1889 = vmatprep.mubr.f32.mxu0 0.0
        %1890 = vmatmul.mubr.f32.gmra.mrb[0].mxu0 %v1808
        %v1891 = vpop.f32.mrb[0].mxu0
        %v1892 = vadd.f32 0.0, %v1891
        %v1893 = vpop.f32.mrb[0].mxu0
        %1894 = vdwg.mxu0
        %1896 = vset.pattern.permute.xlu0 0
        %1897 = vperm.xlu0 %1896, %v1706
        %v1898 = vpop.permute.xlu0 %1897
        %1901 = vset.pattern.permute.xlu0 0
        %1902 = vperm.xlu0 %1901, %v1707
        %v1903 = vpop.permute.xlu0 %1902
        %1906 = vset.pattern.permute.xlu0 0
        %1907 = vperm.xlu0 %1906, %v1708
        %v1908 = vpop.permute.xlu0 %1907
        %1911 = vset.pattern.permute.xlu0 0
        %1912 = vperm.xlu0 %1911, %v1709
        %v1913 = vpop.permute.xlu0 %1912
        %v1915 = vmul.f32 %v1877, %v1898
        %v1916 = vmul.f32 %v1882, %v1903
        %v1917 = vmul.f32 %v1887, %v1908
        %v1918 = vmul.f32 %v1892, %v1913
        %1919 = vset.pattern.permute.xlu0 1
        %1920 = vperm.xlu0 %1919, %v1706
        %v1921 = vpop.permute.xlu0 %1920
        %1923 = vset.pattern.permute.xlu0 1
        %1924 = vperm.xlu0 %1923, %v1707
        %v1925 = vpop.permute.xlu0 %1924
        %1927 = vset.pattern.permute.xlu0 1
        %1928 = vperm.xlu0 %1927, %v1708
        %v1929 = vpop.permute.xlu0 %1928
        %1931 = vset.pattern.permute.xlu0 1
        %1932 = vperm.xlu0 %1931, %v1709
        %v1933 = vpop.permute.xlu0 %1932
        %v1935 = vadd.f32 %v1915, %v1921
        %v1936 = vadd.f32 %v1916, %v1925
        %v1937 = vadd.f32 %v1917, %v1929
        %v1938 = vadd.f32 %v1918, %v1933
        %v1939 = vmax.f32 %v1935, 0.0
        %v1940 = vmax.f32 %v1936, 0.0
        %v1941 = vmax.f32 %v1937, 0.0
        %v1942 = vmax.f32 %v1938, 0.0
        %v1943 = vsel %vm626, %v1939, 0.0
        %v1944 = vsel %vm626, %v1940, 0.0
        %v1945 = vsel %vm626, %v1941, 0.0
        %v1946 = vsel %vm626, %v1942, 0.0
        %s1947 = scalar_lea.vmem %s3, 96
        %v1948 = vld [vmem:[%s1947] sm:$0xff]
        %v1949 = vld [vmem:[%s1947 + $0x8] sm:$0xff]
        %v1950 = vld [vmem:[%s1947 + $0x10] sm:$0xff]
        %v1951 = vld [vmem:[%s1947 + $0x18] sm:$0xff]
        %s1952 = scalar_lea.vmem %s4, 96
        %v1953 = vld [vmem:[%s1952] sm:$0xff]
        %v1954 = vld [vmem:[%s1952 + $0x8] sm:$0xff]
        %v1955 = vld [vmem:[%s1952 + $0x10] sm:$0xff]
        %v1956 = vld [vmem:[%s1952 + $0x18] sm:$0xff]
        %s1957 = scalar_lea.vmem %s5, 96
        %v1958 = vld [vmem:[%s1957] sm:$0xff]
        %v1959 = vld [vmem:[%s1957 + $0x8] sm:$0xff]
        %v1960 = vld [vmem:[%s1957 + $0x10] sm:$0xff]
        %v1961 = vld [vmem:[%s1957 + $0x18] sm:$0xff]
        %1962 = vrot.lane.b32.xlu0 %v1943, 1
        %v1963 = vpop.permute.xlu0 %1962
        %1964 = vrot.lane.b32.xlu0 %v1944, 1
        %v1965 = vpop.permute.xlu0 %1964
        %1966 = vrot.lane.b32.xlu0 %v1945, 1
        %v1967 = vpop.permute.xlu0 %1966
        %1968 = vrot.lane.b32.xlu0 %v1946, 1
        %v1969 = vpop.permute.xlu0 %1968
        %1971 = vset.pattern.permute.xlu0 0
        %1972 = vperm.xlu0 %1971, %v1948
        %v1973 = vpop.permute.xlu0 %1972
        %1976 = vset.pattern.permute.xlu0 0
        %1977 = vperm.xlu0 %1976, %v1949
        %v1978 = vpop.permute.xlu0 %1977
        %1981 = vset.pattern.permute.xlu0 0
        %1982 = vperm.xlu0 %1981, %v1950
        %v1983 = vpop.permute.xlu0 %1982
        %1986 = vset.pattern.permute.xlu0 0
        %1987 = vperm.xlu0 %1986, %v1951
        %v1988 = vpop.permute.xlu0 %1987
        %v1990 = vmul.f32 %v1973, %v1963
        %v1991 = vmul.f32 %v1978, %v1965
        %v1992 = vmul.f32 %v1983, %v1967
        %v1993 = vmul.f32 %v1988, %v1969
        %1994 = vset.pattern.permute.xlu0 1
        %1995 = vperm.xlu0 %1994, %v1948
        %v1996 = vpop.permute.xlu0 %1995
        %1998 = vset.pattern.permute.xlu0 1
        %1999 = vperm.xlu0 %1998, %v1949
        %v2000 = vpop.permute.xlu0 %1999
        %2002 = vset.pattern.permute.xlu0 1
        %2003 = vperm.xlu0 %2002, %v1950
        %v2004 = vpop.permute.xlu0 %2003
        %2006 = vset.pattern.permute.xlu0 1
        %2007 = vperm.xlu0 %2006, %v1951
        %v2008 = vpop.permute.xlu0 %2007
        %v2010 = vmul.f32 %v1996, %v1943
        %v2011 = vmul.f32 %v2000, %v1944
        %v2012 = vmul.f32 %v2004, %v1945
        %v2013 = vmul.f32 %v2008, %v1946
        %v2014 = vadd.f32 %v1990, %v2010
        %v2015 = vadd.f32 %v1991, %v2011
        %v2016 = vadd.f32 %v1992, %v2012
        %v2017 = vadd.f32 %v1993, %v2013
        %2018 = vrot.lane.b32.xlu0 %v1943, 127
        %v2019 = vpop.permute.xlu0 %2018
        %2020 = vrot.lane.b32.xlu0 %v1944, 127
        %v2021 = vpop.permute.xlu0 %2020
        %2022 = vrot.lane.b32.xlu0 %v1945, 127
        %v2023 = vpop.permute.xlu0 %2022
        %2024 = vrot.lane.b32.xlu0 %v1946, 127
        %v2025 = vpop.permute.xlu0 %2024
        %2026 = vset.pattern.permute.xlu0 2
        %2027 = vperm.xlu0 %2026, %v1948
        %v2028 = vpop.permute.xlu0 %2027
        %2030 = vset.pattern.permute.xlu0 2
        %2031 = vperm.xlu0 %2030, %v1949
        %v2032 = vpop.permute.xlu0 %2031
        %2034 = vset.pattern.permute.xlu0 2
        %2035 = vperm.xlu0 %2034, %v1950
        %v2036 = vpop.permute.xlu0 %2035
        %2038 = vset.pattern.permute.xlu0 2
        %2039 = vperm.xlu0 %2038, %v1951
        %v2040 = vpop.permute.xlu0 %2039
        %v2042 = vmul.f32 %v2028, %v2019
        %v2043 = vmul.f32 %v2032, %v2021
        %v2044 = vmul.f32 %v2036, %v2023
        %v2045 = vmul.f32 %v2040, %v2025
        %v2046 = vadd.f32 %v2014, %v2042
        %v2047 = vadd.f32 %v2015, %v2043
        %v2048 = vadd.f32 %v2016, %v2044
        %v2049 = vadd.f32 %v2017, %v2045
        %v2051 = vsel %vm639, %v1953, 0
        %v2054 = vsel %vm639, %v1954, 0
        %v2057 = vsel %vm639, %v1955, 0
        %v2060 = vsel %vm639, %v1956, 0
        %2062 = vmatprep.subr.mxu0 0.0
        %2063 = vmatpush1.msra.mxu0 %v2046
        %2064 = vmatprep.subr.mxu0 0.0
        %2065 = vmatpush1.msra.mxu0 %v2047
        %2066 = vmatprep.subr.mxu0 0.0
        %2067 = vmatpush1.msra.mxu0 %v2048
        %2068 = vmatprep.subr.mxu0 0.0
        %2069 = vmatpush1.msra.mxu0 %v2049
        %2070 = vmatprep.subr.mxu0 0.0
        %2071 = vmatpush1.msra.mxu0 0.0
        %2072 = vmatprep.subr.mxu0 0.0
        %2073 = vmatpush1.msra.mxu0 0.0
        %2074 = vmatprep.subr.mxu0 0.0
        %2075 = vmatpush1.msra.mxu0 0.0
        %2076 = vmatprep.subr.mxu0 0.0
        %2077 = vmatpush1.msra.mxu0 0.0
        %2078 = vmatprep.subr.mxu0 0.0
        %2079 = vmatpush1.msra.mxu0 0.0
        %2080 = vmatprep.subr.mxu0 0.0
        %2081 = vmatpush1.msra.mxu0 0.0
        %2082 = vmatprep.subr.mxu0 0.0
        %2083 = vmatpush1.msra.mxu0 0.0
        %2084 = vmatprep.subr.mxu0 0.0
        %2085 = vmatpush1.msra.mxu0 0.0
        %2086 = vmatprep.subr.mxu0 0.0
        %2087 = vmatpush1.msra.mxu0 0.0
        %2088 = vmatprep.subr.mxu0 0.0
        %2089 = vmatpush1.msra.mxu0 0.0
        %2090 = vmatprep.subr.mxu0 0.0
        %2091 = vmatpush1.msra.mxu0 0.0
        %2092 = vmatprep.subr.mxu0 0.0
        %2093 = vmatpush1.msra.mxu0 0.0
        %2094 = vmatprep.subr.mxu0 0.0
        %2095 = vmatpush1.msra.mxu0 0.0
        %2096 = vmatprep.subr.mxu0 0.0
        %2097 = vmatpush1.msra.mxu0 0.0
        %2098 = vmatprep.subr.mxu0 0.0
        %2099 = vmatpush1.msra.mxu0 0.0
        %2100 = vmatprep.subr.mxu0 0.0
        %2101 = vmatpush1.msra.mxu0 0.0
        %2102 = vmatprep.subr.mxu0 0.0
        %2103 = vmatpush1.msra.mxu0 0.0
        %2104 = vmatprep.subr.mxu0 0.0
        %2105 = vmatpush1.msra.mxu0 0.0
        %2106 = vmatprep.subr.mxu0 0.0
        %2107 = vmatpush1.msra.mxu0 0.0
        %2108 = vmatprep.subr.mxu0 0.0
        %2109 = vmatpush1.msra.mxu0 0.0
        %2110 = vmatprep.subr.mxu0 0.0
        %2111 = vmatpush1.msra.mxu0 0.0
        %2112 = vmatprep.subr.mxu0 0.0
        %2113 = vmatpush1.msra.mxu0 0.0
        %2114 = vmatprep.subr.mxu0 0.0
        %2115 = vmatpush1.msra.mxu0 0.0
        %2116 = vmatprep.subr.mxu0 0.0
        %2117 = vmatpush1.msra.mxu0 0.0
        %2118 = vmatprep.subr.mxu0 0.0
        %2119 = vmatpush1.msra.mxu0 0.0
        %2120 = vmatprep.subr.mxu0 0.0
        %2121 = vmatpush1.msra.mxu0 0.0
        %2122 = vmatprep.subr.mxu0 0.0
        %2123 = vmatpush1.msra.mxu0 0.0
        %2124 = vmatprep.subr.mxu0 0.0
        %2125 = vmatpush1.msra.mxu0 0.0
        %2126 = vmatprep.mubr.f32.mxu0 0.0
        %2127 = vmatmul.mubr.f32.gmra.mrb[0].mxu0 %v2051
        %v2128 = vpop.f32.mrb[0].mxu0
        %v2129 = vadd.f32 0.0, %v2128
        %v2130 = vpop.f32.mrb[0].mxu0
        %2131 = vmatprep.mubr.f32.mxu0 0.0
        %2132 = vmatmul.mubr.f32.gmra.mrb[0].mxu0 %v2054
        %v2133 = vpop.f32.mrb[0].mxu0
        %v2134 = vadd.f32 0.0, %v2133
        %v2135 = vpop.f32.mrb[0].mxu0
        %2136 = vmatprep.mubr.f32.mxu0 0.0
        %2137 = vmatmul.mubr.f32.gmra.mrb[0].mxu0 %v2057
        %v2138 = vpop.f32.mrb[0].mxu0
        %v2139 = vadd.f32 0.0, %v2138
        %v2140 = vpop.f32.mrb[0].mxu0
        %2141 = vmatprep.mubr.f32.mxu0 0.0
        %2142 = vmatmul.mubr.f32.gmra.mrb[0].mxu0 %v2060
        %v2143 = vpop.f32.mrb[0].mxu0
        %v2144 = vadd.f32 0.0, %v2143
        %v2145 = vpop.f32.mrb[0].mxu0
        %2146 = vdwg.mxu0
        %2148 = vset.pattern.permute.xlu0 0
        %2149 = vperm.xlu0 %2148, %v1958
        %v2150 = vpop.permute.xlu0 %2149
        %2153 = vset.pattern.permute.xlu0 0
        %2154 = vperm.xlu0 %2153, %v1959
        %v2155 = vpop.permute.xlu0 %2154
        %2158 = vset.pattern.permute.xlu0 0
        %2159 = vperm.xlu0 %2158, %v1960
        %v2160 = vpop.permute.xlu0 %2159
        %2163 = vset.pattern.permute.xlu0 0
        %2164 = vperm.xlu0 %2163, %v1961
        %v2165 = vpop.permute.xlu0 %2164
        %v2167 = vmul.f32 %v2129, %v2150
        %v2168 = vmul.f32 %v2134, %v2155
        %v2169 = vmul.f32 %v2139, %v2160
        %v2170 = vmul.f32 %v2144, %v2165
        %2171 = vset.pattern.permute.xlu0 1
        %2172 = vperm.xlu0 %2171, %v1958
        %v2173 = vpop.permute.xlu0 %2172
        %2175 = vset.pattern.permute.xlu0 1
        %2176 = vperm.xlu0 %2175, %v1959
        %v2177 = vpop.permute.xlu0 %2176
        %2179 = vset.pattern.permute.xlu0 1
        %2180 = vperm.xlu0 %2179, %v1960
        %v2181 = vpop.permute.xlu0 %2180
        %2183 = vset.pattern.permute.xlu0 1
        %2184 = vperm.xlu0 %2183, %v1961
        %v2185 = vpop.permute.xlu0 %2184
        %v2187 = vadd.f32 %v2167, %v2173
        %v2188 = vadd.f32 %v2168, %v2177
        %v2189 = vadd.f32 %v2169, %v2181
        %v2190 = vadd.f32 %v2170, %v2185
        %v2191 = vmax.f32 %v2187, 0.0
        %v2192 = vmax.f32 %v2188, 0.0
        %v2193 = vmax.f32 %v2189, 0.0
        %v2194 = vmax.f32 %v2190, 0.0
        %v2195 = vsel %vm626, %v2191, 0.0
        %v2196 = vsel %vm626, %v2192, 0.0
        %v2197 = vsel %vm626, %v2193, 0.0
        %v2198 = vsel %vm626, %v2194, 0.0
        %s2199 = scalar_lea.vmem %s8, 8
        %v2200 = vld [vmem:[%s2199] sm:$0xff]
        %s2201 = scalar_lea.vmem %s9, 8
        %v2202 = vld [vmem:[%s2201] sm:$0xff]
        %s2203 = scalar_lea.vmem %s10, 32
        %v2204 = vld [vmem:[%s2203] sm:$0xff]
        %v2205 = vld [vmem:[%s2203 + $0x8] sm:$0xff]
        %v2206 = vld [vmem:[%s2203 + $0x10] sm:$0xff]
        %v2207 = vld [vmem:[%s2203 + $0x18] sm:$0xff]
        %s2208 = scalar_lea.vmem %s11, 32
        %v2209 = vld [vmem:[%s2208] sm:$0xff]
        %v2210 = vld [vmem:[%s2208 + $0x8] sm:$0xff]
        %v2211 = vld [vmem:[%s2208 + $0x10] sm:$0xff]
        %v2212 = vld [vmem:[%s2208 + $0x18] sm:$0xff]
        %2213 = vadd.xlane.f32.xlu0 %v2195
        %v2214 = vpop.xlane.xlu0 %2213
        %2215 = vadd.xlane.f32.xlu0 %v2196
        %v2216 = vpop.xlane.xlu0 %2215
        %2217 = vadd.xlane.f32.xlu0 %v2197
        %v2218 = vpop.xlane.xlu0 %2217
        %2219 = vadd.xlane.f32.xlu0 %v2198
        %v2220 = vpop.xlane.xlu0 %2219
        %v2221 = vmul.f32 %v2214, 0.0625
        %v2222 = vmul.f32 %v2216, 0.0625
        %v2223 = vmul.f32 %v2218, 0.0625
        %v2224 = vmul.f32 %v2220, 0.0625
        %v2226 = vsel %vm639, %v2200, 0
        %2228 = vmatprep.subr.mxu0 0.0
        %2229 = vmatpush1.msra.mxu0 %v2221
        %2230 = vmatprep.subr.mxu0 0.0
        %2231 = vmatpush1.msra.mxu0 %v2222
        %2232 = vmatprep.subr.mxu0 0.0
        %2233 = vmatpush1.msra.mxu0 %v2223
        %2234 = vmatprep.subr.mxu0 0.0
        %2235 = vmatpush1.msra.mxu0 %v2224
        %2236 = vmatprep.subr.mxu0 0.0
        %2237 = vmatpush1.msra.mxu0 0.0
        %2238 = vmatprep.subr.mxu0 0.0
        %2239 = vmatpush1.msra.mxu0 0.0
        %2240 = vmatprep.subr.mxu0 0.0
        %2241 = vmatpush1.msra.mxu0 0.0
        %2242 = vmatprep.subr.mxu0 0.0
        %2243 = vmatpush1.msra.mxu0 0.0
        %2244 = vmatprep.subr.mxu0 0.0
        %2245 = vmatpush1.msra.mxu0 0.0
        %2246 = vmatprep.subr.mxu0 0.0
        %2247 = vmatpush1.msra.mxu0 0.0
        %2248 = vmatprep.subr.mxu0 0.0
        %2249 = vmatpush1.msra.mxu0 0.0
        %2250 = vmatprep.subr.mxu0 0.0
        %2251 = vmatpush1.msra.mxu0 0.0
        %2252 = vmatprep.subr.mxu0 0.0
        %2253 = vmatpush1.msra.mxu0 0.0
        %2254 = vmatprep.subr.mxu0 0.0
        %2255 = vmatpush1.msra.mxu0 0.0
        %2256 = vmatprep.subr.mxu0 0.0
        %2257 = vmatpush1.msra.mxu0 0.0
        %2258 = vmatprep.subr.mxu0 0.0
        %2259 = vmatpush1.msra.mxu0 0.0
        %2260 = vmatprep.subr.mxu0 0.0
        %2261 = vmatpush1.msra.mxu0 0.0
        %2262 = vmatprep.subr.mxu0 0.0
        %2263 = vmatpush1.msra.mxu0 0.0
        %2264 = vmatprep.subr.mxu0 0.0
        %2265 = vmatpush1.msra.mxu0 0.0
        %2266 = vmatprep.subr.mxu0 0.0
        %2267 = vmatpush1.msra.mxu0 0.0
        %2268 = vmatprep.subr.mxu0 0.0
        %2269 = vmatpush1.msra.mxu0 0.0
        %2270 = vmatprep.subr.mxu0 0.0
        %2271 = vmatpush1.msra.mxu0 0.0
        %2272 = vmatprep.subr.mxu0 0.0
        %2273 = vmatpush1.msra.mxu0 0.0
        %2274 = vmatprep.subr.mxu0 0.0
        %2275 = vmatpush1.msra.mxu0 0.0
        %2276 = vmatprep.subr.mxu0 0.0
        %2277 = vmatpush1.msra.mxu0 0.0
        %2278 = vmatprep.subr.mxu0 0.0
        %2279 = vmatpush1.msra.mxu0 0.0
        %2280 = vmatprep.subr.mxu0 0.0
        %2281 = vmatpush1.msra.mxu0 0.0
        %2282 = vmatprep.subr.mxu0 0.0
        %2283 = vmatpush1.msra.mxu0 0.0
        %2284 = vmatprep.subr.mxu0 0.0
        %2285 = vmatpush1.msra.mxu0 0.0
        %2286 = vmatprep.subr.mxu0 0.0
        %2287 = vmatpush1.msra.mxu0 0.0
        %2288 = vmatprep.subr.mxu0 0.0
        %2289 = vmatpush1.msra.mxu0 0.0
        %2290 = vmatprep.subr.mxu0 0.0
        %2291 = vmatpush1.msra.mxu0 0.0
        %2292 = vmatprep.mubr.f32.mxu0 0.0
        %2293 = vmatmul.mubr.f32.gmra.mrb[0].mxu0 %v2226
        %v2294 = vpop.f32.mrb[0].mxu0
        %v2295 = vadd.f32 %v2202, %v2294
        %v2296 = vpop.f32.mrb[0].mxu0
        %2297 = vdwg.mxu0
        %v2298 = vmax.f32 %v2295, 0.0
        %v2300 = vsel %vm1382, %v2204, 0
        %v2303 = vsel %vm1382, %v2205, 0
        %v2306 = vsel %vm1382, %v2206, 0
        %v2309 = vsel %vm1382, %v2207, 0
        %2311 = vmatprep.subr.mxu0 0.0
        %2312 = vmatpush1.msra.mxu0 %v2298
        %2313 = vmatprep.subr.mxu0 0.0
        %2314 = vmatpush1.msra.mxu0 0.0
        %2315 = vmatprep.subr.mxu0 0.0
        %2316 = vmatpush1.msra.mxu0 0.0
        %2317 = vmatprep.subr.mxu0 0.0
        %2318 = vmatpush1.msra.mxu0 0.0
        %2319 = vmatprep.subr.mxu0 0.0
        %2320 = vmatpush1.msra.mxu0 0.0
        %2321 = vmatprep.subr.mxu0 0.0
        %2322 = vmatpush1.msra.mxu0 0.0
        %2323 = vmatprep.subr.mxu0 0.0
        %2324 = vmatpush1.msra.mxu0 0.0
        %2325 = vmatprep.subr.mxu0 0.0
        %2326 = vmatpush1.msra.mxu0 0.0
        %2327 = vmatprep.subr.mxu0 0.0
        %2328 = vmatpush1.msra.mxu0 0.0
        %2329 = vmatprep.subr.mxu0 0.0
        %2330 = vmatpush1.msra.mxu0 0.0
        %2331 = vmatprep.subr.mxu0 0.0
        %2332 = vmatpush1.msra.mxu0 0.0
        %2333 = vmatprep.subr.mxu0 0.0
        %2334 = vmatpush1.msra.mxu0 0.0
        %2335 = vmatprep.subr.mxu0 0.0
        %2336 = vmatpush1.msra.mxu0 0.0
        %2337 = vmatprep.subr.mxu0 0.0
        %2338 = vmatpush1.msra.mxu0 0.0
        %2339 = vmatprep.subr.mxu0 0.0
        %2340 = vmatpush1.msra.mxu0 0.0
        %2341 = vmatprep.subr.mxu0 0.0
        %2342 = vmatpush1.msra.mxu0 0.0
        %2343 = vmatprep.subr.mxu0 0.0
        %2344 = vmatpush1.msra.mxu0 0.0
        %2345 = vmatprep.subr.mxu0 0.0
        %2346 = vmatpush1.msra.mxu0 0.0
        %2347 = vmatprep.subr.mxu0 0.0
        %2348 = vmatpush1.msra.mxu0 0.0
        %2349 = vmatprep.subr.mxu0 0.0
        %2350 = vmatpush1.msra.mxu0 0.0
        %2351 = vmatprep.subr.mxu0 0.0
        %2352 = vmatpush1.msra.mxu0 0.0
        %2353 = vmatprep.subr.mxu0 0.0
        %2354 = vmatpush1.msra.mxu0 0.0
        %2355 = vmatprep.subr.mxu0 0.0
        %2356 = vmatpush1.msra.mxu0 0.0
        %2357 = vmatprep.subr.mxu0 0.0
        %2358 = vmatpush1.msra.mxu0 0.0
        %2359 = vmatprep.subr.mxu0 0.0
        %2360 = vmatpush1.msra.mxu0 0.0
        %2361 = vmatprep.subr.mxu0 0.0
        %2362 = vmatpush1.msra.mxu0 0.0
        %2363 = vmatprep.subr.mxu0 0.0
        %2364 = vmatpush1.msra.mxu0 0.0
        %2365 = vmatprep.subr.mxu0 0.0
        %2366 = vmatpush1.msra.mxu0 0.0
        %2367 = vmatprep.subr.mxu0 0.0
        %2368 = vmatpush1.msra.mxu0 0.0
        %2369 = vmatprep.subr.mxu0 0.0
        %2370 = vmatpush1.msra.mxu0 0.0
        %2371 = vmatprep.subr.mxu0 0.0
        %2372 = vmatpush1.msra.mxu0 0.0
        %2373 = vmatprep.subr.mxu0 0.0
        %2374 = vmatpush1.msra.mxu0 0.0
        %2375 = vmatprep.mubr.f32.mxu0 0.0
        %2376 = vmatmul.mubr.f32.gmra.mrb[0].mxu0 %v2300
        %v2377 = vpop.f32.mrb[0].mxu0
        %v2378 = vadd.f32 %v2209, %v2377
        %v2379 = vpop.f32.mrb[0].mxu0
        %2380 = vmatprep.mubr.f32.mxu0 0.0
        %2381 = vmatmul.mubr.f32.gmra.mrb[0].mxu0 %v2303
        %v2382 = vpop.f32.mrb[0].mxu0
        %v2383 = vadd.f32 %v2210, %v2382
        %v2384 = vpop.f32.mrb[0].mxu0
        %2385 = vmatprep.mubr.f32.mxu0 0.0
        %2386 = vmatmul.mubr.f32.gmra.mrb[0].mxu0 %v2306
        %v2387 = vpop.f32.mrb[0].mxu0
        %v2388 = vadd.f32 %v2211, %v2387
        %v2389 = vpop.f32.mrb[0].mxu0
        %2390 = vmatprep.mubr.f32.mxu0 0.0
        %2391 = vmatmul.mubr.f32.gmra.mrb[0].mxu0 %v2309
        %v2392 = vpop.f32.mrb[0].mxu0
        %v2393 = vadd.f32 %v2212, %v2392
        %v2394 = vpop.f32.mrb[0].mxu0
        %2395 = vdwg.mxu0
        %v2396 = vxor.u32 %v2378, 2147483648
        %v2397 = vxor.u32 %v2383, 2147483648
        %v2398 = vxor.u32 %v2388, 2147483648
        %v2399 = vxor.u32 %v2393, 2147483648
        %v2400 = vmul.f32 %v2396, 1.442695
        %v2401 = vpow.pop %v2400
        %v2402 = vmul.f32 %v2397, 1.442695
        %v2403 = vpow.pop %v2402
        %v2404 = vmul.f32 %v2398, 1.442695
        %v2405 = vpow.pop %v2404
        %v2406 = vmul.f32 %v2399, 1.442695
        %v2407 = vpow.pop %v2406
        %v2408 = vadd.f32 %v2401, 1.0
        %v2409 = vadd.f32 %v2403, 1.0
        %v2410 = vadd.f32 %v2405, 1.0
        %v2411 = vadd.f32 %v2407, 1.0
        %v2412 = vrcp.pop %v2408
        %v2413 = vmul.f32 1.0, %v2412
        %v2414 = vrcp.pop %v2409
        %v2415 = vmul.f32 1.0, %v2414
        %v2416 = vrcp.pop %v2410
        %v2417 = vmul.f32 1.0, %v2416
        %v2418 = vrcp.pop %v2411
        %v2419 = vmul.f32 1.0, %v2418
        %2421 = vset.pattern.permute.xlu0 0
        %2422 = vperm.xlu0 %2421, %v2413
        %v2423 = vpop.permute.xlu0 %2422
        %2426 = vset.pattern.permute.xlu0 0
        %2427 = vperm.xlu0 %2426, %v2415
        %v2428 = vpop.permute.xlu0 %2427
        %2431 = vset.pattern.permute.xlu0 0
        %2432 = vperm.xlu0 %2431, %v2417
        %v2433 = vpop.permute.xlu0 %2432
        %2436 = vset.pattern.permute.xlu0 0
        %2437 = vperm.xlu0 %2436, %v2419
        %v2438 = vpop.permute.xlu0 %2437
        %v2440 = vmul.f32 %v2195, %v2423
        %v2441 = vmul.f32 %v2196, %v2428
        %v2442 = vmul.f32 %v2197, %v2433
        %v2443 = vmul.f32 %v2198, %v2438
        %v2444 = vadd.f32 %v1691, %v2440
        %v2445 = vadd.f32 %v1692, %v2441
        %v2446 = vadd.f32 %v1693, %v2442
        %v2447 = vadd.f32 %v1694, %v2443
        %v2448 = vmax.f32 %v2444, 0.0
        %v2449 = vmax.f32 %v2445, 0.0
        %v2450 = vmax.f32 %v2446, 0.0
        %v2451 = vmax.f32 %v2447, 0.0
        %v2452 = vsel %vm626, %v2448, 0.0
        %v2453 = vsel %vm626, %v2449, 0.0
        %v2454 = vsel %vm626, %v2450, 0.0
        %v2455 = vsel %vm626, %v2451, 0.0
        %v2456 = vld [vmem:[%s12] sm:$0xff]
        %v2457 = vld [vmem:[%s12 + $0x8] sm:$0xff]
        %v2458 = vld [vmem:[%s12 + $0x10] sm:$0xff]
        %v2459 = vld [vmem:[%s12 + $0x18] sm:$0xff]
        %v2460 = vld [vmem:[%s13] sm:$0xff]
        %v2461 = vld [vmem:[%s13 + $0x8] sm:$0xff]
        %v2462 = vld [vmem:[%s13 + $0x10] sm:$0xff]
        %v2463 = vld [vmem:[%s13 + $0x18] sm:$0xff]
        %v2465 = vsel %vm639, %v2456, 0
        %v2468 = vsel %vm639, %v2457, 0
        %v2471 = vsel %vm639, %v2458, 0
        %v2474 = vsel %vm639, %v2459, 0
        %2476 = vmatprep.subr.mxu0 0.0
        %2477 = vmatpush1.msra.mxu0 %v2452
        %2478 = vmatprep.subr.mxu0 0.0
        %2479 = vmatpush1.msra.mxu0 %v2453
        %2480 = vmatprep.subr.mxu0 0.0
        %2481 = vmatpush1.msra.mxu0 %v2454
        %2482 = vmatprep.subr.mxu0 0.0
        %2483 = vmatpush1.msra.mxu0 %v2455
        %2484 = vmatprep.subr.mxu0 0.0
        %2485 = vmatpush1.msra.mxu0 0.0
        %2486 = vmatprep.subr.mxu0 0.0
        %2487 = vmatpush1.msra.mxu0 0.0
        %2488 = vmatprep.subr.mxu0 0.0
        %2489 = vmatpush1.msra.mxu0 0.0
        %2490 = vmatprep.subr.mxu0 0.0
        %2491 = vmatpush1.msra.mxu0 0.0
        %2492 = vmatprep.subr.mxu0 0.0
        %2493 = vmatpush1.msra.mxu0 0.0
        %2494 = vmatprep.subr.mxu0 0.0
        %2495 = vmatpush1.msra.mxu0 0.0
        %2496 = vmatprep.subr.mxu0 0.0
        %2497 = vmatpush1.msra.mxu0 0.0
        %2498 = vmatprep.subr.mxu0 0.0
        %2499 = vmatpush1.msra.mxu0 0.0
        %2500 = vmatprep.subr.mxu0 0.0
        %2501 = vmatpush1.msra.mxu0 0.0
        %2502 = vmatprep.subr.mxu0 0.0
        %2503 = vmatpush1.msra.mxu0 0.0
        %2504 = vmatprep.subr.mxu0 0.0
        %2505 = vmatpush1.msra.mxu0 0.0
        %2506 = vmatprep.subr.mxu0 0.0
        %2507 = vmatpush1.msra.mxu0 0.0
        %2508 = vmatprep.subr.mxu0 0.0
        %2509 = vmatpush1.msra.mxu0 0.0
        %2510 = vmatprep.subr.mxu0 0.0
        %2511 = vmatpush1.msra.mxu0 0.0
        %2512 = vmatprep.subr.mxu0 0.0
        %2513 = vmatpush1.msra.mxu0 0.0
        %2514 = vmatprep.subr.mxu0 0.0
        %2515 = vmatpush1.msra.mxu0 0.0
        %2516 = vmatprep.subr.mxu0 0.0
        %2517 = vmatpush1.msra.mxu0 0.0
        %2518 = vmatprep.subr.mxu0 0.0
        %2519 = vmatpush1.msra.mxu0 0.0
        %2520 = vmatprep.subr.mxu0 0.0
        %2521 = vmatpush1.msra.mxu0 0.0
        %2522 = vmatprep.subr.mxu0 0.0
        %2523 = vmatpush1.msra.mxu0 0.0
        %2524 = vmatprep.subr.mxu0 0.0
        %2525 = vmatpush1.msra.mxu0 0.0
        %2526 = vmatprep.subr.mxu0 0.0
        %2527 = vmatpush1.msra.mxu0 0.0
        %2528 = vmatprep.subr.mxu0 0.0
        %2529 = vmatpush1.msra.mxu0 0.0
        %2530 = vmatprep.subr.mxu0 0.0
        %2531 = vmatpush1.msra.mxu0 0.0
        %2532 = vmatprep.subr.mxu0 0.0
        %2533 = vmatpush1.msra.mxu0 0.0
        %2534 = vmatprep.subr.mxu0 0.0
        %2535 = vmatpush1.msra.mxu0 0.0
        %2536 = vmatprep.subr.mxu0 0.0
        %2537 = vmatpush1.msra.mxu0 0.0
        %2538 = vmatprep.subr.mxu0 0.0
        %2539 = vmatpush1.msra.mxu0 0.0
        %2540 = vmatprep.mubr.f32.mxu0 0.0
        %2541 = vmatmul.mubr.f32.gmra.mrb[0].mxu0 %v2465
        %v2542 = vpop.f32.mrb[0].mxu0
        %v2543 = vadd.f32 0.0, %v2542
        %v2544 = vpop.f32.mrb[0].mxu0
        %2545 = vmatprep.mubr.f32.mxu0 0.0
        %2546 = vmatmul.mubr.f32.gmra.mrb[0].mxu0 %v2468
        %v2547 = vpop.f32.mrb[0].mxu0
        %v2548 = vadd.f32 0.0, %v2547
        %v2549 = vpop.f32.mrb[0].mxu0
        %2550 = vmatprep.mubr.f32.mxu0 0.0
        %2551 = vmatmul.mubr.f32.gmra.mrb[0].mxu0 %v2471
        %v2552 = vpop.f32.mrb[0].mxu0
        %v2553 = vadd.f32 0.0, %v2552
        %v2554 = vpop.f32.mrb[0].mxu0
        %2555 = vmatprep.mubr.f32.mxu0 0.0
        %2556 = vmatmul.mubr.f32.gmra.mrb[0].mxu0 %v2474
        %v2557 = vpop.f32.mrb[0].mxu0
        %v2558 = vadd.f32 0.0, %v2557
        %v2559 = vpop.f32.mrb[0].mxu0
        %2560 = vdwg.mxu0
        %2562 = vset.pattern.permute.xlu0 0
        %2563 = vperm.xlu0 %2562, %v2460
        %v2564 = vpop.permute.xlu0 %2563
        %2567 = vset.pattern.permute.xlu0 0
        %2568 = vperm.xlu0 %2567, %v2461
        %v2569 = vpop.permute.xlu0 %2568
        %2572 = vset.pattern.permute.xlu0 0
        %2573 = vperm.xlu0 %2572, %v2462
        %v2574 = vpop.permute.xlu0 %2573
        %2577 = vset.pattern.permute.xlu0 0
        %2578 = vperm.xlu0 %2577, %v2463
        %v2579 = vpop.permute.xlu0 %2578
        %v2581 = vmul.f32 %v2543, %v2564
        %v2582 = vmul.f32 %v2548, %v2569
        %v2583 = vmul.f32 %v2553, %v2574
        %v2584 = vmul.f32 %v2558, %v2579
        %2585 = vset.pattern.permute.xlu0 1
        %2586 = vperm.xlu0 %2585, %v2460
        %v2587 = vpop.permute.xlu0 %2586
        %2589 = vset.pattern.permute.xlu0 1
        %2590 = vperm.xlu0 %2589, %v2461
        %v2591 = vpop.permute.xlu0 %2590
        %2593 = vset.pattern.permute.xlu0 1
        %2594 = vperm.xlu0 %2593, %v2462
        %v2595 = vpop.permute.xlu0 %2594
        %2597 = vset.pattern.permute.xlu0 1
        %2598 = vperm.xlu0 %2597, %v2463
        %v2599 = vpop.permute.xlu0 %2598
        %v2601 = vadd.f32 %v2581, %v2587
        %v2602 = vadd.f32 %v2582, %v2591
        %v2603 = vadd.f32 %v2583, %v2595
        %v2604 = vadd.f32 %v2584, %v2599
        %v2605 = vmax.f32 %v2601, 0.0
        %v2606 = vmax.f32 %v2602, 0.0
        %v2607 = vmax.f32 %v2603, 0.0
        %v2608 = vmax.f32 %v2604, 0.0
        %v2609 = vsel %vm626, %v2605, 0.0
        %v2610 = vsel %vm626, %v2606, 0.0
        %v2611 = vsel %vm626, %v2607, 0.0
        %v2612 = vsel %vm626, %v2608, 0.0
        %2613 = vst [vmem:[%s458] sm:$0xff] %v2609
        %2614 = vst [vmem:[%s458 + $0x8] sm:$0xff] %v2610
        %2615 = vst [vmem:[%s458 + $0x10] sm:$0xff] %v2611
        %2616 = vst [vmem:[%s458 + $0x18] sm:$0xff] %v2612
        %s2617 = sand.u32 %s335, 1
        %s2618 = scalar_lea.sflag [#allocation3], %s2617
        %s2619 = sand.u32 %s335, 1
        %s2620 = smul.addr %s2619, 32
        %s2621 = scalar_lea.vmem [#allocation2], %s2620
        // Predicated region
        $region77: #{tpu_custom_call.1} parent=75 // pred_check
          %p2622 = pneg %p345
        $region78: #{tpu_custom_call.1} parent=75 // pred_check_branch
          %2624 = sbr.rel (%p2622) target = $region80
        $region79: #{tpu_custom_call.1} parent=75 // pred_region
          %s2626 = ssub.s32 512, 512
          %2627 = vsyncadd %s2618, %s2626
          %s2628 = smul.addr %s28, 4
          %s2629 = smul.addr %s2628, 128
          %s2630 = scalar_lea.hbm %s14, %s2629
          %s2631 = sshll.u32 %s2621, 4
          %s2632 = int_to_ptr.vmem [resolvable:$true] %s2631
          %2637 = dma.vmem_to_hbm [thread:$0]  %s2632, 512, %s2630, %s2618, 128, 128, 8
        $region80: #{tpu_custom_call.1} parent=75 // pred_fallthru
          _
      $region76: #{tpu_custom_call.1} parent=5 // pred_fallthru
        _
      %p2638 = scmp.le.s32.totalorder 2, %s23
      // Predicated region
      $region81: #{tpu_custom_call.1} parent=5 // pred_check
        %p2639 = pneg %p2638
      $region82: #{tpu_custom_call.1} parent=5 // pred_check_branch
        %2641 = sbr.rel (%p2639) target = $region84
      $region83: #{tpu_custom_call.1} parent=5 // pred_region
        %s2642 = ssub.s32 %s23, 2
        // Predicated region
        $region85: #{tpu_custom_call.1} parent=83 // pred_check
          %p2643 = pneg %p351
        $region86: #{tpu_custom_call.1} parent=83 // pred_check_branch
          %2645 = sbr.rel (%p2643) target = $region88
        $region87: #{tpu_custom_call.1} parent=83 // pred_region
          %s2646 = sand.u32 %s336, 1
          %s2647 = scalar_lea.sflag [#allocation3], %s2646
          %s2648 = sand.u32 %s336, 1
          %s2649 = smul.addr %s2648, 32
          %s2650 = scalar_lea.vmem [#allocation2], %s2649
          %2651 = dma.done %s2647, 512
        $region88: #{tpu_custom_call.1} parent=83 // pred_fallthru
          _
      $region84: #{tpu_custom_call.1} parent=5 // pred_fallthru
        _
    $region6: #{tpu_custom_call.1} parent=1 // loop_footer
      %s27 = sadd.s32 1, %s23
    $region7: #{tpu_custom_call.1} parent=1 // loop_footer_branch
      %22 = sbr.rel target = $region3
    $region8: #{tpu_custom_call.1} parent=1 // loop_exit
      _
    %2652 = vsyncpa [#allocation3], 1
    %s2653 = scalar_lea.sflag [#allocation3], 1
    %2654 = vsyncpa %s2653, 1

</llo_original>
